<compile_context>
chip_gen: v7x
topology: tpu7x:2x2x1
jax: 0.10.0
libtpu: 0.0.40
codegen_flags: <defaults>
</compile_context>

<pallas_src>
import jax
import jax.numpy as jnp
from jax.experimental import pallas as pl
from jax.experimental.pallas import tpu as pltpu


# ------------------------------ fused kernel ------------------------------
def _make_block_kernel(k1, cin_eff, cin_sc, cout, ho, wo, has_down,
                       compute_dtype, eps=1e-5):
    """Fused ResidualBlock kernel; one batch sample per grid step."""
    wp = wo + 2                      # padded frame width
    lpf = (ho + 2) * wp + 2          # flattened padded frame length (+2 tail)
    qp = ho * wp                     # computed / stored span length
    p0 = wp + 1                      # frame offset of output pixel (0, 0)
    border = wp + 1                  # zero border on each side of the span

    def kernel(*refs):
        if has_down:
            (x_ref, w1_ref, w2_ref, wd_ref, par_ref, gmat_ref,
             out_ref, y1f_ref) = refs
        else:
            (x_ref, w1_ref, w2_ref, par_ref, gmat_ref,
             out_ref, y1f_ref) = refs
            wd_ref = None

        par = par_ref[...]                               # (cout, NP)   f32
        gmat = gmat_ref[...]                             # (cout, cout) f32

        # 1 at real pixels of the span, 0 at interleaved frame-padding cols.
        col = jax.lax.broadcasted_iota(jnp.int32, (1, qp), 1)
        mask = ((col % wp) < wo).astype(jnp.float32)     # (1, qp)

        def conv(frame_ref, w_taps_ref, k, bias):
            # frame_ref: (C, lpf) zero-padded flattened frame (compute dtype)
            # w_taps_ref: (k*k, cout, C) per-tap weight slabs
            # k*k accumulating dots -- no materialized im2col slab.
            acc = None
            for dy in range(k):
                for dx in range(k):
                    off = dy * wp + dx
                    z = jnp.dot(w_taps_ref[dy * k + dx],
                                frame_ref[:, off:off + qp],
                                preferred_element_type=jnp.float32)
                    acc = z if acc is None else acc + z
            return acc + bias                            # (cout, qp) f32

        def group_norm(z, gamma, beta):
            # Masked per-channel sums; one fused matmul for (mean, E[x^2]).
            # NOTE: single-pass E[x^2]-mean^2 (clamped); switch to shifted /
            # Welford accumulation when adding spatial tiling.
            zm = z * mask
            s1 = jnp.sum(zm, axis=1, keepdims=True)
            s2 = jnp.sum(zm * zm, axis=1, keepdims=True)
            stats = jnp.dot(gmat, jnp.concatenate([s1, s2], axis=1),
                            preferred_element_type=jnp.float32)
            mean = stats[:, 0:1]
            var = jnp.maximum(stats[:, 1:2] - mean * mean, 0.0)
            return (z - mean) * jax.lax.rsqrt(var + eps) * gamma + beta

        b1, g1, be1 = par[:, 0:1], par[:, 1:2], par[:, 2:3]
        b2, g2, be2 = par[:, 3:4], par[:, 4:5], par[:, 5:6]

        # ---- conv1 + GN1 + ReLU ----
        z1 = conv(x_ref, w1_ref, k1, b1)
        y1 = jnp.maximum(group_norm(z1, g1, be1), 0.0) * mask   # (cout, qp)

        # Re-frame y1 in persistent VMEM scratch so conv2 taps are contiguous.
        # Border re-zeroed every step (cheap; also keeps megacore batch
        # sharding correct without an init-once pl.when).
        y1f_ref[:, 0:border] = jnp.zeros((cout, border), compute_dtype)
        y1f_ref[:, p0 + qp:lpf] = jnp.zeros((cout, lpf - p0 - qp),
                                            compute_dtype)
        y1f_ref[:, p0:p0 + qp] = y1.astype(compute_dtype)

        # ---- conv2 + GN2 + ReLU ----  (no mask on y2: wrapper drops pads)
        z2 = conv(y1f_ref, w2_ref, 3, b2)
        y2 = jnp.maximum(group_norm(z2, g2, be2), 0.0)

        # ---- shortcut ----
        if has_down:
            bd, gd, bed = par[:, 6:7], par[:, 7:8], par[:, 8:9]
            x_sc = x_ref[0:cin_sc, p0:p0 + qp]           # phase-(0,0) chans
            zd = jnp.dot(wd_ref[...], x_sc,
                         preferred_element_type=jnp.float32) + bd
            xd = group_norm(zd, gd, bed)
        else:
            xd = x_ref[:, p0:p0 + qp].astype(jnp.float32)

        out_ref[...] = jnp.maximum(xd + y2, 0.0).astype(out_ref.dtype)

    return kernel


# ------------------------------ wrapper -----------------------------------
def _const_spec(shape):
    """BlockSpec for a grid-invariant operand; single-buffer it if supported."""
    index_map = lambda i: (0,) * len(shape)
    try:
        return pl.BlockSpec(shape, index_map, pipeline_mode=pl.Buffered(1))
    except (AttributeError, TypeError):
        return pl.BlockSpec(shape, index_map)


def _stride2_conv1_taps(w, cin, cout):
    """3x3/stride-2/pad-1 conv (HWIO weights) rewritten as a stride-1 2x2 conv
    over the phase-stacked (space-to-depth) input.  Returns (4, cout, 4*cin)."""
    taps = []
    for dy2 in range(2):
        for dx2 in range(2):
            blocks = []
            for ph in range(2):
                for qh in range(2):
                    dy = 2 * dy2 + ph - 1
                    dx = 2 * dx2 + qh - 1
                    if 0 <= dy <= 2 and 0 <= dx <= 2:
                        blocks.append(jnp.transpose(w[dy, dx]))   # (cout, cin)
                    else:
                        blocks.append(jnp.zeros((cout, cin), w.dtype))
            taps.append(jnp.concatenate(blocks, axis=1))          # (cout, 4cin)
    return jnp.stack(taps, axis=0)                                # (4,cout,4cin)


def residual_block(x_nchw, p, in_planes, planes, stride,
                   compute_dtype=jnp.bfloat16):
    """Pallas forward of ResidualBlock (norm_fn='group').  NCHW in / NCHW out."""
    n, cin, h, w = x_nchw.shape
    assert cin == in_planes and planes % 8 == 0
    num_groups = planes // 8
    cg = planes // num_groups
    has_down = not (stride == 1 and in_planes == planes)
    x = x_nchw.astype(jnp.float32)

    if stride == 1:
        ho, wo, k1, cin_eff = h, w, 3, in_planes
        cin_sc = in_planes
        xk = x
        w1t = jnp.transpose(p['w1'], (0, 1, 3, 2)).reshape(9, planes, in_planes)
        wdm = (jnp.transpose(p['wd'].reshape(in_planes, planes))
               if has_down else None)
    elif stride == 2:
        assert h % 2 == 0 and w % 2 == 0
        ho, wo, k1, cin_eff = h // 2, w // 2, 2, 4 * in_planes
        cin_sc = in_planes
        # space-to-depth: stacked channel index = (ph*2 + qh)*cin + ci
        xk = x.reshape(n, in_planes, ho, 2, wo, 2)
        xk = jnp.transpose(xk, (0, 3, 5, 1, 2, 4)).reshape(n, cin_eff, ho, wo)
        w1t = _stride2_conv1_taps(p['w1'], in_planes, planes)
        wdm = jnp.transpose(p['wd'].reshape(in_planes, planes))  # (cout, cin)
    else:
        raise NotImplementedError(f"stride={stride}")

    w2t = jnp.transpose(p['w2'], (0, 1, 3, 2)).reshape(9, planes, planes)

    wp = wo + 2
    lpf = (ho + 2) * wp + 2
    qp = ho * wp
    # Zero-padded, row-major-flattened frame per (sample, channel), plus 2
    # tail zeros so every conv tap slice of length qp stays in bounds.
    x_frame = jnp.pad(xk, ((0, 0), (0, 0), (1, 1), (1, 1)))
    x_frame = x_frame.reshape(n, cin_eff, (ho + 2) * wp)
    x_frame = jnp.pad(x_frame, ((0, 0), (0, 0), (0, 2))).astype(compute_dtype)

    # All per-channel parameters in one small f32 array (one DMA).
    cols = [p['b1'], p['g1'], p['be1'], p['b2'], p['g2'], p['be2']]
    if has_down:
        cols += [p['bd'], p['gd'], p['bed']]
    par = jnp.stack(cols, axis=1).astype(jnp.float32)            # (cout, NP)

    # Block-diagonal group-averaging matrix (shared by all GroupNorms).
    gidx = jnp.arange(planes) // cg
    gmat = (gidx[:, None] == gidx[None, :]).astype(jnp.float32) / float(
        ho * wo * cg)

    kernel = _make_block_kernel(k1, cin_eff, cin_sc, planes, ho, wo, has_down,
                                compute_dtype)

    args = [x_frame, w1t.astype(compute_dtype), w2t.astype(compute_dtype)]
    in_specs = [
        pl.BlockSpec((None, cin_eff, lpf), lambda i: (i, 0, 0)),
        _const_spec(w1t.shape),
        _const_spec(w2t.shape),
    ]
    if has_down:
        args.append(wdm.astype(compute_dtype))
        in_specs.append(_const_spec(wdm.shape))
    args += [par, gmat]
    in_specs += [_const_spec(par.shape), _const_spec(gmat.shape)]

    # Explicit scoped-VMEM budget from a computed footprint (+headroom).
    cdt_bytes = jnp.dtype(compute_dtype).itemsize
    weight_bytes = (w1t.size + w2t.size
                    + (wdm.size if has_down else 0)) * cdt_bytes \
                   + par.size * 4 + gmat.size * 4
    block_bytes = cin_eff * lpf * cdt_bytes + planes * qp * 4
    scratch_bytes = planes * lpf * cdt_bytes
    live_bytes = 6 * planes * qp * 4 + 2 * cin_eff * qp * cdt_bytes
    est = 2 * block_bytes + 2 * weight_bytes + scratch_bytes + live_bytes
    vmem_limit = int(min(max(2 * est, 32 << 20), 100 << 20))

    out = pl.pallas_call(
        kernel,
        out_shape=jax.ShapeDtypeStruct((n, planes, qp), jnp.float32),
        grid=(n,),
        in_specs=in_specs,
        out_specs=pl.BlockSpec((None, planes, qp), lambda i: (i, 0, 0)),
        scratch_shapes=[pltpu.VMEM((planes, lpf), compute_dtype)],
        compiler_params=pltpu.CompilerParams(
            dimension_semantics=("parallel",),
            vmem_limit_bytes=vmem_limit),
    )(*args)

    # Span (n, cout, ho*wp) -> (n, cout, ho, wo): pure reshape + slice.
    return out.reshape(n, planes, ho, wp)[:, :, :, :wo]


# ------------------------- deterministic parameters -------------------------
def init_params(key, in_planes, planes):
    ks = jax.random.split(key, 12)
    return {
        'w1': 0.1 * jax.random.normal(ks[0], (3, 3, in_planes, planes), jnp.float32),
        'b1': 0.1 * jax.random.normal(ks[1], (planes,), jnp.float32),
        'g1': 1.0 + 0.1 * jax.random.normal(ks[2], (planes,), jnp.float32),
        'be1': 0.1 * jax.random.normal(ks[3], (planes,), jnp.float32),
        'w2': 0.1 * jax.random.normal(ks[4], (3, 3, planes, planes), jnp.float32),
        'b2': 0.1 * jax.random.normal(ks[5], (planes,), jnp.float32),
        'g2': 1.0 + 0.1 * jax.random.normal(ks[6], (planes,), jnp.float32),
        'be2': 0.1 * jax.random.normal(ks[7], (planes,), jnp.float32),
        'wd': 0.1 * jax.random.normal(ks[8], (1, 1, in_planes, planes), jnp.float32),
        'bd': 0.1 * jax.random.normal(ks[9], (planes,), jnp.float32),
        'gd': 1.0 + 0.1 * jax.random.normal(ks[10], (planes,), jnp.float32),
        'bed': 0.1 * jax.random.normal(ks[11], (planes,), jnp.float32),
    }


# ---------------------------- pure-JAX reference ----------------------------
def _conv_ref(x, w, b, stride, pad):
    y = jax.lax.conv_general_dilated(
        x, w, (stride, stride), [(pad, pad), (pad, pad)],
        dimension_numbers=('NHWC', 'HWIO', 'NHWC'))
    return y + b


def _gn_ref(x, gamma, beta, num_groups, eps=1e-5):
    n, h, w, c = x.shape
    cg = c // num_groups
    xg = x.reshape(n, h * w, num_groups, cg)
    mean = xg.mean(axis=(1, 3), keepdims=True)
    var = xg.var(axis=(1, 3), keepdims=True)
    xn = ((xg - mean) / jnp.sqrt(var + eps)).reshape(n, h, w, c)
    return xn * gamma + beta


def residual_block_ref(x_nchw, p, in_planes, planes, stride):
    ng = planes // 8
    x = jnp.transpose(x_nchw, (0, 2, 3, 1)).astype(jnp.float32)
    y = jax.nn.relu(_gn_ref(_conv_ref(x, p['w1'], p['b1'], stride, 1),
                            p['g1'], p['be1'], ng))
    y = jax.nn.relu(_gn_ref(_conv_ref(y, p['w2'], p['b2'], 1, 1),
                            p['g2'], p['be2'], ng))
    if stride == 1 and in_planes == planes:
        xd = x
    else:
        xd = _gn_ref(_conv_ref(x, p['wd'], p['bd'], stride, 0),
                     p['gd'], p['bed'], ng)
    out = jax.nn.relu(xd + y)
    return jnp.transpose(out, (0, 3, 1, 2))


if __name__ == "__main__":
    key = jax.random.PRNGKey(0)
    kx1, kx2, kx3, kp1, kp2, kp3 = jax.random.split(key, 6)

    cases = [
        # (x NCHW, params, in_planes, planes, stride)
        (jax.random.normal(kx1, (2, 16, 16, 16), jnp.float32),
         init_params(kp1, 16, 16), 16, 16, 1),      # identity shortcut
        (jax.random.normal(kx2, (2, 8, 16, 16), jnp.float32),
         init_params(kp2, 8, 16), 8, 16, 2),        # stride-2 + 1x1 downsample
        (jax.random.normal(kx3, (2, 8, 16, 16), jnp.float32),
         init_params(kp3, 8, 16), 8, 16, 1),        # channel-change shortcut
    ]

    for idx, (x, prm, inp, pls, st) in enumerate(cases):
        ref = residual_block_ref(x, prm, inp, pls, st)
        out_f32 = residual_block(x, prm, inp, pls, st,
                                 compute_dtype=jnp.float32)
        out_bf16 = residual_block(x, prm, inp, pls, st,
                                  compute_dtype=jnp.bfloat16)
        jax.block_until_ready((ref, out_f32, out_bf16))
        assert out_f32.shape == ref.shape, (idx, out_f32.shape, ref.shape)
        e32 = float(jnp.max(jnp.abs(out_f32 - ref)))
        e16 = float(jnp.max(jnp.abs(out_bf16 - ref)))
        m16 = float(jnp.mean(jnp.abs(out_bf16 - ref)))
        assert e32 < 2e-3, (idx, e32)
        assert e16 < 1.5e-1 and m16 < 1e-2, (idx, e16, m16)

    print("KERNEL_OK")
</pallas_src>

<mosaic_0001>
module attributes {stable_mosaic.version = 11 : i64} {
  func.func @kernel(%arg0: i32, %arg1: memref<1x16x326xf32, #tpu.memory_space<vmem>>, %arg2: memref<9x16x16xf32, #tpu.memory_space<vmem>>, %arg3: memref<9x16x16xf32, #tpu.memory_space<vmem>>, %arg4: memref<16x6xf32, #tpu.memory_space<vmem>>, %arg5: memref<16x16xf32, #tpu.memory_space<vmem>>, %arg6: memref<1x16x288xf32, #tpu.memory_space<vmem>>, %arg7: memref<16x326xf32, #tpu.memory_space<vmem>>) attributes {dimension_semantics = [#tpu.dimension_semantics<parallel>], iteration_bounds = array<i64: 2>, scalar_prefetch = 0 : i64, scratch_operands = 1 : i64, tpu.core_type = #tpu.core_type<tc>, window_params = [{transform_indices = @transform_0, window_bounds = array<i64: 1, 16, 326>}, {pipeline_mode = #tpu.pipeline_mode<synchronous>, transform_indices = @transform_1, window_bounds = array<i64: 9, 16, 16>}, {pipeline_mode = #tpu.pipeline_mode<synchronous>, transform_indices = @transform_2, window_bounds = array<i64: 9, 16, 16>}, {pipeline_mode = #tpu.pipeline_mode<synchronous>, transform_indices = @transform_3, window_bounds = array<i64: 16, 6>}, {pipeline_mode = #tpu.pipeline_mode<synchronous>, transform_indices = @transform_4, window_bounds = array<i64: 16, 16>}, {transform_indices = @transform_5, window_bounds = array<i64: 1, 16, 288>}]} {
    %c0 = arith.constant 0 : index
    %c0_0 = arith.constant 0 : index
    %0 = vector.load %arg4[%c0, %c0_0] : memref<16x6xf32, #tpu.memory_space<vmem>>, vector<16x6xf32>
    %c0_1 = arith.constant 0 : index
    %c0_2 = arith.constant 0 : index
    %1 = vector.load %arg5[%c0_1, %c0_2] : memref<16x16xf32, #tpu.memory_space<vmem>>, vector<16x16xf32>
    %2 = tpu.iota {dimensions = array<i32: 1>} : vector<1x288xi32>
    %c18_i32 = arith.constant 18 : i32
    %c0_i32 = arith.constant 0 : i32
    %3 = arith.cmpi eq, %c18_i32, %c0_i32 : i32
    %c1_i32 = arith.constant 1 : i32
    %4 = arith.select %3, %c1_i32, %c18_i32 : i32
    %5 = vector.broadcast %4 : i32 to vector<1x288xi32>
    %6 = arith.remsi %2, %5 : vector<1x288xi32>
    %c0_i32_3 = arith.constant 0 : i32
    %7 = vector.broadcast %c0_i32_3 : i32 to vector<1x288xi32>
    %8 = arith.cmpi ne, %6, %7 : vector<1x288xi32>
    %c0_i32_4 = arith.constant 0 : i32
    %9 = vector.broadcast %c0_i32_4 : i32 to vector<1x288xi32>
    %10 = arith.cmpi slt, %6, %9 : vector<1x288xi32>
    %c0_i32_5 = arith.constant 0 : i32
    %11 = arith.cmpi slt, %4, %c0_i32_5 : i32
    %12 = vector.broadcast %11 : i1 to vector<1x288xi1>
    %13 = vector.broadcast %12 : vector<1x288xi1> to vector<1x288xi1>
    %14 = arith.xori %10, %13 : vector<1x288xi1>
    %15 = arith.andi %14, %8 : vector<1x288xi1>
    %16 = vector.broadcast %4 : i32 to vector<1x288xi32>
    %17 = arith.addi %6, %16 : vector<1x288xi32>
    %18 = arith.select %15, %17, %6 : vector<1x288xi1>, vector<1x288xi32>
    %c16_i32 = arith.constant 16 : i32
    %19 = vector.broadcast %c16_i32 : i32 to vector<1x288xi32>
    %20 = arith.cmpi slt, %18, %19 : vector<1x288xi32>
    %21 = arith.extui %20 : vector<1x288xi1> to vector<1x288xi32>
    %22 = arith.sitofp %21 : vector<1x288xi32> to vector<1x288xf32>
    %23 = vector.extract_strided_slice %0 {offsets = [0, 0], sizes = [16, 1], strides = [1, 1]} : vector<16x6xf32> to vector<16x1xf32>
    %24 = vector.extract_strided_slice %0 {offsets = [0, 1], sizes = [16, 1], strides = [1, 1]} : vector<16x6xf32> to vector<16x1xf32>
    %25 = vector.extract_strided_slice %0 {offsets = [0, 2], sizes = [16, 1], strides = [1, 1]} : vector<16x6xf32> to vector<16x1xf32>
    %26 = vector.extract_strided_slice %0 {offsets = [0, 3], sizes = [16, 1], strides = [1, 1]} : vector<16x6xf32> to vector<16x1xf32>
    %27 = vector.extract_strided_slice %0 {offsets = [0, 4], sizes = [16, 1], strides = [1, 1]} : vector<16x6xf32> to vector<16x1xf32>
    %28 = vector.extract_strided_slice %0 {offsets = [0, 5], sizes = [16, 1], strides = [1, 1]} : vector<16x6xf32> to vector<16x1xf32>
    %c0_6 = arith.constant 0 : index
    %c0_7 = arith.constant 0 : index
    %c0_8 = arith.constant 0 : index
    %29 = vector.load %arg2[%c0_6, %c0_7, %c0_8] : memref<9x16x16xf32, #tpu.memory_space<vmem>>, vector<1x16x16xf32>
    %30 = vector.shape_cast %29 : vector<1x16x16xf32> to vector<16x16xf32>
    %c0_9 = arith.constant 0 : index
    %c0_10 = arith.constant 0 : index
    %c0_11 = arith.constant 0 : index
    %31 = vector.load %arg1[%c0_9, %c0_10, %c0_11] : memref<1x16x326xf32, #tpu.memory_space<vmem>>, vector<1x16x288xf32>
    %32 = vector.shape_cast %31 : vector<1x16x288xf32> to vector<16x288xf32>
    %cst = arith.constant dense<0.000000e+00> : vector<16x288xf32>
    %33 = tpu.matmul %30, %32, %cst {dimension_numbers = #tpu.dot_dimension_numbers<[1], [0], [0], [1], [0, 0, 1, 1], [], []>} : vector<16x16xf32>, vector<16x288xf32>, vector<16x288xf32> -> vector<16x288xf32>
    %c1 = arith.constant 1 : index
    %c0_12 = arith.constant 0 : index
    %c0_13 = arith.constant 0 : index
    %34 = vector.load %arg2[%c1, %c0_12, %c0_13] : memref<9x16x16xf32, #tpu.memory_space<vmem>>, vector<1x16x16xf32>
    %35 = vector.shape_cast %34 : vector<1x16x16xf32> to vector<16x16xf32>
    %c0_14 = arith.constant 0 : index
    %c0_15 = arith.constant 0 : index
    %c1_16 = arith.constant 1 : index
    %36 = vector.load %arg1[%c0_14, %c0_15, %c1_16] : memref<1x16x326xf32, #tpu.memory_space<vmem>>, vector<1x16x288xf32>
    %37 = vector.shape_cast %36 : vector<1x16x288xf32> to vector<16x288xf32>
    %cst_17 = arith.constant dense<0.000000e+00> : vector<16x288xf32>
    %38 = tpu.matmul %35, %37, %cst_17 {dimension_numbers = #tpu.dot_dimension_numbers<[1], [0], [0], [1], [0, 0, 1, 1], [], []>} : vector<16x16xf32>, vector<16x288xf32>, vector<16x288xf32> -> vector<16x288xf32>
    %39 = arith.addf %33, %38 : vector<16x288xf32>
    %c2 = arith.constant 2 : index
    %c0_18 = arith.constant 0 : index
    %c0_19 = arith.constant 0 : index
    %40 = vector.load %arg2[%c2, %c0_18, %c0_19] : memref<9x16x16xf32, #tpu.memory_space<vmem>>, vector<1x16x16xf32>
    %41 = vector.shape_cast %40 : vector<1x16x16xf32> to vector<16x16xf32>
    %c0_20 = arith.constant 0 : index
    %c0_21 = arith.constant 0 : index
    %c2_22 = arith.constant 2 : index
    %42 = vector.load %arg1[%c0_20, %c0_21, %c2_22] : memref<1x16x326xf32, #tpu.memory_space<vmem>>, vector<1x16x288xf32>
    %43 = vector.shape_cast %42 : vector<1x16x288xf32> to vector<16x288xf32>
    %cst_23 = arith.constant dense<0.000000e+00> : vector<16x288xf32>
    %44 = tpu.matmul %41, %43, %cst_23 {dimension_numbers = #tpu.dot_dimension_numbers<[1], [0], [0], [1], [0, 0, 1, 1], [], []>} : vector<16x16xf32>, vector<16x288xf32>, vector<16x288xf32> -> vector<16x288xf32>
    %45 = arith.addf %39, %44 : vector<16x288xf32>
    %c3 = arith.constant 3 : index
    %c0_24 = arith.constant 0 : index
    %c0_25 = arith.constant 0 : index
    %46 = vector.load %arg2[%c3, %c0_24, %c0_25] : memref<9x16x16xf32, #tpu.memory_space<vmem>>, vector<1x16x16xf32>
    %47 = vector.shape_cast %46 : vector<1x16x16xf32> to vector<16x16xf32>
    %c0_26 = arith.constant 0 : index
    %c0_27 = arith.constant 0 : index
    %c18 = arith.constant 18 : index
    %48 = vector.load %arg1[%c0_26, %c0_27, %c18] : memref<1x16x326xf32, #tpu.memory_space<vmem>>, vector<1x16x288xf32>
    %49 = vector.shape_cast %48 : vector<1x16x288xf32> to vector<16x288xf32>
    %cst_28 = arith.constant dense<0.000000e+00> : vector<16x288xf32>
    %50 = tpu.matmul %47, %49, %cst_28 {dimension_numbers = #tpu.dot_dimension_numbers<[1], [0], [0], [1], [0, 0, 1, 1], [], []>} : vector<16x16xf32>, vector<16x288xf32>, vector<16x288xf32> -> vector<16x288xf32>
    %51 = arith.addf %45, %50 : vector<16x288xf32>
    %c4 = arith.constant 4 : index
    %c0_29 = arith.constant 0 : index
    %c0_30 = arith.constant 0 : index
    %52 = vector.load %arg2[%c4, %c0_29, %c0_30] : memref<9x16x16xf32, #tpu.memory_space<vmem>>, vector<1x16x16xf32>
    %53 = vector.shape_cast %52 : vector<1x16x16xf32> to vector<16x16xf32>
    %c0_31 = arith.constant 0 : index
    %c0_32 = arith.constant 0 : index
    %c19 = arith.constant 19 : index
    %54 = vector.load %arg1[%c0_31, %c0_32, %c19] : memref<1x16x326xf32, #tpu.memory_space<vmem>>, vector<1x16x288xf32>
    %55 = vector.shape_cast %54 : vector<1x16x288xf32> to vector<16x288xf32>
    %cst_33 = arith.constant dense<0.000000e+00> : vector<16x288xf32>
    %56 = tpu.matmul %53, %55, %cst_33 {dimension_numbers = #tpu.dot_dimension_numbers<[1], [0], [0], [1], [0, 0, 1, 1], [], []>} : vector<16x16xf32>, vector<16x288xf32>, vector<16x288xf32> -> vector<16x288xf32>
    %57 = arith.addf %51, %56 : vector<16x288xf32>
    %c5 = arith.constant 5 : index
    %c0_34 = arith.constant 0 : index
    %c0_35 = arith.constant 0 : index
    %58 = vector.load %arg2[%c5, %c0_34, %c0_35] : memref<9x16x16xf32, #tpu.memory_space<vmem>>, vector<1x16x16xf32>
    %59 = vector.shape_cast %58 : vector<1x16x16xf32> to vector<16x16xf32>
    %c0_36 = arith.constant 0 : index
    %c0_37 = arith.constant 0 : index
    %c20 = arith.constant 20 : index
    %60 = vector.load %arg1[%c0_36, %c0_37, %c20] : memref<1x16x326xf32, #tpu.memory_space<vmem>>, vector<1x16x288xf32>
    %61 = vector.shape_cast %60 : vector<1x16x288xf32> to vector<16x288xf32>
    %cst_38 = arith.constant dense<0.000000e+00> : vector<16x288xf32>
    %62 = tpu.matmul %59, %61, %cst_38 {dimension_numbers = #tpu.dot_dimension_numbers<[1], [0], [0], [1], [0, 0, 1, 1], [], []>} : vector<16x16xf32>, vector<16x288xf32>, vector<16x288xf32> -> vector<16x288xf32>
    %63 = arith.addf %57, %62 : vector<16x288xf32>
    %c6 = arith.constant 6 : index
    %c0_39 = arith.constant 0 : index
    %c0_40 = arith.constant 0 : index
    %64 = vector.load %arg2[%c6, %c0_39, %c0_40] : memref<9x16x16xf32, #tpu.memory_space<vmem>>, vector<1x16x16xf32>
    %65 = vector.shape_cast %64 : vector<1x16x16xf32> to vector<16x16xf32>
    %c0_41 = arith.constant 0 : index
    %c0_42 = arith.constant 0 : index
    %c36 = arith.constant 36 : index
    %66 = vector.load %arg1[%c0_41, %c0_42, %c36] : memref<1x16x326xf32, #tpu.memory_space<vmem>>, vector<1x16x288xf32>
    %67 = vector.shape_cast %66 : vector<1x16x288xf32> to vector<16x288xf32>
    %cst_43 = arith.constant dense<0.000000e+00> : vector<16x288xf32>
    %68 = tpu.matmul %65, %67, %cst_43 {dimension_numbers = #tpu.dot_dimension_numbers<[1], [0], [0], [1], [0, 0, 1, 1], [], []>} : vector<16x16xf32>, vector<16x288xf32>, vector<16x288xf32> -> vector<16x288xf32>
    %69 = arith.addf %63, %68 : vector<16x288xf32>
    %c7 = arith.constant 7 : index
    %c0_44 = arith.constant 0 : index
    %c0_45 = arith.constant 0 : index
    %70 = vector.load %arg2[%c7, %c0_44, %c0_45] : memref<9x16x16xf32, #tpu.memory_space<vmem>>, vector<1x16x16xf32>
    %71 = vector.shape_cast %70 : vector<1x16x16xf32> to vector<16x16xf32>
    %c0_46 = arith.constant 0 : index
    %c0_47 = arith.constant 0 : index
    %c37 = arith.constant 37 : index
    %72 = vector.load %arg1[%c0_46, %c0_47, %c37] : memref<1x16x326xf32, #tpu.memory_space<vmem>>, vector<1x16x288xf32>
    %73 = vector.shape_cast %72 : vector<1x16x288xf32> to vector<16x288xf32>
    %cst_48 = arith.constant dense<0.000000e+00> : vector<16x288xf32>
    %74 = tpu.matmul %71, %73, %cst_48 {dimension_numbers = #tpu.dot_dimension_numbers<[1], [0], [0], [1], [0, 0, 1, 1], [], []>} : vector<16x16xf32>, vector<16x288xf32>, vector<16x288xf32> -> vector<16x288xf32>
    %75 = arith.addf %69, %74 : vector<16x288xf32>
    %c8 = arith.constant 8 : index
    %c0_49 = arith.constant 0 : index
    %c0_50 = arith.constant 0 : index
    %76 = vector.load %arg2[%c8, %c0_49, %c0_50] : memref<9x16x16xf32, #tpu.memory_space<vmem>>, vector<1x16x16xf32>
    %77 = vector.shape_cast %76 : vector<1x16x16xf32> to vector<16x16xf32>
    %c0_51 = arith.constant 0 : index
    %c0_52 = arith.constant 0 : index
    %c38 = arith.constant 38 : index
    %78 = vector.load %arg1[%c0_51, %c0_52, %c38] : memref<1x16x326xf32, #tpu.memory_space<vmem>>, vector<1x16x288xf32>
    %79 = vector.shape_cast %78 : vector<1x16x288xf32> to vector<16x288xf32>
    %cst_53 = arith.constant dense<0.000000e+00> : vector<16x288xf32>
    %80 = tpu.matmul %77, %79, %cst_53 {dimension_numbers = #tpu.dot_dimension_numbers<[1], [0], [0], [1], [0, 0, 1, 1], [], []>} : vector<16x16xf32>, vector<16x288xf32>, vector<16x288xf32> -> vector<16x288xf32>
    %81 = arith.addf %75, %80 : vector<16x288xf32>
    %82 = vector.broadcast %23 : vector<16x1xf32> to vector<16x288xf32>
    %83 = arith.addf %81, %82 : vector<16x288xf32>
    %84 = vector.broadcast %22 : vector<1x288xf32> to vector<16x288xf32>
    %85 = arith.mulf %83, %84 : vector<16x288xf32>
    %cst_54 = arith.constant dense<0.000000e+00> : vector<16xf32>
    %86 = vector.multi_reduction <add>, %85, %cst_54 [1] : vector<16x288xf32> to vector<16xf32>
    %87 = vector.shape_cast %86 : vector<16xf32> to vector<16x1xf32>
    %88 = arith.mulf %85, %85 : vector<16x288xf32>
    %cst_55 = arith.constant dense<0.000000e+00> : vector<16xf32>
    %89 = vector.multi_reduction <add>, %88, %cst_55 [1] : vector<16x288xf32> to vector<16xf32>
    %90 = vector.shape_cast %89 : vector<16xf32> to vector<16x1xf32>
    %91 = tpu.concatenate %87, %90 in 1 : vector<16x1xf32>, vector<16x1xf32> -> vector<16x2xf32>
    %cst_56 = arith.constant dense<0.000000e+00> : vector<16x2xf32>
    %92 = tpu.matmul %1, %91, %cst_56 {dimension_numbers = #tpu.dot_dimension_numbers<[1], [0], [0], [1], [0, 0, 1, 1], [], []>} : vector<16x16xf32>, vector<16x2xf32>, vector<16x2xf32> -> vector<16x2xf32>
    %93 = vector.extract_strided_slice %92 {offsets = [0, 0], sizes = [16, 1], strides = [1, 1]} : vector<16x2xf32> to vector<16x1xf32>
    %94 = vector.extract_strided_slice %92 {offsets = [0, 1], sizes = [16, 1], strides = [1, 1]} : vector<16x2xf32> to vector<16x1xf32>
    %95 = arith.mulf %93, %93 : vector<16x1xf32>
    %96 = arith.subf %94, %95 : vector<16x1xf32>
    %cst_57 = arith.constant 0.000000e+00 : f32
    %97 = vector.broadcast %cst_57 : f32 to vector<16x1xf32>
    %98 = arith.maximumf %96, %97 : vector<16x1xf32>
    %99 = vector.broadcast %93 : vector<16x1xf32> to vector<16x288xf32>
    %100 = arith.subf %83, %99 : vector<16x288xf32>
    %cst_58 = arith.constant 9.99999974E-6 : f32
    %101 = vector.broadcast %cst_58 : f32 to vector<16x1xf32>
    %102 = arith.addf %98, %101 : vector<16x1xf32>
    %103 = math.rsqrt %102 : vector<16x1xf32>
    %104 = vector.broadcast %103 : vector<16x1xf32> to vector<16x288xf32>
    %105 = arith.mulf %100, %104 : vector<16x288xf32>
    %106 = vector.broadcast %24 : vector<16x1xf32> to vector<16x288xf32>
    %107 = arith.mulf %105, %106 : vector<16x288xf32>
    %108 = vector.broadcast %25 : vector<16x1xf32> to vector<16x288xf32>
    %109 = arith.addf %107, %108 : vector<16x288xf32>
    %cst_59 = arith.constant 0.000000e+00 : f32
    %110 = vector.broadcast %cst_59 : f32 to vector<16x288xf32>
    %111 = arith.maximumf %109, %110 : vector<16x288xf32>
    %112 = vector.broadcast %22 : vector<1x288xf32> to vector<16x288xf32>
    %113 = arith.mulf %111, %112 : vector<16x288xf32>
    %cst_60 = arith.constant 0.000000e+00 : f32
    %114 = vector.broadcast %cst_60 : f32 to vector<16x19xf32>
    %c0_61 = arith.constant 0 : index
    %c0_62 = arith.constant 0 : index
    %115 = vector.load %arg7[%c0_61, %c0_62] : memref<16x326xf32, #tpu.memory_space<vmem>>, vector<16x19xf32>
    tpu.vector_store %arg7[%c0_61, %c0_62], %114 {strides = array<i32>} : memref<16x326xf32, #tpu.memory_space<vmem>>, vector<16x19xf32>,
    %cst_63 = arith.constant 0.000000e+00 : f32
    %116 = vector.broadcast %cst_63 : f32 to vector<16x19xf32>
    %c0_64 = arith.constant 0 : index
    %c307 = arith.constant 307 : index
    %117 = vector.load %arg7[%c0_64, %c307] : memref<16x326xf32, #tpu.memory_space<vmem>>, vector<16x19xf32>
    tpu.vector_store %arg7[%c0_64, %c307], %116 {strides = array<i32>} : memref<16x326xf32, #tpu.memory_space<vmem>>, vector<16x19xf32>,
    %c0_65 = arith.constant 0 : index
    %c19_66 = arith.constant 19 : index
    %118 = vector.load %arg7[%c0_65, %c19_66] : memref<16x326xf32, #tpu.memory_space<vmem>>, vector<16x288xf32>
    tpu.vector_store %arg7[%c0_65, %c19_66], %113 {strides = array<i32>} : memref<16x326xf32, #tpu.memory_space<vmem>>, vector<16x288xf32>,
    %c0_67 = arith.constant 0 : index
    %c0_68 = arith.constant 0 : index
    %c0_69 = arith.constant 0 : index
    %119 = vector.load %arg3[%c0_67, %c0_68, %c0_69] : memref<9x16x16xf32, #tpu.memory_space<vmem>>, vector<1x16x16xf32>
    %120 = vector.shape_cast %119 : vector<1x16x16xf32> to vector<16x16xf32>
    %c0_70 = arith.constant 0 : index
    %c0_71 = arith.constant 0 : index
    %121 = vector.load %arg7[%c0_70, %c0_71] : memref<16x326xf32, #tpu.memory_space<vmem>>, vector<16x288xf32>
    %cst_72 = arith.constant dense<0.000000e+00> : vector<16x288xf32>
    %122 = tpu.matmul %120, %121, %cst_72 {dimension_numbers = #tpu.dot_dimension_numbers<[1], [0], [0], [1], [0, 0, 1, 1], [], []>} : vector<16x16xf32>, vector<16x288xf32>, vector<16x288xf32> -> vector<16x288xf32>
    %c1_73 = arith.constant 1 : index
    %c0_74 = arith.constant 0 : index
    %c0_75 = arith.constant 0 : index
    %123 = vector.load %arg3[%c1_73, %c0_74, %c0_75] : memref<9x16x16xf32, #tpu.memory_space<vmem>>, vector<1x16x16xf32>
    %124 = vector.shape_cast %123 : vector<1x16x16xf32> to vector<16x16xf32>
    %c0_76 = arith.constant 0 : index
    %c1_77 = arith.constant 1 : index
    %125 = vector.load %arg7[%c0_76, %c1_77] : memref<16x326xf32, #tpu.memory_space<vmem>>, vector<16x288xf32>
    %cst_78 = arith.constant dense<0.000000e+00> : vector<16x288xf32>
    %126 = tpu.matmul %124, %125, %cst_78 {dimension_numbers = #tpu.dot_dimension_numbers<[1], [0], [0], [1], [0, 0, 1, 1], [], []>} : vector<16x16xf32>, vector<16x288xf32>, vector<16x288xf32> -> vector<16x288xf32>
    %127 = arith.addf %122, %126 : vector<16x288xf32>
    %c2_79 = arith.constant 2 : index
    %c0_80 = arith.constant 0 : index
    %c0_81 = arith.constant 0 : index
    %128 = vector.load %arg3[%c2_79, %c0_80, %c0_81] : memref<9x16x16xf32, #tpu.memory_space<vmem>>, vector<1x16x16xf32>
    %129 = vector.shape_cast %128 : vector<1x16x16xf32> to vector<16x16xf32>
    %c0_82 = arith.constant 0 : index
    %c2_83 = arith.constant 2 : index
    %130 = vector.load %arg7[%c0_82, %c2_83] : memref<16x326xf32, #tpu.memory_space<vmem>>, vector<16x288xf32>
    %cst_84 = arith.constant dense<0.000000e+00> : vector<16x288xf32>
    %131 = tpu.matmul %129, %130, %cst_84 {dimension_numbers = #tpu.dot_dimension_numbers<[1], [0], [0], [1], [0, 0, 1, 1], [], []>} : vector<16x16xf32>, vector<16x288xf32>, vector<16x288xf32> -> vector<16x288xf32>
    %132 = arith.addf %127, %131 : vector<16x288xf32>
    %c3_85 = arith.constant 3 : index
    %c0_86 = arith.constant 0 : index
    %c0_87 = arith.constant 0 : index
    %133 = vector.load %arg3[%c3_85, %c0_86, %c0_87] : memref<9x16x16xf32, #tpu.memory_space<vmem>>, vector<1x16x16xf32>
    %134 = vector.shape_cast %133 : vector<1x16x16xf32> to vector<16x16xf32>
    %c0_88 = arith.constant 0 : index
    %c18_89 = arith.constant 18 : index
    %135 = vector.load %arg7[%c0_88, %c18_89] : memref<16x326xf32, #tpu.memory_space<vmem>>, vector<16x288xf32>
    %cst_90 = arith.constant dense<0.000000e+00> : vector<16x288xf32>
    %136 = tpu.matmul %134, %135, %cst_90 {dimension_numbers = #tpu.dot_dimension_numbers<[1], [0], [0], [1], [0, 0, 1, 1], [], []>} : vector<16x16xf32>, vector<16x288xf32>, vector<16x288xf32> -> vector<16x288xf32>
    %137 = arith.addf %132, %136 : vector<16x288xf32>
    %c4_91 = arith.constant 4 : index
    %c0_92 = arith.constant 0 : index
    %c0_93 = arith.constant 0 : index
    %138 = vector.load %arg3[%c4_91, %c0_92, %c0_93] : memref<9x16x16xf32, #tpu.memory_space<vmem>>, vector<1x16x16xf32>
    %139 = vector.shape_cast %138 : vector<1x16x16xf32> to vector<16x16xf32>
    %c0_94 = arith.constant 0 : index
    %c19_95 = arith.constant 19 : index
    %140 = vector.load %arg7[%c0_94, %c19_95] : memref<16x326xf32, #tpu.memory_space<vmem>>, vector<16x288xf32>
    %cst_96 = arith.constant dense<0.000000e+00> : vector<16x288xf32>
    %141 = tpu.matmul %139, %140, %cst_96 {dimension_numbers = #tpu.dot_dimension_numbers<[1], [0], [0], [1], [0, 0, 1, 1], [], []>} : vector<16x16xf32>, vector<16x288xf32>, vector<16x288xf32> -> vector<16x288xf32>
    %142 = arith.addf %137, %141 : vector<16x288xf32>
    %c5_97 = arith.constant 5 : index
    %c0_98 = arith.constant 0 : index
    %c0_99 = arith.constant 0 : index
    %143 = vector.load %arg3[%c5_97, %c0_98, %c0_99] : memref<9x16x16xf32, #tpu.memory_space<vmem>>, vector<1x16x16xf32>
    %144 = vector.shape_cast %143 : vector<1x16x16xf32> to vector<16x16xf32>
    %c0_100 = arith.constant 0 : index
    %c20_101 = arith.constant 20 : index
    %145 = vector.load %arg7[%c0_100, %c20_101] : memref<16x326xf32, #tpu.memory_space<vmem>>, vector<16x288xf32>
    %cst_102 = arith.constant dense<0.000000e+00> : vector<16x288xf32>
    %146 = tpu.matmul %144, %145, %cst_102 {dimension_numbers = #tpu.dot_dimension_numbers<[1], [0], [0], [1], [0, 0, 1, 1], [], []>} : vector<16x16xf32>, vector<16x288xf32>, vector<16x288xf32> -> vector<16x288xf32>
    %147 = arith.addf %142, %146 : vector<16x288xf32>
    %c6_103 = arith.constant 6 : index
    %c0_104 = arith.constant 0 : index
    %c0_105 = arith.constant 0 : index
    %148 = vector.load %arg3[%c6_103, %c0_104, %c0_105] : memref<9x16x16xf32, #tpu.memory_space<vmem>>, vector<1x16x16xf32>
    %149 = vector.shape_cast %148 : vector<1x16x16xf32> to vector<16x16xf32>
    %c0_106 = arith.constant 0 : index
    %c36_107 = arith.constant 36 : index
    %150 = vector.load %arg7[%c0_106, %c36_107] : memref<16x326xf32, #tpu.memory_space<vmem>>, vector<16x288xf32>
    %cst_108 = arith.constant dense<0.000000e+00> : vector<16x288xf32>
    %151 = tpu.matmul %149, %150, %cst_108 {dimension_numbers = #tpu.dot_dimension_numbers<[1], [0], [0], [1], [0, 0, 1, 1], [], []>} : vector<16x16xf32>, vector<16x288xf32>, vector<16x288xf32> -> vector<16x288xf32>
    %152 = arith.addf %147, %151 : vector<16x288xf32>
    %c7_109 = arith.constant 7 : index
    %c0_110 = arith.constant 0 : index
    %c0_111 = arith.constant 0 : index
    %153 = vector.load %arg3[%c7_109, %c0_110, %c0_111] : memref<9x16x16xf32, #tpu.memory_space<vmem>>, vector<1x16x16xf32>
    %154 = vector.shape_cast %153 : vector<1x16x16xf32> to vector<16x16xf32>
    %c0_112 = arith.constant 0 : index
    %c37_113 = arith.constant 37 : index
    %155 = vector.load %arg7[%c0_112, %c37_113] : memref<16x326xf32, #tpu.memory_space<vmem>>, vector<16x288xf32>
    %cst_114 = arith.constant dense<0.000000e+00> : vector<16x288xf32>
    %156 = tpu.matmul %154, %155, %cst_114 {dimension_numbers = #tpu.dot_dimension_numbers<[1], [0], [0], [1], [0, 0, 1, 1], [], []>} : vector<16x16xf32>, vector<16x288xf32>, vector<16x288xf32> -> vector<16x288xf32>
    %157 = arith.addf %152, %156 : vector<16x288xf32>
    %c8_115 = arith.constant 8 : index
    %c0_116 = arith.constant 0 : index
    %c0_117 = arith.constant 0 : index
    %158 = vector.load %arg3[%c8_115, %c0_116, %c0_117] : memref<9x16x16xf32, #tpu.memory_space<vmem>>, vector<1x16x16xf32>
    %159 = vector.shape_cast %158 : vector<1x16x16xf32> to vector<16x16xf32>
    %c0_118 = arith.constant 0 : index
    %c38_119 = arith.constant 38 : index
    %160 = vector.load %arg7[%c0_118, %c38_119] : memref<16x326xf32, #tpu.memory_space<vmem>>, vector<16x288xf32>
    %cst_120 = arith.constant dense<0.000000e+00> : vector<16x288xf32>
    %161 = tpu.matmul %159, %160, %cst_120 {dimension_numbers = #tpu.dot_dimension_numbers<[1], [0], [0], [1], [0, 0, 1, 1], [], []>} : vector<16x16xf32>, vector<16x288xf32>, vector<16x288xf32> -> vector<16x288xf32>
    %162 = arith.addf %157, %161 : vector<16x288xf32>
    %163 = vector.broadcast %26 : vector<16x1xf32> to vector<16x288xf32>
    %164 = arith.addf %162, %163 : vector<16x288xf32>
    %165 = vector.broadcast %22 : vector<1x288xf32> to vector<16x288xf32>
    %166 = arith.mulf %164, %165 : vector<16x288xf32>
    %cst_121 = arith.constant dense<0.000000e+00> : vector<16xf32>
    %167 = vector.multi_reduction <add>, %166, %cst_121 [1] : vector<16x288xf32> to vector<16xf32>
    %168 = vector.shape_cast %167 : vector<16xf32> to vector<16x1xf32>
    %169 = arith.mulf %166, %166 : vector<16x288xf32>
    %cst_122 = arith.constant dense<0.000000e+00> : vector<16xf32>
    %170 = vector.multi_reduction <add>, %169, %cst_122 [1] : vector<16x288xf32> to vector<16xf32>
    %171 = vector.shape_cast %170 : vector<16xf32> to vector<16x1xf32>
    %172 = tpu.concatenate %168, %171 in 1 : vector<16x1xf32>, vector<16x1xf32> -> vector<16x2xf32>
    %cst_123 = arith.constant dense<0.000000e+00> : vector<16x2xf32>
    %173 = tpu.matmul %1, %172, %cst_123 {dimension_numbers = #tpu.dot_dimension_numbers<[1], [0], [0], [1], [0, 0, 1, 1], [], []>} : vector<16x16xf32>, vector<16x2xf32>, vector<16x2xf32> -> vector<16x2xf32>
    %174 = vector.extract_strided_slice %173 {offsets = [0, 0], sizes = [16, 1], strides = [1, 1]} : vector<16x2xf32> to vector<16x1xf32>
    %175 = vector.extract_strided_slice %173 {offsets = [0, 1], sizes = [16, 1], strides = [1, 1]} : vector<16x2xf32> to vector<16x1xf32>
    %176 = arith.mulf %174, %174 : vector<16x1xf32>
    %177 = arith.subf %175, %176 : vector<16x1xf32>
    %cst_124 = arith.constant 0.000000e+00 : f32
    %178 = vector.broadcast %cst_124 : f32 to vector<16x1xf32>
    %179 = arith.maximumf %177, %178 : vector<16x1xf32>
    %180 = vector.broadcast %174 : vector<16x1xf32> to vector<16x288xf32>
    %181 = arith.subf %164, %180 : vector<16x288xf32>
    %cst_125 = arith.constant 9.99999974E-6 : f32
    %182 = vector.broadcast %cst_125 : f32 to vector<16x1xf32>
    %183 = arith.addf %179, %182 : vector<16x1xf32>
    %184 = math.rsqrt %183 : vector<16x1xf32>
    %185 = vector.broadcast %184 : vector<16x1xf32> to vector<16x288xf32>
    %186 = arith.mulf %181, %185 : vector<16x288xf32>
    %187 = vector.broadcast %27 : vector<16x1xf32> to vector<16x288xf32>
    %188 = arith.mulf %186, %187 : vector<16x288xf32>
    %189 = vector.broadcast %28 : vector<16x1xf32> to vector<16x288xf32>
    %190 = arith.addf %188, %189 : vector<16x288xf32>
    %cst_126 = arith.constant 0.000000e+00 : f32
    %191 = vector.broadcast %cst_126 : f32 to vector<16x288xf32>
    %192 = arith.maximumf %190, %191 : vector<16x288xf32>
    %c0_127 = arith.constant 0 : index
    %c0_128 = arith.constant 0 : index
    %c19_129 = arith.constant 19 : index
    %193 = vector.load %arg1[%c0_127, %c0_128, %c19_129] : memref<1x16x326xf32, #tpu.memory_space<vmem>>, vector<1x16x288xf32>
    %194 = vector.shape_cast %193 : vector<1x16x288xf32> to vector<16x288xf32>
    %195 = arith.addf %194, %192 : vector<16x288xf32>
    %cst_130 = arith.constant 0.000000e+00 : f32
    %196 = vector.broadcast %cst_130 : f32 to vector<16x288xf32>
    %197 = arith.maximumf %195, %196 : vector<16x288xf32>
    %c0_131 = arith.constant 0 : index
    %c0_132 = arith.constant 0 : index
    %c0_133 = arith.constant 0 : index
    %198 = vector.load %arg6[%c0_131, %c0_132, %c0_133] : memref<1x16x288xf32, #tpu.memory_space<vmem>>, vector<1x16x288xf32>
    %199 = vector.shape_cast %198 : vector<1x16x288xf32> to vector<16x288xf32>
    %200 = vector.shape_cast %197 : vector<16x288xf32> to vector<1x16x288xf32>
    tpu.vector_store %arg6[%c0_131, %c0_132, %c0_133], %200 {strides = array<i32>} : memref<1x16x288xf32, #tpu.memory_space<vmem>>, vector<1x16x288xf32>,
    return
  }
  func.func @transform_0(%arg0: i32) -> (i32, i32, i32) {
    %c0_i32 = arith.constant 0 : i32
    %c0_i32_0 = arith.constant 0 : i32
    %c0_i32_1 = arith.constant 0 : i32
    return %arg0, %c0_i32, %c0_i32_0 : i32, i32, i32
  }
  func.func @transform_1(%arg0: i32) -> (i32, i32, i32) {
    %c0_i32 = arith.constant 0 : i32
    %c0_i32_0 = arith.constant 0 : i32
    %c0_i32_1 = arith.constant 0 : i32
    %c0_i32_2 = arith.constant 0 : i32
    return %c0_i32, %c0_i32_0, %c0_i32_1 : i32, i32, i32
  }
  func.func @transform_2(%arg0: i32) -> (i32, i32, i32) {
    %c0_i32 = arith.constant 0 : i32
    %c0_i32_0 = arith.constant 0 : i32
    %c0_i32_1 = arith.constant 0 : i32
    %c0_i32_2 = arith.constant 0 : i32
    return %c0_i32, %c0_i32_0, %c0_i32_1 : i32, i32, i32
  }
  func.func @transform_3(%arg0: i32) -> (i32, i32) {
    %c0_i32 = arith.constant 0 : i32
    %c0_i32_0 = arith.constant 0 : i32
    %c0_i32_1 = arith.constant 0 : i32
    return %c0_i32, %c0_i32_0 : i32, i32
  }
  func.func @transform_4(%arg0: i32) -> (i32, i32) {
    %c0_i32 = arith.constant 0 : i32
    %c0_i32_0 = arith.constant 0 : i32
    %c0_i32_1 = arith.constant 0 : i32
    return %c0_i32, %c0_i32_0 : i32, i32
  }
  func.func @transform_5(%arg0: i32) -> (i32, i32, i32) {
    %c0_i32 = arith.constant 0 : i32
    %c0_i32_0 = arith.constant 0 : i32
    %c0_i32_1 = arith.constant 0 : i32
    return %arg0, %c0_i32, %c0_i32_0 : i32, i32, i32
  }
}

</mosaic_0001>

<llo_original>
// kernel: tpu_custom_call.1
$region0: #{tpu_custom_call.1}
  #allocation0 [shape = 'u32[]', space=smem, size = 0x4, offset = 0x4, fixed_abs, tag = 'smem constant byte address 0x4 - core index']
  #allocation1 [shape = 'u32[144,128]{1,0:T(1,128)}', space=vmem, size = 0x12000, scoped, tag = 'internal scratch']
  #allocation2 [shape = 'f32[16,326]{1,0:T(8,128)}', space=vmem, size = 0x6000, scoped, tag = 'scratch operand']
  %s0 = inlined_call_operand.hbm [shape: f32[2,16,326], index: 0, kind: input, shape index: {}]
  %s1 = inlined_call_operand.hbm [shape: f32[9,16,16], index: 1, kind: input, shape index: {}]
  %s2 = inlined_call_operand.hbm [shape: f32[9,16,16], index: 2, kind: input, shape index: {}]
  %s3 = inlined_call_operand.vmem [shape: f32[16,6], index: 3, kind: input, shape index: {}]
  %s4 = inlined_call_operand.vmem [shape: f32[16,16], index: 4, kind: input, shape index: {}]
  %s5 = inlined_call_operand.hbm [shape: f32[2,16,288], index: 5, kind: output, shape index: {}]
  %s6 = sld [smem:[#allocation0]]
  $region65: #{tpu_custom_call.1} parent=0
    _
  %s8 = ssub.s32 1, %s6
  %s9 = scalar_select 0, %s8, %s6
  $region1: #{tpu_custom_call.1} parent=0
    #allocation3 [shape = 'u8[49152]{0}', space=vmem, size = 0xc000, scoped, tag = 'input window, operand 0']
    #allocation4 [shape = 's32[2]{0}', space=sflag, size = 0x8, scoped, tag = 'scoped memory for tpu_custom_call.1']
    #allocation5 [shape = 's32[2]{0}', space=sflag, size = 0x8, scoped, tag = 'scoped memory for tpu_custom_call.1']
    #allocation6 [shape = 'u8[73728]{0}', space=vmem, size = 0x12000, scoped, tag = 'input window, operand 1, single buffered']
    #allocation7 [shape = 's32[1]{0}', space=sflag, size = 0x4, scoped, tag = 'scoped memory for tpu_custom_call.1']
    #allocation8 [shape = 'u8[73728]{0}', space=vmem, size = 0x12000, scoped, tag = 'input window, operand 2, single buffered']
    #allocation9 [shape = 'u8[49152]{0}', space=vmem, size = 0xc000, scoped, tag = 'output window, operand 0']
    %10 = vsyncpa [#allocation4], 0
    %s11 = scalar_lea.sflag [#allocation4], 1
    %12 = vsyncpa %s11, 0
    %13 = vsyncpa [#allocation7], 0
    %14 = vsyncpa [#allocation5], 0
    %s15 = scalar_lea.sflag [#allocation5], 1
    %16 = vsyncpa %s15, 0
    loop: start=0, step=1, limit=4
    $region2: #{tpu_custom_call.1} parent=1 // loop_pre_header
      _
    $region3: #{tpu_custom_call.1} parent=1 // loop_header
      %s18 = sphi 0, %s22
      %p19 = scmp.ge.s32.totalorder %s18, 4
      %s28 = sphi 0, %s30
      %s31 = sphi 0, %s28
      %s32 = sphi 0, %s31
      %s48 = sphi 0, %s32
      %s52 = sphi 0, %s52
      %s54 = sphi 0, %s52
      %s55 = sphi 0, %s54
      %s69 = sphi 0, %s55
      %s73 = sphi 0, %s73
      %s75 = sphi 0, %s73
      %s76 = sphi 0, %s75
      %s90 = sphi 0, %s76
      %s94 = sphi 0, %s94
      %s96 = sphi 0, %s94
      %s97 = sphi 0, %s96
      %s111 = sphi 0, %s97
      %s115 = sphi 0, %s115
      %s117 = sphi 0, %s115
      %s118 = sphi 0, %s117
      %s132 = sphi 0, %s118
      %s138 = sphi 0, %s140
      %s141 = sphi 0, %s138
      %s142 = sphi 0, %s141
      %s158 = sphi 0, %s142
    $region4: #{tpu_custom_call.1} parent=1 // loop_header_branch
      %21 = sbr.rel (%p19) target = $region8
    $region5: #{tpu_custom_call.1} parent=1 // loop_body
      %s23 = ssub.s32 %s18, 1
      %s24 = ssub.s32 %s18, 2
      %s25 = sadd.s32 %s18, 1
      %s26 = ssub.s32 %s18, %s25
      %p27 = scmp.eq.s32.totalorder %s26, 0
      %s29 = sadd.s32 %s28, 1
      %s30 = scalar_select %p27, %s28, %s29
      %p33 = pneg %p27
      %p34 = scmp.eq.s32.totalorder %s18, 1
      %p35 = por %p33, %p34
      %p36 = scmp.ne.s32.totalorder %s28, %s31
      %p37 = scmp.eq.s32.totalorder %s18, 0
      %p38 = por %p36, %p37
      %p39 = scmp.ne.s32.totalorder %s28, %s31
      %p40 = scmp.eq.s32.totalorder %s23, 1
      %p41 = por %p39, %p40
      %p42 = scmp.ne.s32.totalorder %s31, %s32
      %p43 = scmp.eq.s32.totalorder %s23, 0
      %p44 = por %p42, %p43
      %p45 = scmp.ne.s32.totalorder %s31, %s32
      %p46 = scmp.eq.s32.totalorder %s24, 1
      %p47 = por %p45, %p46
      %p49 = scmp.ne.s32.totalorder %s32, %s48
      %p50 = scmp.eq.s32.totalorder %s24, 0
      %p51 = por %p49, %p50
      %s53 = sadd.s32 %s52, 1
      %p56 = scmp.eq.s32.totalorder %s18, 1
      %p57 = scmp.ne.s32.totalorder %s52, %s54
      %p58 = scmp.eq.s32.totalorder %s18, 0
      %p59 = por %p57, %p58
      %p60 = scmp.ne.s32.totalorder %s52, %s54
      %p61 = scmp.eq.s32.totalorder %s23, 1
      %p62 = por %p60, %p61
      %p63 = scmp.ne.s32.totalorder %s54, %s55
      %p64 = scmp.eq.s32.totalorder %s23, 0
      %p65 = por %p63, %p64
      %p66 = scmp.ne.s32.totalorder %s54, %s55
      %p67 = scmp.eq.s32.totalorder %s24, 1
      %p68 = por %p66, %p67
      %p70 = scmp.ne.s32.totalorder %s55, %s69
      %p71 = scmp.eq.s32.totalorder %s24, 0
      %p72 = por %p70, %p71
      %s74 = sadd.s32 %s73, 1
      %p77 = scmp.eq.s32.totalorder %s18, 1
      %p78 = scmp.ne.s32.totalorder %s73, %s75
      %p79 = scmp.eq.s32.totalorder %s18, 0
      %p80 = por %p78, %p79
      %p81 = scmp.ne.s32.totalorder %s73, %s75
      %p82 = scmp.eq.s32.totalorder %s23, 1
      %p83 = por %p81, %p82
      %p84 = scmp.ne.s32.totalorder %s75, %s76
      %p85 = scmp.eq.s32.totalorder %s23, 0
      %p86 = por %p84, %p85
      %p87 = scmp.ne.s32.totalorder %s75, %s76
      %p88 = scmp.eq.s32.totalorder %s24, 1
      %p89 = por %p87, %p88
      %p91 = scmp.ne.s32.totalorder %s76, %s90
      %p92 = scmp.eq.s32.totalorder %s24, 0
      %p93 = por %p91, %p92
      %s95 = sadd.s32 %s94, 1
      %p98 = scmp.eq.s32.totalorder %s18, 1
      %p99 = scmp.ne.s32.totalorder %s94, %s96
      %p100 = scmp.eq.s32.totalorder %s18, 0
      %p101 = por %p99, %p100
      %p102 = scmp.ne.s32.totalorder %s94, %s96
      %p103 = scmp.eq.s32.totalorder %s23, 1
      %p104 = por %p102, %p103
      %p105 = scmp.ne.s32.totalorder %s96, %s97
      %p106 = scmp.eq.s32.totalorder %s23, 0
      %p107 = por %p105, %p106
      %p108 = scmp.ne.s32.totalorder %s96, %s97
      %p109 = scmp.eq.s32.totalorder %s24, 1
      %p110 = por %p108, %p109
      %p112 = scmp.ne.s32.totalorder %s97, %s111
      %p113 = scmp.eq.s32.totalorder %s24, 0
      %p114 = por %p112, %p113
      %s116 = sadd.s32 %s115, 1
      %p119 = scmp.eq.s32.totalorder %s18, 1
      %p120 = scmp.ne.s32.totalorder %s115, %s117
      %p121 = scmp.eq.s32.totalorder %s18, 0
      %p122 = por %p120, %p121
      %p123 = scmp.ne.s32.totalorder %s115, %s117
      %p124 = scmp.eq.s32.totalorder %s23, 1
      %p125 = por %p123, %p124
      %p126 = scmp.ne.s32.totalorder %s117, %s118
      %p127 = scmp.eq.s32.totalorder %s23, 0
      %p128 = por %p126, %p127
      %p129 = scmp.ne.s32.totalorder %s117, %s118
      %p130 = scmp.eq.s32.totalorder %s24, 1
      %p131 = por %p129, %p130
      %p133 = scmp.ne.s32.totalorder %s118, %s132
      %p134 = scmp.eq.s32.totalorder %s24, 0
      %p135 = por %p133, %p134
      %s136 = ssub.s32 %s18, %s25
      %p137 = scmp.eq.s32.totalorder %s136, 0
      %s139 = sadd.s32 %s138, 1
      %s140 = scalar_select %p137, %s138, %s139
      %p143 = pneg %p137
      %p144 = scmp.eq.s32.totalorder %s18, 1
      %p145 = por %p143, %p144
      %p146 = scmp.ne.s32.totalorder %s138, %s141
      %p147 = scmp.eq.s32.totalorder %s18, 0
      %p148 = por %p146, %p147
      %p149 = scmp.ne.s32.totalorder %s138, %s141
      %p150 = scmp.eq.s32.totalorder %s23, 1
      %p151 = por %p149, %p150
      %p152 = scmp.ne.s32.totalorder %s141, %s142
      %p153 = scmp.eq.s32.totalorder %s23, 0
      %p154 = por %p152, %p153
      %p155 = scmp.ne.s32.totalorder %s141, %s142
      %p156 = scmp.eq.s32.totalorder %s24, 1
      %p157 = por %p155, %p156
      %p159 = scmp.ne.s32.totalorder %s142, %s158
      %p160 = scmp.eq.s32.totalorder %s24, 0
      %p161 = por %p159, %p160
      %p162 = scmp.le.s32.totalorder 1, %s18
      %p163 = scmp.lt.s32.totalorder %s18, 3
      %p164 = pnand %p162, %p163
      %p165 = pneg %p164
      // Predicated region
      $region9: #{tpu_custom_call.1} parent=5 // pred_check
        _
      $region10: #{tpu_custom_call.1} parent=5 // pred_check_branch
        %167 = sbr.rel (%p164) target = $region12
      $region11: #{tpu_custom_call.1} parent=5 // pred_region
        %s168 = ssub.s32 %s18, 1
        // Predicated region
        $region13: #{tpu_custom_call.1} parent=11 // pred_check
          %p169 = pneg %p65
        $region14: #{tpu_custom_call.1} parent=11 // pred_check_branch
          %171 = sbr.rel (%p169) target = $region16
        $region15: #{tpu_custom_call.1} parent=11 // pred_region
          %s173 = ssub.s32 2304, 2304
          %174 = vsyncadd [#allocation7], %s173
          %s175 = sshll.u32 [#allocation6], 4
          %s176 = int_to_ptr.vmem [resolvable:$true] %s175
          %181 = dma.hbm_to_vmem [thread:$0]  %s1, 2304, %s176, [#allocation7], 128, 128, 8
        $region16: #{tpu_custom_call.1} parent=11 // pred_fallthru
          _
        // Predicated region
        $region17: #{tpu_custom_call.1} parent=11 // pred_check
          %p182 = pneg %p86
        $region18: #{tpu_custom_call.1} parent=11 // pred_check_branch
          %184 = sbr.rel (%p182) target = $region20
        $region19: #{tpu_custom_call.1} parent=11 // pred_region
          %s186 = ssub.s32 2304, 2304
          %187 = vsyncadd [#allocation7], %s186
          %s188 = sshll.u32 [#allocation8], 4
          %s189 = int_to_ptr.vmem [resolvable:$true] %s188
          %194 = dma.hbm_to_vmem [thread:$0]  %s2, 2304, %s189, [#allocation7], 128, 128, 8
        $region20: #{tpu_custom_call.1} parent=11 // pred_fallthru
          _
        // Predicated region
        $region21: #{tpu_custom_call.1} parent=11 // pred_check
          %p195 = pneg %p107
        $region22: #{tpu_custom_call.1} parent=11 // pred_check_branch
          %197 = sbr.rel (%p195) target = $region24
        $region23: #{tpu_custom_call.1} parent=11 // pred_region
          _
        $region24: #{tpu_custom_call.1} parent=11 // pred_fallthru
          _
        // Predicated region
        $region25: #{tpu_custom_call.1} parent=11 // pred_check
          %p198 = pneg %p128
        $region26: #{tpu_custom_call.1} parent=11 // pred_check_branch
          %200 = sbr.rel (%p198) target = $region28
        $region27: #{tpu_custom_call.1} parent=11 // pred_region
          _
        $region28: #{tpu_custom_call.1} parent=11 // pred_fallthru
          _
      $region12: #{tpu_custom_call.1} parent=5 // pred_fallthru
        _
      %p201 = scmp.lt.s32.totalorder %s18, 2
      // Predicated region
      $region29: #{tpu_custom_call.1} parent=5 // pred_check
        %p202 = pneg %p201
      $region30: #{tpu_custom_call.1} parent=5 // pred_check_branch
        %204 = sbr.rel (%p202) target = $region32
      $region31: #{tpu_custom_call.1} parent=5 // pred_region
        // Predicated region
        $region33: #{tpu_custom_call.1} parent=31 // pred_check
          %p205 = pneg %p38
        $region34: #{tpu_custom_call.1} parent=31 // pred_check_branch
          %207 = sbr.rel (%p205) target = $region36
        $region35: #{tpu_custom_call.1} parent=31 // pred_region
          %s208 = sand.u32 %s28, 1
          %s209 = scalar_lea.sflag [#allocation4], %s208
          %s210 = sand.u32 %s28, 1
          %s211 = smul.addr %s210, 48
          %s212 = scalar_lea.vmem [#allocation3], %s211
          %s214 = ssub.s32 768, 768
          %215 = vsyncadd %s209, %s214
          %s216 = smul.addr %s18, 6
          %s217 = smul.addr %s216, 128
          %s218 = scalar_lea.hbm %s0, %s217
          %s219 = sshll.u32 %s212, 4
          %s220 = int_to_ptr.vmem [resolvable:$true] %s219
          %225 = dma.hbm_to_vmem [thread:$0]  %s218, 768, %s220, %s209, 384, 384, 24
        $region36: #{tpu_custom_call.1} parent=31 // pred_fallthru
          _
      $region32: #{tpu_custom_call.1} parent=5 // pred_fallthru
        _
      %p226 = scmp.le.s32.totalorder 1, %s18
      %p227 = scmp.lt.s32.totalorder %s18, 3
      %p228 = pnand %p226, %p227
      %p229 = pneg %p228
      // Predicated region
      $region37: #{tpu_custom_call.1} parent=5 // pred_check
        _
      $region38: #{tpu_custom_call.1} parent=5 // pred_check_branch
        %231 = sbr.rel (%p228) target = $region40
      $region39: #{tpu_custom_call.1} parent=5 // pred_region
        %s232 = ssub.s32 %s18, 1
        %s233 = sand.u32 %s31, 1
        %s234 = scalar_lea.sflag [#allocation4], %s233
        %s235 = sand.u32 %s31, 1
        %s236 = smul.addr %s235, 48
        %s237 = scalar_lea.vmem [#allocation3], %s236
        // Predicated region
        $region41: #{tpu_custom_call.1} parent=39 // pred_check
          %p238 = pneg %p44
        $region42: #{tpu_custom_call.1} parent=39 // pred_check_branch
          %240 = sbr.rel (%p238) target = $region44
        $region43: #{tpu_custom_call.1} parent=39 // pred_region
          %241 = dma.done %s234, 768
        $region44: #{tpu_custom_call.1} parent=39 // pred_fallthru
          _
        // Predicated region
        $region45: #{tpu_custom_call.1} parent=39 // pred_check
          %p242 = pneg %p65
        $region46: #{tpu_custom_call.1} parent=39 // pred_check_branch
          %244 = sbr.rel (%p242) target = $region48
        $region47: #{tpu_custom_call.1} parent=39 // pred_region
          %245 = dma.done [#allocation7], 2304
        $region48: #{tpu_custom_call.1} parent=39 // pred_fallthru
          _
        // Predicated region
        $region49: #{tpu_custom_call.1} parent=39 // pred_check
          %p246 = pneg %p86
        $region50: #{tpu_custom_call.1} parent=39 // pred_check_branch
          %248 = sbr.rel (%p246) target = $region52
        $region51: #{tpu_custom_call.1} parent=39 // pred_region
          %249 = dma.done [#allocation7], 2304
        $region52: #{tpu_custom_call.1} parent=39 // pred_fallthru
          _
        %s250 = sand.u32 %s31, 1
        %s251 = scalar_lea.sflag [#allocation4], %s250
        %s252 = sand.u32 %s31, 1
        %s253 = smul.addr %s252, 48
        %s254 = scalar_lea.vmem [#allocation3], %s253
        %p255 = pneg %p44
        %p256 = pneg %p41
        %p257 = pneg %p65
        %p258 = pneg %p62
        %p259 = pneg %p86
        %p260 = pneg %p83
        %p261 = pneg %p107
        %p262 = pneg %p104
        %p263 = pneg %p128
        %p264 = pneg %p125
        %p265 = pneg %p154
        %p266 = pneg %p151
        %s267 = sand.u32 %s141, 1
        %s268 = scalar_lea.sflag [#allocation5], %s267
        %s269 = sand.u32 %s141, 1
        %s270 = smul.addr %s269, 48
        %s271 = scalar_lea.vmem [#allocation9], %s270
        %v272 = vld [vmem:[%s3] sm:$0xff]
        %v273 = vld [vmem:[%s3 + $0x8] sm:$0xff]
        %v274 = vld [vmem:[%s4] sm:$0xff]
        %v275 = vld [vmem:[%s4 + $0x8] sm:$0xff]
        %v276 = vlaneseq
        %v277 = vand.u32 %v276, 127
        %v278 = vadd.s32 %v277, 128
        %v279 = vadd.s32 %v277, 256
        %vm280 = vcmp.lt.s32.totalorder %v277, 0
        %v281 = vsub.s32 0, %v277
        %v282 = vsel %vm280, %v281, %v277
        %v283 = vmul.u32.u64.compose %v282, 3817748708
        %v284 = vextract.low.u32 %v283
        %v285 = vextract.high.u32 %v283
        %v286 = vshrl.u32 %v285, 4
        %v287 = vmul.u32 %v286, 18
        %v288 = vsub.s32 %v282, %v287
        %v289 = vsub.s32 0, %v288
        %v290 = vsel %vm280, %v289, %v288
        %vm291 = vcmp.lt.s32.totalorder %v278, 0
        %v292 = vsub.s32 0, %v278
        %v293 = vsel %vm291, %v292, %v278
        %v294 = vmul.u32.u64.compose %v293, 3817748708
        %v295 = vextract.low.u32 %v294
        %v296 = vextract.high.u32 %v294
        %v297 = vshrl.u32 %v296, 4
        %v298 = vmul.u32 %v297, 18
        %v299 = vsub.s32 %v293, %v298
        %v300 = vsub.s32 0, %v299
        %v301 = vsel %vm291, %v300, %v299
        %vm302 = vcmp.lt.s32.totalorder %v279, 0
        %v303 = vsub.s32 0, %v279
        %v304 = vsel %vm302, %v303, %v279
        %v305 = vmul.u32.u64.compose %v304, 3817748708
        %v306 = vextract.low.u32 %v305
        %v307 = vextract.high.u32 %v305
        %v308 = vshrl.u32 %v307, 4
        %v309 = vmul.u32 %v308, 18
        %v310 = vsub.s32 %v304, %v309
        %v311 = vsub.s32 0, %v310
        %v312 = vsel %vm302, %v311, %v310
        %vm313 = vcmp.ne.s32.totalorder %v290, 0
        %vm314 = vcmp.ne.s32.totalorder %v301, 0
        %vm315 = vcmp.ne.s32.totalorder %v312, 0
        %vm316 = vcmp.lt.s32.totalorder %v290, 0
        %vm317 = vcmp.lt.s32.totalorder %v301, 0
        %vm318 = vcmp.lt.s32.totalorder %v312, 0
        %vm319 = vmand %vm316, %vm313
        %vm320 = vmand %vm317, %vm314
        %vm321 = vmand %vm318, %vm315
        %v322 = vadd.s32 %v290, 18
        %v323 = vadd.s32 %v301, 18
        %v324 = vadd.s32 %v312, 18
        %v325 = vsel %vm319, %v322, %v290
        %v326 = vsel %vm320, %v323, %v301
        %v327 = vsel %vm321, %v324, %v312
        %vm328 = vcmp.lt.s32.totalorder %v325, 16
        %vm329 = vcmp.lt.s32.totalorder %v326, 16
        %vm330 = vcmp.lt.s32.totalorder %v327, 16
        %v331 = vsel %vm328, 1, 0
        %v332 = vsel %vm329, 1, 0
        %v333 = vsel %vm330, 1, 0
        %v334 = vcvt.s32.f32 %v331
        %v335 = vcvt.s32.f32 %v332
        %v336 = vcvt.s32.f32 %v333
        %v337 = vld [vmem:[#allocation6] sm:$0xff]
        %v338 = vld [vmem:[#allocation6 + $0x8] sm:$0xff]
        %v339 = vld [vmem:[%s237] sm:$0xff]
        %v340 = vld [vmem:[%s237 + $0x8] sm:$0xff]
        %v341 = vld [vmem:[%s237 + $0x10] sm:$0xff]
        %v342 = vld [vmem:[%s237 + $0x18] sm:$0xff]
        %v343 = vld [vmem:[%s237 + $0x20] sm:$0xff]
        %v344 = vld [vmem:[%s237 + $0x28] sm:$0xff]
        %s345 = scalar_lea.vmem [#allocation6], 16
        %v346 = vld [vmem:[%s345] sm:$0xff]
        %v347 = vld [vmem:[%s345 + $0x8] sm:$0xff]
        %354 = vrot.lane.b32.xlu0 %v339, 127
        %v355 = vpop.permute.xlu0 %354
        %356 = vrot.lane.b32.xlu0 %v340, 127
        %v357 = vpop.permute.xlu0 %356
        %358 = vrot.lane.b32.xlu0 %v341, 127
        %v359 = vpop.permute.xlu0 %358
        %360 = vrot.lane.b32.xlu0 %v342, 127
        %v361 = vpop.permute.xlu0 %360
        %362 = vrot.lane.b32.xlu0 %v343, 127
        %v363 = vpop.permute.xlu0 %362
        %364 = vrot.lane.b32.xlu0 %v344, 127
        %v365 = vpop.permute.xlu0 %364
        %vm366 = vcmask 1039360
        %v367 = vsel %vm366, %v355, %v357
        %v368 = vsel %vm366, %v357, %v359
        %v369 = vsel %vm366, %v361, %v363
        %v370 = vsel %vm366, %v363, %v365
        %vm377 = vcmask 130048
        %v379 = vsel %vm377, %v346, 0
        %v382 = vsel %vm377, %v347, 0
        %384 = vmatprep.subr.mxu0 %v368
        %385 = vmatpush1.msra.mxu0 %v367
        %386 = vmatprep.subr.mxu0 %v370
        %387 = vmatpush1.msra.mxu0 %v369
        %388 = vmatprep.subr.mxu0 0.0
        %389 = vmatpush1.msra.mxu0 0.0
        %390 = vmatprep.subr.mxu0 0.0
        %391 = vmatpush1.msra.mxu0 0.0
        %392 = vmatprep.subr.mxu0 0.0
        %393 = vmatpush1.msra.mxu0 0.0
        %394 = vmatprep.subr.mxu0 0.0
        %395 = vmatpush1.msra.mxu0 0.0
        %396 = vmatprep.subr.mxu0 0.0
        %397 = vmatpush1.msra.mxu0 0.0
        %398 = vmatprep.subr.mxu0 0.0
        %399 = vmatpush1.msra.mxu0 0.0
        %400 = vmatprep.subr.mxu0 0.0
        %401 = vmatpush1.msra.mxu0 0.0
        %402 = vmatprep.subr.mxu0 0.0
        %403 = vmatpush1.msra.mxu0 0.0
        %404 = vmatprep.subr.mxu0 0.0
        %405 = vmatpush1.msra.mxu0 0.0
        %406 = vmatprep.subr.mxu0 0.0
        %407 = vmatpush1.msra.mxu0 0.0
        %408 = vmatprep.subr.mxu0 0.0
        %409 = vmatpush1.msra.mxu0 0.0
        %410 = vmatprep.subr.mxu0 0.0
        %411 = vmatpush1.msra.mxu0 0.0
        %412 = vmatprep.subr.mxu0 0.0
        %413 = vmatpush1.msra.mxu0 0.0
        %414 = vmatprep.subr.mxu0 0.0
        %415 = vmatpush1.msra.mxu0 0.0
        %416 = vmatprep.subr.mxu0 0.0
        %417 = vmatpush1.msra.mxu0 0.0
        %418 = vmatprep.subr.mxu0 0.0
        %419 = vmatpush1.msra.mxu0 0.0
        %420 = vmatprep.subr.mxu0 0.0
        %421 = vmatpush1.msra.mxu0 0.0
        %422 = vmatprep.subr.mxu0 0.0
        %423 = vmatpush1.msra.mxu0 0.0
        %424 = vmatprep.subr.mxu0 0.0
        %425 = vmatpush1.msra.mxu0 0.0
        %426 = vmatprep.subr.mxu0 0.0
        %427 = vmatpush1.msra.mxu0 0.0
        %428 = vmatprep.subr.mxu0 0.0
        %429 = vmatpush1.msra.mxu0 0.0
        %430 = vmatprep.subr.mxu0 0.0
        %431 = vmatpush1.msra.mxu0 0.0
        %432 = vmatprep.subr.mxu0 0.0
        %433 = vmatpush1.msra.mxu0 0.0
        %434 = vmatprep.subr.mxu0 0.0
        %435 = vmatpush1.msra.mxu0 0.0
        %436 = vmatprep.subr.mxu0 0.0
        %437 = vmatpush1.msra.mxu0 0.0
        %438 = vmatprep.subr.mxu0 0.0
        %439 = vmatpush1.msra.mxu0 0.0
        %440 = vmatprep.subr.mxu0 0.0
        %441 = vmatpush1.msra.mxu0 0.0
        %442 = vmatprep.subr.mxu0 0.0
        %443 = vmatpush1.msra.mxu0 0.0
        %444 = vmatprep.subr.mxu0 0.0
        %445 = vmatpush1.msra.mxu0 0.0
        %446 = vmatprep.subr.mxu0 0.0
        %447 = vmatpush1.msra.mxu0 0.0
        %448 = vmatprep.mubr.f32.mxu0 0.0
        %449 = vmatmul.mubr.f32.gmra.mrb[0].mxu0 %v379
        %v450 = vpop.f32.mrb[0].mxu0
        %v451 = vadd.f32 0.0, %v450
        %v452 = vpop.f32.mrb[0].mxu0
        %v453 = vadd.f32 0.0, %v452
        %454 = vmatprep.mubr.f32.mxu0 0.0
        %455 = vmatmul.mubr.f32.gmra.mrb[0].mxu0 %v382
        %v456 = vpop.f32.mrb[0].mxu0
        %v457 = vadd.f32 0.0, %v456
        %v458 = vpop.f32.mrb[0].mxu0
        %v459 = vadd.f32 0.0, %v458
        %460 = vdwg.mxu0
        %461 = vmatprep.subr.mxu0 0.0
        %462 = vmatpush1.msra.mxu0 %v359
        %463 = vmatprep.subr.mxu0 0.0
        %464 = vmatpush1.msra.mxu0 %v365
        %465 = vmatprep.subr.mxu0 0.0
        %466 = vmatpush1.msra.mxu0 0.0
        %467 = vmatprep.subr.mxu0 0.0
        %468 = vmatpush1.msra.mxu0 0.0
        %469 = vmatprep.subr.mxu0 0.0
        %470 = vmatpush1.msra.mxu0 0.0
        %471 = vmatprep.subr.mxu0 0.0
        %472 = vmatpush1.msra.mxu0 0.0
        %473 = vmatprep.subr.mxu0 0.0
        %474 = vmatpush1.msra.mxu0 0.0
        %475 = vmatprep.subr.mxu0 0.0
        %476 = vmatpush1.msra.mxu0 0.0
        %477 = vmatprep.subr.mxu0 0.0
        %478 = vmatpush1.msra.mxu0 0.0
        %479 = vmatprep.subr.mxu0 0.0
        %480 = vmatpush1.msra.mxu0 0.0
        %481 = vmatprep.subr.mxu0 0.0
        %482 = vmatpush1.msra.mxu0 0.0
        %483 = vmatprep.subr.mxu0 0.0
        %484 = vmatpush1.msra.mxu0 0.0
        %485 = vmatprep.subr.mxu0 0.0
        %486 = vmatpush1.msra.mxu0 0.0
        %487 = vmatprep.subr.mxu0 0.0
        %488 = vmatpush1.msra.mxu0 0.0
        %489 = vmatprep.subr.mxu0 0.0
        %490 = vmatpush1.msra.mxu0 0.0
        %491 = vmatprep.subr.mxu0 0.0
        %492 = vmatpush1.msra.mxu0 0.0
        %493 = vmatprep.subr.mxu0 0.0
        %494 = vmatpush1.msra.mxu0 0.0
        %495 = vmatprep.subr.mxu0 0.0
        %496 = vmatpush1.msra.mxu0 0.0
        %497 = vmatprep.subr.mxu0 0.0
        %498 = vmatpush1.msra.mxu0 0.0
        %499 = vmatprep.subr.mxu0 0.0
        %500 = vmatpush1.msra.mxu0 0.0
        %501 = vmatprep.subr.mxu0 0.0
        %502 = vmatpush1.msra.mxu0 0.0
        %503 = vmatprep.subr.mxu0 0.0
        %504 = vmatpush1.msra.mxu0 0.0
        %505 = vmatprep.subr.mxu0 0.0
        %506 = vmatpush1.msra.mxu0 0.0
        %507 = vmatprep.subr.mxu0 0.0
        %508 = vmatpush1.msra.mxu0 0.0
        %509 = vmatprep.subr.mxu0 0.0
        %510 = vmatpush1.msra.mxu0 0.0
        %511 = vmatprep.subr.mxu0 0.0
        %512 = vmatpush1.msra.mxu0 0.0
        %513 = vmatprep.subr.mxu0 0.0
        %514 = vmatpush1.msra.mxu0 0.0
        %515 = vmatprep.subr.mxu0 0.0
        %516 = vmatpush1.msra.mxu0 0.0
        %517 = vmatprep.subr.mxu0 0.0
        %518 = vmatpush1.msra.mxu0 0.0
        %519 = vmatprep.subr.mxu0 0.0
        %520 = vmatpush1.msra.mxu0 0.0
        %521 = vmatprep.subr.mxu0 0.0
        %522 = vmatpush1.msra.mxu0 0.0
        %523 = vmatprep.subr.mxu0 0.0
        %524 = vmatpush1.msra.mxu0 0.0
        %525 = vmatprep.mubr.f32.mxu0 0.0
        %526 = vmatmul.mubr.f32.gmra.mrb[0].mxu0 %v379
        %v527 = vpop.f32.mrb[0].mxu0
        %v528 = vadd.f32 0.0, %v527
        %v529 = vpop.f32.mrb[0].mxu0
        %530 = vmatprep.mubr.f32.mxu0 0.0
        %531 = vmatmul.mubr.f32.gmra.mrb[0].mxu0 %v382
        %v532 = vpop.f32.mrb[0].mxu0
        %v533 = vadd.f32 0.0, %v532
        %v534 = vpop.f32.mrb[0].mxu0
        %535 = vdwg.mxu0
        %v537 = vsel %vm377, %v337, 0
        %v540 = vsel %vm377, %v338, 0
        %542 = vmatprep.subr.mxu0 %v340
        %543 = vmatpush1.msra.mxu0 %v339
        %544 = vmatprep.subr.mxu0 %v343
        %545 = vmatpush1.msra.mxu0 %v342
        %546 = vmatprep.subr.mxu0 0.0
        %547 = vmatpush1.msra.mxu0 0.0
        %548 = vmatprep.subr.mxu0 0.0
        %549 = vmatpush1.msra.mxu0 0.0
        %550 = vmatprep.subr.mxu0 0.0
        %551 = vmatpush1.msra.mxu0 0.0
        %552 = vmatprep.subr.mxu0 0.0
        %553 = vmatpush1.msra.mxu0 0.0
        %554 = vmatprep.subr.mxu0 0.0
        %555 = vmatpush1.msra.mxu0 0.0
        %556 = vmatprep.subr.mxu0 0.0
        %557 = vmatpush1.msra.mxu0 0.0
        %558 = vmatprep.subr.mxu0 0.0
        %559 = vmatpush1.msra.mxu0 0.0
        %560 = vmatprep.subr.mxu0 0.0
        %561 = vmatpush1.msra.mxu0 0.0
        %562 = vmatprep.subr.mxu0 0.0
        %563 = vmatpush1.msra.mxu0 0.0
        %564 = vmatprep.subr.mxu0 0.0
        %565 = vmatpush1.msra.mxu0 0.0
        %566 = vmatprep.subr.mxu0 0.0
        %567 = vmatpush1.msra.mxu0 0.0
        %568 = vmatprep.subr.mxu0 0.0
        %569 = vmatpush1.msra.mxu0 0.0
        %570 = vmatprep.subr.mxu0 0.0
        %571 = vmatpush1.msra.mxu0 0.0
        %572 = vmatprep.subr.mxu0 0.0
        %573 = vmatpush1.msra.mxu0 0.0
        %574 = vmatprep.subr.mxu0 0.0
        %575 = vmatpush1.msra.mxu0 0.0
        %576 = vmatprep.subr.mxu0 0.0
        %577 = vmatpush1.msra.mxu0 0.0
        %578 = vmatprep.subr.mxu0 0.0
        %579 = vmatpush1.msra.mxu0 0.0
        %580 = vmatprep.subr.mxu0 0.0
        %581 = vmatpush1.msra.mxu0 0.0
        %582 = vmatprep.subr.mxu0 0.0
        %583 = vmatpush1.msra.mxu0 0.0
        %584 = vmatprep.subr.mxu0 0.0
        %585 = vmatpush1.msra.mxu0 0.0
        %586 = vmatprep.subr.mxu0 0.0
        %587 = vmatpush1.msra.mxu0 0.0
        %588 = vmatprep.subr.mxu0 0.0
        %589 = vmatpush1.msra.mxu0 0.0
        %590 = vmatprep.subr.mxu0 0.0
        %591 = vmatpush1.msra.mxu0 0.0
        %592 = vmatprep.subr.mxu0 0.0
        %593 = vmatpush1.msra.mxu0 0.0
        %594 = vmatprep.subr.mxu0 0.0
        %595 = vmatpush1.msra.mxu0 0.0
        %596 = vmatprep.subr.mxu0 0.0
        %597 = vmatpush1.msra.mxu0 0.0
        %598 = vmatprep.subr.mxu0 0.0
        %599 = vmatpush1.msra.mxu0 0.0
        %600 = vmatprep.subr.mxu0 0.0
        %601 = vmatpush1.msra.mxu0 0.0
        %602 = vmatprep.subr.mxu0 0.0
        %603 = vmatpush1.msra.mxu0 0.0
        %604 = vmatprep.subr.mxu0 0.0
        %605 = vmatpush1.msra.mxu0 0.0
        %606 = vmatprep.mubr.f32.mxu0 0.0
        %607 = vmatmul.mubr.f32.gmra.mrb[0].mxu0 %v537
        %v608 = vpop.f32.mrb[0].mxu0
        %v609 = vadd.f32 %v451, %v608
        %v610 = vpop.f32.mrb[0].mxu0
        %v611 = vadd.f32 %v453, %v610
        %612 = vmatprep.mubr.f32.mxu0 0.0
        %613 = vmatmul.mubr.f32.gmra.mrb[0].mxu0 %v540
        %v614 = vpop.f32.mrb[0].mxu0
        %v615 = vadd.f32 %v457, %v614
        %v616 = vpop.f32.mrb[0].mxu0
        %v617 = vadd.f32 %v459, %v616
        %618 = vdwg.mxu0
        %619 = vmatprep.subr.mxu0 0.0
        %620 = vmatpush1.msra.mxu0 %v341
        %621 = vmatprep.subr.mxu0 0.0
        %622 = vmatpush1.msra.mxu0 %v344
        %623 = vmatprep.subr.mxu0 0.0
        %624 = vmatpush1.msra.mxu0 0.0
        %625 = vmatprep.subr.mxu0 0.0
        %626 = vmatpush1.msra.mxu0 0.0
        %627 = vmatprep.subr.mxu0 0.0
        %628 = vmatpush1.msra.mxu0 0.0
        %629 = vmatprep.subr.mxu0 0.0
        %630 = vmatpush1.msra.mxu0 0.0
        %631 = vmatprep.subr.mxu0 0.0
        %632 = vmatpush1.msra.mxu0 0.0
        %633 = vmatprep.subr.mxu0 0.0
        %634 = vmatpush1.msra.mxu0 0.0
        %635 = vmatprep.subr.mxu0 0.0
        %636 = vmatpush1.msra.mxu0 0.0
        %637 = vmatprep.subr.mxu0 0.0
        %638 = vmatpush1.msra.mxu0 0.0
        %639 = vmatprep.subr.mxu0 0.0
        %640 = vmatpush1.msra.mxu0 0.0
        %641 = vmatprep.subr.mxu0 0.0
        %642 = vmatpush1.msra.mxu0 0.0
        %643 = vmatprep.subr.mxu0 0.0
        %644 = vmatpush1.msra.mxu0 0.0
        %645 = vmatprep.subr.mxu0 0.0
        %646 = vmatpush1.msra.mxu0 0.0
        %647 = vmatprep.subr.mxu0 0.0
        %648 = vmatpush1.msra.mxu0 0.0
        %649 = vmatprep.subr.mxu0 0.0
        %650 = vmatpush1.msra.mxu0 0.0
        %651 = vmatprep.subr.mxu0 0.0
        %652 = vmatpush1.msra.mxu0 0.0
        %653 = vmatprep.subr.mxu0 0.0
        %654 = vmatpush1.msra.mxu0 0.0
        %655 = vmatprep.subr.mxu0 0.0
        %656 = vmatpush1.msra.mxu0 0.0
        %657 = vmatprep.subr.mxu0 0.0
        %658 = vmatpush1.msra.mxu0 0.0
        %659 = vmatprep.subr.mxu0 0.0
        %660 = vmatpush1.msra.mxu0 0.0
        %661 = vmatprep.subr.mxu0 0.0
        %662 = vmatpush1.msra.mxu0 0.0
        %663 = vmatprep.subr.mxu0 0.0
        %664 = vmatpush1.msra.mxu0 0.0
        %665 = vmatprep.subr.mxu0 0.0
        %666 = vmatpush1.msra.mxu0 0.0
        %667 = vmatprep.subr.mxu0 0.0
        %668 = vmatpush1.msra.mxu0 0.0
        %669 = vmatprep.subr.mxu0 0.0
        %670 = vmatpush1.msra.mxu0 0.0
        %671 = vmatprep.subr.mxu0 0.0
        %672 = vmatpush1.msra.mxu0 0.0
        %673 = vmatprep.subr.mxu0 0.0
        %674 = vmatpush1.msra.mxu0 0.0
        %675 = vmatprep.subr.mxu0 0.0
        %676 = vmatpush1.msra.mxu0 0.0
        %677 = vmatprep.subr.mxu0 0.0
        %678 = vmatpush1.msra.mxu0 0.0
        %679 = vmatprep.subr.mxu0 0.0
        %680 = vmatpush1.msra.mxu0 0.0
        %681 = vmatprep.subr.mxu0 0.0
        %682 = vmatpush1.msra.mxu0 0.0
        %683 = vmatprep.mubr.f32.mxu0 0.0
        %684 = vmatmul.mubr.f32.gmra.mrb[0].mxu0 %v537
        %v685 = vpop.f32.mrb[0].mxu0
        %v686 = vadd.f32 %v528, %v685
        %v687 = vpop.f32.mrb[0].mxu0
        %688 = vmatprep.mubr.f32.mxu0 0.0
        %689 = vmatmul.mubr.f32.gmra.mrb[0].mxu0 %v540
        %v690 = vpop.f32.mrb[0].mxu0
        %v691 = vadd.f32 %v533, %v690
        %v692 = vpop.f32.mrb[0].mxu0
        %693 = vdwg.mxu0
        %s694 = scalar_lea.vmem [#allocation6], 32
        %v695 = vld [vmem:[%s694] sm:$0xff]
        %v696 = vld [vmem:[%s694 + $0x8] sm:$0xff]
        %697 = vrot.lane.b32.xlu0 %v339, 126
        %v698 = vpop.permute.xlu0 %697
        %699 = vrot.lane.b32.xlu0 %v340, 126
        %v700 = vpop.permute.xlu0 %699
        %701 = vrot.lane.b32.xlu0 %v341, 126
        %v702 = vpop.permute.xlu0 %701
        %703 = vrot.lane.b32.xlu0 %v342, 126
        %v704 = vpop.permute.xlu0 %703
        %705 = vrot.lane.b32.xlu0 %v343, 126
        %v706 = vpop.permute.xlu0 %705
        %707 = vrot.lane.b32.xlu0 %v344, 126
        %v708 = vpop.permute.xlu0 %707
        %vm709 = vcmask 1031168
        %v710 = vsel %vm709, %v698, %v700
        %v711 = vsel %vm709, %v700, %v702
        %v712 = vsel %vm709, %v704, %v706
        %v713 = vsel %vm709, %v706, %v708
        %v721 = vsel %vm377, %v695, 0
        %v724 = vsel %vm377, %v696, 0
        %726 = vmatprep.subr.mxu0 %v711
        %727 = vmatpush1.msra.mxu0 %v710
        %728 = vmatprep.subr.mxu0 %v713
        %729 = vmatpush1.msra.mxu0 %v712
        %730 = vmatprep.subr.mxu0 0.0
        %731 = vmatpush1.msra.mxu0 0.0
        %732 = vmatprep.subr.mxu0 0.0
        %733 = vmatpush1.msra.mxu0 0.0
        %734 = vmatprep.subr.mxu0 0.0
        %735 = vmatpush1.msra.mxu0 0.0
        %736 = vmatprep.subr.mxu0 0.0
        %737 = vmatpush1.msra.mxu0 0.0
        %738 = vmatprep.subr.mxu0 0.0
        %739 = vmatpush1.msra.mxu0 0.0
        %740 = vmatprep.subr.mxu0 0.0
        %741 = vmatpush1.msra.mxu0 0.0
        %742 = vmatprep.subr.mxu0 0.0
        %743 = vmatpush1.msra.mxu0 0.0
        %744 = vmatprep.subr.mxu0 0.0
        %745 = vmatpush1.msra.mxu0 0.0
        %746 = vmatprep.subr.mxu0 0.0
        %747 = vmatpush1.msra.mxu0 0.0
        %748 = vmatprep.subr.mxu0 0.0
        %749 = vmatpush1.msra.mxu0 0.0
        %750 = vmatprep.subr.mxu0 0.0
        %751 = vmatpush1.msra.mxu0 0.0
        %752 = vmatprep.subr.mxu0 0.0
        %753 = vmatpush1.msra.mxu0 0.0
        %754 = vmatprep.subr.mxu0 0.0
        %755 = vmatpush1.msra.mxu0 0.0
        %756 = vmatprep.subr.mxu0 0.0
        %757 = vmatpush1.msra.mxu0 0.0
        %758 = vmatprep.subr.mxu0 0.0
        %759 = vmatpush1.msra.mxu0 0.0
        %760 = vmatprep.subr.mxu0 0.0
        %761 = vmatpush1.msra.mxu0 0.0
        %762 = vmatprep.subr.mxu0 0.0
        %763 = vmatpush1.msra.mxu0 0.0
        %764 = vmatprep.subr.mxu0 0.0
        %765 = vmatpush1.msra.mxu0 0.0
        %766 = vmatprep.subr.mxu0 0.0
        %767 = vmatpush1.msra.mxu0 0.0
        %768 = vmatprep.subr.mxu0 0.0
        %769 = vmatpush1.msra.mxu0 0.0
        %770 = vmatprep.subr.mxu0 0.0
        %771 = vmatpush1.msra.mxu0 0.0
        %772 = vmatprep.subr.mxu0 0.0
        %773 = vmatpush1.msra.mxu0 0.0
        %774 = vmatprep.subr.mxu0 0.0
        %775 = vmatpush1.msra.mxu0 0.0
        %776 = vmatprep.subr.mxu0 0.0
        %777 = vmatpush1.msra.mxu0 0.0
        %778 = vmatprep.subr.mxu0 0.0
        %779 = vmatpush1.msra.mxu0 0.0
        %780 = vmatprep.subr.mxu0 0.0
        %781 = vmatpush1.msra.mxu0 0.0
        %782 = vmatprep.subr.mxu0 0.0
        %783 = vmatpush1.msra.mxu0 0.0
        %784 = vmatprep.subr.mxu0 0.0
        %785 = vmatpush1.msra.mxu0 0.0
        %786 = vmatprep.subr.mxu0 0.0
        %787 = vmatpush1.msra.mxu0 0.0
        %788 = vmatprep.subr.mxu0 0.0
        %789 = vmatpush1.msra.mxu0 0.0
        %790 = vmatprep.mubr.f32.mxu0 0.0
        %791 = vmatmul.mubr.f32.gmra.mrb[0].mxu0 %v721
        %v792 = vpop.f32.mrb[0].mxu0
        %v793 = vadd.f32 0.0, %v792
        %v794 = vpop.f32.mrb[0].mxu0
        %v795 = vadd.f32 0.0, %v794
        %796 = vmatprep.mubr.f32.mxu0 0.0
        %797 = vmatmul.mubr.f32.gmra.mrb[0].mxu0 %v724
        %v798 = vpop.f32.mrb[0].mxu0
        %v799 = vadd.f32 0.0, %v798
        %v800 = vpop.f32.mrb[0].mxu0
        %v801 = vadd.f32 0.0, %v800
        %802 = vdwg.mxu0
        %803 = vmatprep.subr.mxu0 0.0
        %804 = vmatpush1.msra.mxu0 %v702
        %805 = vmatprep.subr.mxu0 0.0
        %806 = vmatpush1.msra.mxu0 %v708
        %807 = vmatprep.subr.mxu0 0.0
        %808 = vmatpush1.msra.mxu0 0.0
        %809 = vmatprep.subr.mxu0 0.0
        %810 = vmatpush1.msra.mxu0 0.0
        %811 = vmatprep.subr.mxu0 0.0
        %812 = vmatpush1.msra.mxu0 0.0
        %813 = vmatprep.subr.mxu0 0.0
        %814 = vmatpush1.msra.mxu0 0.0
        %815 = vmatprep.subr.mxu0 0.0
        %816 = vmatpush1.msra.mxu0 0.0
        %817 = vmatprep.subr.mxu0 0.0
        %818 = vmatpush1.msra.mxu0 0.0
        %819 = vmatprep.subr.mxu0 0.0
        %820 = vmatpush1.msra.mxu0 0.0
        %821 = vmatprep.subr.mxu0 0.0
        %822 = vmatpush1.msra.mxu0 0.0
        %823 = vmatprep.subr.mxu0 0.0
        %824 = vmatpush1.msra.mxu0 0.0
        %825 = vmatprep.subr.mxu0 0.0
        %826 = vmatpush1.msra.mxu0 0.0
        %827 = vmatprep.subr.mxu0 0.0
        %828 = vmatpush1.msra.mxu0 0.0
        %829 = vmatprep.subr.mxu0 0.0
        %830 = vmatpush1.msra.mxu0 0.0
        %831 = vmatprep.subr.mxu0 0.0
        %832 = vmatpush1.msra.mxu0 0.0
        %833 = vmatprep.subr.mxu0 0.0
        %834 = vmatpush1.msra.mxu0 0.0
        %835 = vmatprep.subr.mxu0 0.0
        %836 = vmatpush1.msra.mxu0 0.0
        %837 = vmatprep.subr.mxu0 0.0
        %838 = vmatpush1.msra.mxu0 0.0
        %839 = vmatprep.subr.mxu0 0.0
        %840 = vmatpush1.msra.mxu0 0.0
        %841 = vmatprep.subr.mxu0 0.0
        %842 = vmatpush1.msra.mxu0 0.0
        %843 = vmatprep.subr.mxu0 0.0
        %844 = vmatpush1.msra.mxu0 0.0
        %845 = vmatprep.subr.mxu0 0.0
        %846 = vmatpush1.msra.mxu0 0.0
        %847 = vmatprep.subr.mxu0 0.0
        %848 = vmatpush1.msra.mxu0 0.0
        %849 = vmatprep.subr.mxu0 0.0
        %850 = vmatpush1.msra.mxu0 0.0
        %851 = vmatprep.subr.mxu0 0.0
        %852 = vmatpush1.msra.mxu0 0.0
        %853 = vmatprep.subr.mxu0 0.0
        %854 = vmatpush1.msra.mxu0 0.0
        %855 = vmatprep.subr.mxu0 0.0
        %856 = vmatpush1.msra.mxu0 0.0
        %857 = vmatprep.subr.mxu0 0.0
        %858 = vmatpush1.msra.mxu0 0.0
        %859 = vmatprep.subr.mxu0 0.0
        %860 = vmatpush1.msra.mxu0 0.0
        %861 = vmatprep.subr.mxu0 0.0
        %862 = vmatpush1.msra.mxu0 0.0
        %863 = vmatprep.subr.mxu0 0.0
        %864 = vmatpush1.msra.mxu0 0.0
        %865 = vmatprep.subr.mxu0 0.0
        %866 = vmatpush1.msra.mxu0 0.0
        %867 = vmatprep.mubr.f32.mxu0 0.0
        %868 = vmatmul.mubr.f32.gmra.mrb[0].mxu0 %v721
        %v869 = vpop.f32.mrb[0].mxu0
        %v870 = vadd.f32 0.0, %v869
        %v871 = vpop.f32.mrb[0].mxu0
        %872 = vmatprep.mubr.f32.mxu0 0.0
        %873 = vmatmul.mubr.f32.gmra.mrb[0].mxu0 %v724
        %v874 = vpop.f32.mrb[0].mxu0
        %v875 = vadd.f32 0.0, %v874
        %v876 = vpop.f32.mrb[0].mxu0
        %877 = vdwg.mxu0
        %v878 = vadd.f32 %v609, %v793
        %v879 = vadd.f32 %v611, %v795
        %v880 = vadd.f32 %v686, %v870
        %v881 = vadd.f32 %v615, %v799
        %v882 = vadd.f32 %v617, %v801
        %v883 = vadd.f32 %v691, %v875
        %s884 = scalar_lea.vmem [#allocation6], 48
        %v885 = vld [vmem:[%s884] sm:$0xff]
        %v886 = vld [vmem:[%s884 + $0x8] sm:$0xff]
        %887 = vrot.lane.b32.xlu0 %v339, 110
        %v888 = vpop.permute.xlu0 %887
        %889 = vrot.lane.b32.xlu0 %v340, 110
        %v890 = vpop.permute.xlu0 %889
        %891 = vrot.lane.b32.xlu0 %v341, 110
        %v892 = vpop.permute.xlu0 %891
        %893 = vrot.lane.b32.xlu0 %v342, 110
        %v894 = vpop.permute.xlu0 %893
        %895 = vrot.lane.b32.xlu0 %v343, 110
        %v896 = vpop.permute.xlu0 %895
        %897 = vrot.lane.b32.xlu0 %v344, 110
        %v898 = vpop.permute.xlu0 %897
        %vm899 = vcmask 900096
        %v900 = vsel %vm899, %v888, %v890
        %v901 = vsel %vm899, %v890, %v892
        %v902 = vsel %vm899, %v894, %v896
        %v903 = vsel %vm899, %v896, %v898
        %v911 = vsel %vm377, %v885, 0
        %v914 = vsel %vm377, %v886, 0
        %916 = vmatprep.subr.mxu0 %v901
        %917 = vmatpush1.msra.mxu0 %v900
        %918 = vmatprep.subr.mxu0 %v903
        %919 = vmatpush1.msra.mxu0 %v902
        %920 = vmatprep.subr.mxu0 0.0
        %921 = vmatpush1.msra.mxu0 0.0
        %922 = vmatprep.subr.mxu0 0.0
        %923 = vmatpush1.msra.mxu0 0.0
        %924 = vmatprep.subr.mxu0 0.0
        %925 = vmatpush1.msra.mxu0 0.0
        %926 = vmatprep.subr.mxu0 0.0
        %927 = vmatpush1.msra.mxu0 0.0
        %928 = vmatprep.subr.mxu0 0.0
        %929 = vmatpush1.msra.mxu0 0.0
        %930 = vmatprep.subr.mxu0 0.0
        %931 = vmatpush1.msra.mxu0 0.0
        %932 = vmatprep.subr.mxu0 0.0
        %933 = vmatpush1.msra.mxu0 0.0
        %934 = vmatprep.subr.mxu0 0.0
        %935 = vmatpush1.msra.mxu0 0.0
        %936 = vmatprep.subr.mxu0 0.0
        %937 = vmatpush1.msra.mxu0 0.0
        %938 = vmatprep.subr.mxu0 0.0
        %939 = vmatpush1.msra.mxu0 0.0
        %940 = vmatprep.subr.mxu0 0.0
        %941 = vmatpush1.msra.mxu0 0.0
        %942 = vmatprep.subr.mxu0 0.0
        %943 = vmatpush1.msra.mxu0 0.0
        %944 = vmatprep.subr.mxu0 0.0
        %945 = vmatpush1.msra.mxu0 0.0
        %946 = vmatprep.subr.mxu0 0.0
        %947 = vmatpush1.msra.mxu0 0.0
        %948 = vmatprep.subr.mxu0 0.0
        %949 = vmatpush1.msra.mxu0 0.0
        %950 = vmatprep.subr.mxu0 0.0
        %951 = vmatpush1.msra.mxu0 0.0
        %952 = vmatprep.subr.mxu0 0.0
        %953 = vmatpush1.msra.mxu0 0.0
        %954 = vmatprep.subr.mxu0 0.0
        %955 = vmatpush1.msra.mxu0 0.0
        %956 = vmatprep.subr.mxu0 0.0
        %957 = vmatpush1.msra.mxu0 0.0
        %958 = vmatprep.subr.mxu0 0.0
        %959 = vmatpush1.msra.mxu0 0.0
        %960 = vmatprep.subr.mxu0 0.0
        %961 = vmatpush1.msra.mxu0 0.0
        %962 = vmatprep.subr.mxu0 0.0
        %963 = vmatpush1.msra.mxu0 0.0
        %964 = vmatprep.subr.mxu0 0.0
        %965 = vmatpush1.msra.mxu0 0.0
        %966 = vmatprep.subr.mxu0 0.0
        %967 = vmatpush1.msra.mxu0 0.0
        %968 = vmatprep.subr.mxu0 0.0
        %969 = vmatpush1.msra.mxu0 0.0
        %970 = vmatprep.subr.mxu0 0.0
        %971 = vmatpush1.msra.mxu0 0.0
        %972 = vmatprep.subr.mxu0 0.0
        %973 = vmatpush1.msra.mxu0 0.0
        %974 = vmatprep.subr.mxu0 0.0
        %975 = vmatpush1.msra.mxu0 0.0
        %976 = vmatprep.subr.mxu0 0.0
        %977 = vmatpush1.msra.mxu0 0.0
        %978 = vmatprep.subr.mxu0 0.0
        %979 = vmatpush1.msra.mxu0 0.0
        %980 = vmatprep.mubr.f32.mxu0 0.0
        %981 = vmatmul.mubr.f32.gmra.mrb[0].mxu0 %v911
        %v982 = vpop.f32.mrb[0].mxu0
        %v983 = vadd.f32 0.0, %v982
        %v984 = vpop.f32.mrb[0].mxu0
        %v985 = vadd.f32 0.0, %v984
        %986 = vmatprep.mubr.f32.mxu0 0.0
        %987 = vmatmul.mubr.f32.gmra.mrb[0].mxu0 %v914
        %v988 = vpop.f32.mrb[0].mxu0
        %v989 = vadd.f32 0.0, %v988
        %v990 = vpop.f32.mrb[0].mxu0
        %v991 = vadd.f32 0.0, %v990
        %992 = vdwg.mxu0
        %993 = vmatprep.subr.mxu0 0.0
        %994 = vmatpush1.msra.mxu0 %v892
        %995 = vmatprep.subr.mxu0 0.0
        %996 = vmatpush1.msra.mxu0 %v898
        %997 = vmatprep.subr.mxu0 0.0
        %998 = vmatpush1.msra.mxu0 0.0
        %999 = vmatprep.subr.mxu0 0.0
        %1000 = vmatpush1.msra.mxu0 0.0
        %1001 = vmatprep.subr.mxu0 0.0
        %1002 = vmatpush1.msra.mxu0 0.0
        %1003 = vmatprep.subr.mxu0 0.0
        %1004 = vmatpush1.msra.mxu0 0.0
        %1005 = vmatprep.subr.mxu0 0.0
        %1006 = vmatpush1.msra.mxu0 0.0
        %1007 = vmatprep.subr.mxu0 0.0
        %1008 = vmatpush1.msra.mxu0 0.0
        %1009 = vmatprep.subr.mxu0 0.0
        %1010 = vmatpush1.msra.mxu0 0.0
        %1011 = vmatprep.subr.mxu0 0.0
        %1012 = vmatpush1.msra.mxu0 0.0
        %1013 = vmatprep.subr.mxu0 0.0
        %1014 = vmatpush1.msra.mxu0 0.0
        %1015 = vmatprep.subr.mxu0 0.0
        %1016 = vmatpush1.msra.mxu0 0.0
        %1017 = vmatprep.subr.mxu0 0.0
        %1018 = vmatpush1.msra.mxu0 0.0
        %1019 = vmatprep.subr.mxu0 0.0
        %1020 = vmatpush1.msra.mxu0 0.0
        %1021 = vmatprep.subr.mxu0 0.0
        %1022 = vmatpush1.msra.mxu0 0.0
        %1023 = vmatprep.subr.mxu0 0.0
        %1024 = vmatpush1.msra.mxu0 0.0
        %1025 = vmatprep.subr.mxu0 0.0
        %1026 = vmatpush1.msra.mxu0 0.0
        %1027 = vmatprep.subr.mxu0 0.0
        %1028 = vmatpush1.msra.mxu0 0.0
        %1029 = vmatprep.subr.mxu0 0.0
        %1030 = vmatpush1.msra.mxu0 0.0
        %1031 = vmatprep.subr.mxu0 0.0
        %1032 = vmatpush1.msra.mxu0 0.0
        %1033 = vmatprep.subr.mxu0 0.0
        %1034 = vmatpush1.msra.mxu0 0.0
        %1035 = vmatprep.subr.mxu0 0.0
        %1036 = vmatpush1.msra.mxu0 0.0
        %1037 = vmatprep.subr.mxu0 0.0
        %1038 = vmatpush1.msra.mxu0 0.0
        %1039 = vmatprep.subr.mxu0 0.0
        %1040 = vmatpush1.msra.mxu0 0.0
        %1041 = vmatprep.subr.mxu0 0.0
        %1042 = vmatpush1.msra.mxu0 0.0
        %1043 = vmatprep.subr.mxu0 0.0
        %1044 = vmatpush1.msra.mxu0 0.0
        %1045 = vmatprep.subr.mxu0 0.0
        %1046 = vmatpush1.msra.mxu0 0.0
        %1047 = vmatprep.subr.mxu0 0.0
        %1048 = vmatpush1.msra.mxu0 0.0
        %1049 = vmatprep.subr.mxu0 0.0
        %1050 = vmatpush1.msra.mxu0 0.0
        %1051 = vmatprep.subr.mxu0 0.0
        %1052 = vmatpush1.msra.mxu0 0.0
        %1053 = vmatprep.subr.mxu0 0.0
        %1054 = vmatpush1.msra.mxu0 0.0
        %1055 = vmatprep.subr.mxu0 0.0
        %1056 = vmatpush1.msra.mxu0 0.0
        %1057 = vmatprep.mubr.f32.mxu0 0.0
        %1058 = vmatmul.mubr.f32.gmra.mrb[0].mxu0 %v911
        %v1059 = vpop.f32.mrb[0].mxu0
        %v1060 = vadd.f32 0.0, %v1059
        %v1061 = vpop.f32.mrb[0].mxu0
        %1062 = vmatprep.mubr.f32.mxu0 0.0
        %1063 = vmatmul.mubr.f32.gmra.mrb[0].mxu0 %v914
        %v1064 = vpop.f32.mrb[0].mxu0
        %v1065 = vadd.f32 0.0, %v1064
        %v1066 = vpop.f32.mrb[0].mxu0
        %1067 = vdwg.mxu0
        %v1068 = vadd.f32 %v878, %v983
        %v1069 = vadd.f32 %v879, %v985
        %v1070 = vadd.f32 %v880, %v1060
        %v1071 = vadd.f32 %v881, %v989
        %v1072 = vadd.f32 %v882, %v991
        %v1073 = vadd.f32 %v883, %v1065
        %s1074 = scalar_lea.vmem [#allocation6], 64
        %v1075 = vld [vmem:[%s1074] sm:$0xff]
        %v1076 = vld [vmem:[%s1074 + $0x8] sm:$0xff]
        %1077 = vrot.lane.b32.xlu0 %v339, 109
        %v1078 = vpop.permute.xlu0 %1077
        %1079 = vrot.lane.b32.xlu0 %v340, 109
        %v1080 = vpop.permute.xlu0 %1079
        %1081 = vrot.lane.b32.xlu0 %v341, 109
        %v1082 = vpop.permute.xlu0 %1081
        %1083 = vrot.lane.b32.xlu0 %v342, 109
        %v1084 = vpop.permute.xlu0 %1083
        %1085 = vrot.lane.b32.xlu0 %v343, 109
        %v1086 = vpop.permute.xlu0 %1085
        %1087 = vrot.lane.b32.xlu0 %v344, 109
        %v1088 = vpop.permute.xlu0 %1087
        %vm1089 = vcmask 891904
        %v1090 = vsel %vm1089, %v1078, %v1080
        %v1091 = vsel %vm1089, %v1080, %v1082
        %v1092 = vsel %vm1089, %v1084, %v1086
        %v1093 = vsel %vm1089, %v1086, %v1088
        %v1101 = vsel %vm377, %v1075, 0
        %v1104 = vsel %vm377, %v1076, 0
        %1106 = vmatprep.subr.mxu0 %v1091
        %1107 = vmatpush1.msra.mxu0 %v1090
        %1108 = vmatprep.subr.mxu0 %v1093
        %1109 = vmatpush1.msra.mxu0 %v1092
        %1110 = vmatprep.subr.mxu0 0.0
        %1111 = vmatpush1.msra.mxu0 0.0
        %1112 = vmatprep.subr.mxu0 0.0
        %1113 = vmatpush1.msra.mxu0 0.0
        %1114 = vmatprep.subr.mxu0 0.0
        %1115 = vmatpush1.msra.mxu0 0.0
        %1116 = vmatprep.subr.mxu0 0.0
        %1117 = vmatpush1.msra.mxu0 0.0
        %1118 = vmatprep.subr.mxu0 0.0
        %1119 = vmatpush1.msra.mxu0 0.0
        %1120 = vmatprep.subr.mxu0 0.0
        %1121 = vmatpush1.msra.mxu0 0.0
        %1122 = vmatprep.subr.mxu0 0.0
        %1123 = vmatpush1.msra.mxu0 0.0
        %1124 = vmatprep.subr.mxu0 0.0
        %1125 = vmatpush1.msra.mxu0 0.0
        %1126 = vmatprep.subr.mxu0 0.0
        %1127 = vmatpush1.msra.mxu0 0.0
        %1128 = vmatprep.subr.mxu0 0.0
        %1129 = vmatpush1.msra.mxu0 0.0
        %1130 = vmatprep.subr.mxu0 0.0
        %1131 = vmatpush1.msra.mxu0 0.0
        %1132 = vmatprep.subr.mxu0 0.0
        %1133 = vmatpush1.msra.mxu0 0.0
        %1134 = vmatprep.subr.mxu0 0.0
        %1135 = vmatpush1.msra.mxu0 0.0
        %1136 = vmatprep.subr.mxu0 0.0
        %1137 = vmatpush1.msra.mxu0 0.0
        %1138 = vmatprep.subr.mxu0 0.0
        %1139 = vmatpush1.msra.mxu0 0.0
        %1140 = vmatprep.subr.mxu0 0.0
        %1141 = vmatpush1.msra.mxu0 0.0
        %1142 = vmatprep.subr.mxu0 0.0
        %1143 = vmatpush1.msra.mxu0 0.0
        %1144 = vmatprep.subr.mxu0 0.0
        %1145 = vmatpush1.msra.mxu0 0.0
        %1146 = vmatprep.subr.mxu0 0.0
        %1147 = vmatpush1.msra.mxu0 0.0
        %1148 = vmatprep.subr.mxu0 0.0
        %1149 = vmatpush1.msra.mxu0 0.0
        %1150 = vmatprep.subr.mxu0 0.0
        %1151 = vmatpush1.msra.mxu0 0.0
        %1152 = vmatprep.subr.mxu0 0.0
        %1153 = vmatpush1.msra.mxu0 0.0
        %1154 = vmatprep.subr.mxu0 0.0
        %1155 = vmatpush1.msra.mxu0 0.0
        %1156 = vmatprep.subr.mxu0 0.0
        %1157 = vmatpush1.msra.mxu0 0.0
        %1158 = vmatprep.subr.mxu0 0.0
        %1159 = vmatpush1.msra.mxu0 0.0
        %1160 = vmatprep.subr.mxu0 0.0
        %1161 = vmatpush1.msra.mxu0 0.0
        %1162 = vmatprep.subr.mxu0 0.0
        %1163 = vmatpush1.msra.mxu0 0.0
        %1164 = vmatprep.subr.mxu0 0.0
        %1165 = vmatpush1.msra.mxu0 0.0
        %1166 = vmatprep.subr.mxu0 0.0
        %1167 = vmatpush1.msra.mxu0 0.0
        %1168 = vmatprep.subr.mxu0 0.0
        %1169 = vmatpush1.msra.mxu0 0.0
        %1170 = vmatprep.mubr.f32.mxu0 0.0
        %1171 = vmatmul.mubr.f32.gmra.mrb[0].mxu0 %v1101
        %v1172 = vpop.f32.mrb[0].mxu0
        %v1173 = vadd.f32 0.0, %v1172
        %v1174 = vpop.f32.mrb[0].mxu0
        %v1175 = vadd.f32 0.0, %v1174
        %1176 = vmatprep.mubr.f32.mxu0 0.0
        %1177 = vmatmul.mubr.f32.gmra.mrb[0].mxu0 %v1104
        %v1178 = vpop.f32.mrb[0].mxu0
        %v1179 = vadd.f32 0.0, %v1178
        %v1180 = vpop.f32.mrb[0].mxu0
        %v1181 = vadd.f32 0.0, %v1180
        %1182 = vdwg.mxu0
        %1183 = vmatprep.subr.mxu0 0.0
        %1184 = vmatpush1.msra.mxu0 %v1082
        %1185 = vmatprep.subr.mxu0 0.0
        %1186 = vmatpush1.msra.mxu0 %v1088
        %1187 = vmatprep.subr.mxu0 0.0
        %1188 = vmatpush1.msra.mxu0 0.0
        %1189 = vmatprep.subr.mxu0 0.0
        %1190 = vmatpush1.msra.mxu0 0.0
        %1191 = vmatprep.subr.mxu0 0.0
        %1192 = vmatpush1.msra.mxu0 0.0
        %1193 = vmatprep.subr.mxu0 0.0
        %1194 = vmatpush1.msra.mxu0 0.0
        %1195 = vmatprep.subr.mxu0 0.0
        %1196 = vmatpush1.msra.mxu0 0.0
        %1197 = vmatprep.subr.mxu0 0.0
        %1198 = vmatpush1.msra.mxu0 0.0
        %1199 = vmatprep.subr.mxu0 0.0
        %1200 = vmatpush1.msra.mxu0 0.0
        %1201 = vmatprep.subr.mxu0 0.0
        %1202 = vmatpush1.msra.mxu0 0.0
        %1203 = vmatprep.subr.mxu0 0.0
        %1204 = vmatpush1.msra.mxu0 0.0
        %1205 = vmatprep.subr.mxu0 0.0
        %1206 = vmatpush1.msra.mxu0 0.0
        %1207 = vmatprep.subr.mxu0 0.0
        %1208 = vmatpush1.msra.mxu0 0.0
        %1209 = vmatprep.subr.mxu0 0.0
        %1210 = vmatpush1.msra.mxu0 0.0
        %1211 = vmatprep.subr.mxu0 0.0
        %1212 = vmatpush1.msra.mxu0 0.0
        %1213 = vmatprep.subr.mxu0 0.0
        %1214 = vmatpush1.msra.mxu0 0.0
        %1215 = vmatprep.subr.mxu0 0.0
        %1216 = vmatpush1.msra.mxu0 0.0
        %1217 = vmatprep.subr.mxu0 0.0
        %1218 = vmatpush1.msra.mxu0 0.0
        %1219 = vmatprep.subr.mxu0 0.0
        %1220 = vmatpush1.msra.mxu0 0.0
        %1221 = vmatprep.subr.mxu0 0.0
        %1222 = vmatpush1.msra.mxu0 0.0
        %1223 = vmatprep.subr.mxu0 0.0
        %1224 = vmatpush1.msra.mxu0 0.0
        %1225 = vmatprep.subr.mxu0 0.0
        %1226 = vmatpush1.msra.mxu0 0.0
        %1227 = vmatprep.subr.mxu0 0.0
        %1228 = vmatpush1.msra.mxu0 0.0
        %1229 = vmatprep.subr.mxu0 0.0
        %1230 = vmatpush1.msra.mxu0 0.0
        %1231 = vmatprep.subr.mxu0 0.0
        %1232 = vmatpush1.msra.mxu0 0.0
        %1233 = vmatprep.subr.mxu0 0.0
        %1234 = vmatpush1.msra.mxu0 0.0
        %1235 = vmatprep.subr.mxu0 0.0
        %1236 = vmatpush1.msra.mxu0 0.0
        %1237 = vmatprep.subr.mxu0 0.0
        %1238 = vmatpush1.msra.mxu0 0.0
        %1239 = vmatprep.subr.mxu0 0.0
        %1240 = vmatpush1.msra.mxu0 0.0
        %1241 = vmatprep.subr.mxu0 0.0
        %1242 = vmatpush1.msra.mxu0 0.0
        %1243 = vmatprep.subr.mxu0 0.0
        %1244 = vmatpush1.msra.mxu0 0.0
        %1245 = vmatprep.subr.mxu0 0.0
        %1246 = vmatpush1.msra.mxu0 0.0
        %1247 = vmatprep.mubr.f32.mxu0 0.0
        %1248 = vmatmul.mubr.f32.gmra.mrb[0].mxu0 %v1101
        %v1249 = vpop.f32.mrb[0].mxu0
        %v1250 = vadd.f32 0.0, %v1249
        %v1251 = vpop.f32.mrb[0].mxu0
        %1252 = vmatprep.mubr.f32.mxu0 0.0
        %1253 = vmatmul.mubr.f32.gmra.mrb[0].mxu0 %v1104
        %v1254 = vpop.f32.mrb[0].mxu0
        %v1255 = vadd.f32 0.0, %v1254
        %v1256 = vpop.f32.mrb[0].mxu0
        %1257 = vdwg.mxu0
        %v1258 = vadd.f32 %v1068, %v1173
        %v1259 = vadd.f32 %v1069, %v1175
        %v1260 = vadd.f32 %v1070, %v1250
        %v1261 = vadd.f32 %v1071, %v1179
        %v1262 = vadd.f32 %v1072, %v1181
        %v1263 = vadd.f32 %v1073, %v1255
        %s1264 = scalar_lea.vmem [#allocation6], 80
        %v1265 = vld [vmem:[%s1264] sm:$0xff]
        %v1266 = vld [vmem:[%s1264 + $0x8] sm:$0xff]
        %1267 = vrot.lane.b32.xlu0 %v339, 108
        %v1268 = vpop.permute.xlu0 %1267
        %1269 = vrot.lane.b32.xlu0 %v340, 108
        %v1270 = vpop.permute.xlu0 %1269
        %1271 = vrot.lane.b32.xlu0 %v341, 108
        %v1272 = vpop.permute.xlu0 %1271
        %1273 = vrot.lane.b32.xlu0 %v342, 108
        %v1274 = vpop.permute.xlu0 %1273
        %1275 = vrot.lane.b32.xlu0 %v343, 108
        %v1276 = vpop.permute.xlu0 %1275
        %1277 = vrot.lane.b32.xlu0 %v344, 108
        %v1278 = vpop.permute.xlu0 %1277
        %vm1279 = vcmask 883712
        %v1280 = vsel %vm1279, %v1268, %v1270
        %v1281 = vsel %vm1279, %v1270, %v1272
        %v1282 = vsel %vm1279, %v1274, %v1276
        %v1283 = vsel %vm1279, %v1276, %v1278
        %v1291 = vsel %vm377, %v1265, 0
        %v1294 = vsel %vm377, %v1266, 0
        %1296 = vmatprep.subr.mxu0 %v1281
        %1297 = vmatpush1.msra.mxu0 %v1280
        %1298 = vmatprep.subr.mxu0 %v1283
        %1299 = vmatpush1.msra.mxu0 %v1282
        %1300 = vmatprep.subr.mxu0 0.0
        %1301 = vmatpush1.msra.mxu0 0.0
        %1302 = vmatprep.subr.mxu0 0.0
        %1303 = vmatpush1.msra.mxu0 0.0
        %1304 = vmatprep.subr.mxu0 0.0
        %1305 = vmatpush1.msra.mxu0 0.0
        %1306 = vmatprep.subr.mxu0 0.0
        %1307 = vmatpush1.msra.mxu0 0.0
        %1308 = vmatprep.subr.mxu0 0.0
        %1309 = vmatpush1.msra.mxu0 0.0
        %1310 = vmatprep.subr.mxu0 0.0
        %1311 = vmatpush1.msra.mxu0 0.0
        %1312 = vmatprep.subr.mxu0 0.0
        %1313 = vmatpush1.msra.mxu0 0.0
        %1314 = vmatprep.subr.mxu0 0.0
        %1315 = vmatpush1.msra.mxu0 0.0
        %1316 = vmatprep.subr.mxu0 0.0
        %1317 = vmatpush1.msra.mxu0 0.0
        %1318 = vmatprep.subr.mxu0 0.0
        %1319 = vmatpush1.msra.mxu0 0.0
        %1320 = vmatprep.subr.mxu0 0.0
        %1321 = vmatpush1.msra.mxu0 0.0
        %1322 = vmatprep.subr.mxu0 0.0
        %1323 = vmatpush1.msra.mxu0 0.0
        %1324 = vmatprep.subr.mxu0 0.0
        %1325 = vmatpush1.msra.mxu0 0.0
        %1326 = vmatprep.subr.mxu0 0.0
        %1327 = vmatpush1.msra.mxu0 0.0
        %1328 = vmatprep.subr.mxu0 0.0
        %1329 = vmatpush1.msra.mxu0 0.0
        %1330 = vmatprep.subr.mxu0 0.0
        %1331 = vmatpush1.msra.mxu0 0.0
        %1332 = vmatprep.subr.mxu0 0.0
        %1333 = vmatpush1.msra.mxu0 0.0
        %1334 = vmatprep.subr.mxu0 0.0
        %1335 = vmatpush1.msra.mxu0 0.0
        %1336 = vmatprep.subr.mxu0 0.0
        %1337 = vmatpush1.msra.mxu0 0.0
        %1338 = vmatprep.subr.mxu0 0.0
        %1339 = vmatpush1.msra.mxu0 0.0
        %1340 = vmatprep.subr.mxu0 0.0
        %1341 = vmatpush1.msra.mxu0 0.0
        %1342 = vmatprep.subr.mxu0 0.0
        %1343 = vmatpush1.msra.mxu0 0.0
        %1344 = vmatprep.subr.mxu0 0.0
        %1345 = vmatpush1.msra.mxu0 0.0
        %1346 = vmatprep.subr.mxu0 0.0
        %1347 = vmatpush1.msra.mxu0 0.0
        %1348 = vmatprep.subr.mxu0 0.0
        %1349 = vmatpush1.msra.mxu0 0.0
        %1350 = vmatprep.subr.mxu0 0.0
        %1351 = vmatpush1.msra.mxu0 0.0
        %1352 = vmatprep.subr.mxu0 0.0
        %1353 = vmatpush1.msra.mxu0 0.0
        %1354 = vmatprep.subr.mxu0 0.0
        %1355 = vmatpush1.msra.mxu0 0.0
        %1356 = vmatprep.subr.mxu0 0.0
        %1357 = vmatpush1.msra.mxu0 0.0
        %1358 = vmatprep.subr.mxu0 0.0
        %1359 = vmatpush1.msra.mxu0 0.0
        %1360 = vmatprep.mubr.f32.mxu0 0.0
        %1361 = vmatmul.mubr.f32.gmra.mrb[0].mxu0 %v1291
        %v1362 = vpop.f32.mrb[0].mxu0
        %v1363 = vadd.f32 0.0, %v1362
        %v1364 = vpop.f32.mrb[0].mxu0
        %v1365 = vadd.f32 0.0, %v1364
        %1366 = vmatprep.mubr.f32.mxu0 0.0
        %1367 = vmatmul.mubr.f32.gmra.mrb[0].mxu0 %v1294
        %v1368 = vpop.f32.mrb[0].mxu0
        %v1369 = vadd.f32 0.0, %v1368
        %v1370 = vpop.f32.mrb[0].mxu0
        %v1371 = vadd.f32 0.0, %v1370
        %1372 = vdwg.mxu0
        %1373 = vmatprep.subr.mxu0 0.0
        %1374 = vmatpush1.msra.mxu0 %v1272
        %1375 = vmatprep.subr.mxu0 0.0
        %1376 = vmatpush1.msra.mxu0 %v1278
        %1377 = vmatprep.subr.mxu0 0.0
        %1378 = vmatpush1.msra.mxu0 0.0
        %1379 = vmatprep.subr.mxu0 0.0
        %1380 = vmatpush1.msra.mxu0 0.0
        %1381 = vmatprep.subr.mxu0 0.0
        %1382 = vmatpush1.msra.mxu0 0.0
        %1383 = vmatprep.subr.mxu0 0.0
        %1384 = vmatpush1.msra.mxu0 0.0
        %1385 = vmatprep.subr.mxu0 0.0
        %1386 = vmatpush1.msra.mxu0 0.0
        %1387 = vmatprep.subr.mxu0 0.0
        %1388 = vmatpush1.msra.mxu0 0.0
        %1389 = vmatprep.subr.mxu0 0.0
        %1390 = vmatpush1.msra.mxu0 0.0
        %1391 = vmatprep.subr.mxu0 0.0
        %1392 = vmatpush1.msra.mxu0 0.0
        %1393 = vmatprep.subr.mxu0 0.0
        %1394 = vmatpush1.msra.mxu0 0.0
        %1395 = vmatprep.subr.mxu0 0.0
        %1396 = vmatpush1.msra.mxu0 0.0
        %1397 = vmatprep.subr.mxu0 0.0
        %1398 = vmatpush1.msra.mxu0 0.0
        %1399 = vmatprep.subr.mxu0 0.0
        %1400 = vmatpush1.msra.mxu0 0.0
        %1401 = vmatprep.subr.mxu0 0.0
        %1402 = vmatpush1.msra.mxu0 0.0
        %1403 = vmatprep.subr.mxu0 0.0
        %1404 = vmatpush1.msra.mxu0 0.0
        %1405 = vmatprep.subr.mxu0 0.0
        %1406 = vmatpush1.msra.mxu0 0.0
        %1407 = vmatprep.subr.mxu0 0.0
        %1408 = vmatpush1.msra.mxu0 0.0
        %1409 = vmatprep.subr.mxu0 0.0
        %1410 = vmatpush1.msra.mxu0 0.0
        %1411 = vmatprep.subr.mxu0 0.0
        %1412 = vmatpush1.msra.mxu0 0.0
        %1413 = vmatprep.subr.mxu0 0.0
        %1414 = vmatpush1.msra.mxu0 0.0
        %1415 = vmatprep.subr.mxu0 0.0
        %1416 = vmatpush1.msra.mxu0 0.0
        %1417 = vmatprep.subr.mxu0 0.0
        %1418 = vmatpush1.msra.mxu0 0.0
        %1419 = vmatprep.subr.mxu0 0.0
        %1420 = vmatpush1.msra.mxu0 0.0
        %1421 = vmatprep.subr.mxu0 0.0
        %1422 = vmatpush1.msra.mxu0 0.0
        %1423 = vmatprep.subr.mxu0 0.0
        %1424 = vmatpush1.msra.mxu0 0.0
        %1425 = vmatprep.subr.mxu0 0.0
        %1426 = vmatpush1.msra.mxu0 0.0
        %1427 = vmatprep.subr.mxu0 0.0
        %1428 = vmatpush1.msra.mxu0 0.0
        %1429 = vmatprep.subr.mxu0 0.0
        %1430 = vmatpush1.msra.mxu0 0.0
        %1431 = vmatprep.subr.mxu0 0.0
        %1432 = vmatpush1.msra.mxu0 0.0
        %1433 = vmatprep.subr.mxu0 0.0
        %1434 = vmatpush1.msra.mxu0 0.0
        %1435 = vmatprep.subr.mxu0 0.0
        %1436 = vmatpush1.msra.mxu0 0.0
        %1437 = vmatprep.mubr.f32.mxu0 0.0
        %1438 = vmatmul.mubr.f32.gmra.mrb[0].mxu0 %v1291
        %v1439 = vpop.f32.mrb[0].mxu0
        %v1440 = vadd.f32 0.0, %v1439
        %v1441 = vpop.f32.mrb[0].mxu0
        %1442 = vmatprep.mubr.f32.mxu0 0.0
        %1443 = vmatmul.mubr.f32.gmra.mrb[0].mxu0 %v1294
        %v1444 = vpop.f32.mrb[0].mxu0
        %v1445 = vadd.f32 0.0, %v1444
        %v1446 = vpop.f32.mrb[0].mxu0
        %1447 = vdwg.mxu0
        %v1448 = vadd.f32 %v1258, %v1363
        %v1449 = vadd.f32 %v1259, %v1365
        %v1450 = vadd.f32 %v1260, %v1440
        %v1451 = vadd.f32 %v1261, %v1369
        %v1452 = vadd.f32 %v1262, %v1371
        %v1453 = vadd.f32 %v1263, %v1445
        %s1454 = scalar_lea.vmem [#allocation6], 96
        %v1455 = vld [vmem:[%s1454] sm:$0xff]
        %v1456 = vld [vmem:[%s1454 + $0x8] sm:$0xff]
        %1457 = vrot.lane.b32.xlu0 %v339, 92
        %v1458 = vpop.permute.xlu0 %1457
        %1459 = vrot.lane.b32.xlu0 %v340, 92
        %v1460 = vpop.permute.xlu0 %1459
        %1461 = vrot.lane.b32.xlu0 %v341, 92
        %v1462 = vpop.permute.xlu0 %1461
        %1463 = vrot.lane.b32.xlu0 %v342, 92
        %v1464 = vpop.permute.xlu0 %1463
        %1465 = vrot.lane.b32.xlu0 %v343, 92
        %v1466 = vpop.permute.xlu0 %1465
        %1467 = vrot.lane.b32.xlu0 %v344, 92
        %v1468 = vpop.permute.xlu0 %1467
        %vm1469 = vcmask 752640
        %v1470 = vsel %vm1469, %v1458, %v1460
        %v1471 = vsel %vm1469, %v1460, %v1462
        %v1472 = vsel %vm1469, %v1464, %v1466
        %v1473 = vsel %vm1469, %v1466, %v1468
        %v1481 = vsel %vm377, %v1455, 0
        %v1484 = vsel %vm377, %v1456, 0
        %1486 = vmatprep.subr.mxu0 %v1471
        %1487 = vmatpush1.msra.mxu0 %v1470
        %1488 = vmatprep.subr.mxu0 %v1473
        %1489 = vmatpush1.msra.mxu0 %v1472
        %1490 = vmatprep.subr.mxu0 0.0
        %1491 = vmatpush1.msra.mxu0 0.0
        %1492 = vmatprep.subr.mxu0 0.0
        %1493 = vmatpush1.msra.mxu0 0.0
        %1494 = vmatprep.subr.mxu0 0.0
        %1495 = vmatpush1.msra.mxu0 0.0
        %1496 = vmatprep.subr.mxu0 0.0
        %1497 = vmatpush1.msra.mxu0 0.0
        %1498 = vmatprep.subr.mxu0 0.0
        %1499 = vmatpush1.msra.mxu0 0.0
        %1500 = vmatprep.subr.mxu0 0.0
        %1501 = vmatpush1.msra.mxu0 0.0
        %1502 = vmatprep.subr.mxu0 0.0
        %1503 = vmatpush1.msra.mxu0 0.0
        %1504 = vmatprep.subr.mxu0 0.0
        %1505 = vmatpush1.msra.mxu0 0.0
        %1506 = vmatprep.subr.mxu0 0.0
        %1507 = vmatpush1.msra.mxu0 0.0
        %1508 = vmatprep.subr.mxu0 0.0
        %1509 = vmatpush1.msra.mxu0 0.0
        %1510 = vmatprep.subr.mxu0 0.0
        %1511 = vmatpush1.msra.mxu0 0.0
        %1512 = vmatprep.subr.mxu0 0.0
        %1513 = vmatpush1.msra.mxu0 0.0
        %1514 = vmatprep.subr.mxu0 0.0
        %1515 = vmatpush1.msra.mxu0 0.0
        %1516 = vmatprep.subr.mxu0 0.0
        %1517 = vmatpush1.msra.mxu0 0.0
        %1518 = vmatprep.subr.mxu0 0.0
        %1519 = vmatpush1.msra.mxu0 0.0
        %1520 = vmatprep.subr.mxu0 0.0
        %1521 = vmatpush1.msra.mxu0 0.0
        %1522 = vmatprep.subr.mxu0 0.0
        %1523 = vmatpush1.msra.mxu0 0.0
        %1524 = vmatprep.subr.mxu0 0.0
        %1525 = vmatpush1.msra.mxu0 0.0
        %1526 = vmatprep.subr.mxu0 0.0
        %1527 = vmatpush1.msra.mxu0 0.0
        %1528 = vmatprep.subr.mxu0 0.0
        %1529 = vmatpush1.msra.mxu0 0.0
        %1530 = vmatprep.subr.mxu0 0.0
        %1531 = vmatpush1.msra.mxu0 0.0
        %1532 = vmatprep.subr.mxu0 0.0
        %1533 = vmatpush1.msra.mxu0 0.0
        %1534 = vmatprep.subr.mxu0 0.0
        %1535 = vmatpush1.msra.mxu0 0.0
        %1536 = vmatprep.subr.mxu0 0.0
        %1537 = vmatpush1.msra.mxu0 0.0
        %1538 = vmatprep.subr.mxu0 0.0
        %1539 = vmatpush1.msra.mxu0 0.0
        %1540 = vmatprep.subr.mxu0 0.0
        %1541 = vmatpush1.msra.mxu0 0.0
        %1542 = vmatprep.subr.mxu0 0.0
        %1543 = vmatpush1.msra.mxu0 0.0
        %1544 = vmatprep.subr.mxu0 0.0
        %1545 = vmatpush1.msra.mxu0 0.0
        %1546 = vmatprep.subr.mxu0 0.0
        %1547 = vmatpush1.msra.mxu0 0.0
        %1548 = vmatprep.subr.mxu0 0.0
        %1549 = vmatpush1.msra.mxu0 0.0
        %1550 = vmatprep.mubr.f32.mxu0 0.0
        %1551 = vmatmul.mubr.f32.gmra.mrb[0].mxu0 %v1481
        %v1552 = vpop.f32.mrb[0].mxu0
        %v1553 = vadd.f32 0.0, %v1552
        %v1554 = vpop.f32.mrb[0].mxu0
        %v1555 = vadd.f32 0.0, %v1554
        %1556 = vmatprep.mubr.f32.mxu0 0.0
        %1557 = vmatmul.mubr.f32.gmra.mrb[0].mxu0 %v1484
        %v1558 = vpop.f32.mrb[0].mxu0
        %v1559 = vadd.f32 0.0, %v1558
        %v1560 = vpop.f32.mrb[0].mxu0
        %v1561 = vadd.f32 0.0, %v1560
        %1562 = vdwg.mxu0
        %1563 = vmatprep.subr.mxu0 0.0
        %1564 = vmatpush1.msra.mxu0 %v1462
        %1565 = vmatprep.subr.mxu0 0.0
        %1566 = vmatpush1.msra.mxu0 %v1468
        %1567 = vmatprep.subr.mxu0 0.0
        %1568 = vmatpush1.msra.mxu0 0.0
        %1569 = vmatprep.subr.mxu0 0.0
        %1570 = vmatpush1.msra.mxu0 0.0
        %1571 = vmatprep.subr.mxu0 0.0
        %1572 = vmatpush1.msra.mxu0 0.0
        %1573 = vmatprep.subr.mxu0 0.0
        %1574 = vmatpush1.msra.mxu0 0.0
        %1575 = vmatprep.subr.mxu0 0.0
        %1576 = vmatpush1.msra.mxu0 0.0
        %1577 = vmatprep.subr.mxu0 0.0
        %1578 = vmatpush1.msra.mxu0 0.0
        %1579 = vmatprep.subr.mxu0 0.0
        %1580 = vmatpush1.msra.mxu0 0.0
        %1581 = vmatprep.subr.mxu0 0.0
        %1582 = vmatpush1.msra.mxu0 0.0
        %1583 = vmatprep.subr.mxu0 0.0
        %1584 = vmatpush1.msra.mxu0 0.0
        %1585 = vmatprep.subr.mxu0 0.0
        %1586 = vmatpush1.msra.mxu0 0.0
        %1587 = vmatprep.subr.mxu0 0.0
        %1588 = vmatpush1.msra.mxu0 0.0
        %1589 = vmatprep.subr.mxu0 0.0
        %1590 = vmatpush1.msra.mxu0 0.0
        %1591 = vmatprep.subr.mxu0 0.0
        %1592 = vmatpush1.msra.mxu0 0.0
        %1593 = vmatprep.subr.mxu0 0.0
        %1594 = vmatpush1.msra.mxu0 0.0
        %1595 = vmatprep.subr.mxu0 0.0
        %1596 = vmatpush1.msra.mxu0 0.0
        %1597 = vmatprep.subr.mxu0 0.0
        %1598 = vmatpush1.msra.mxu0 0.0
        %1599 = vmatprep.subr.mxu0 0.0
        %1600 = vmatpush1.msra.mxu0 0.0
        %1601 = vmatprep.subr.mxu0 0.0
        %1602 = vmatpush1.msra.mxu0 0.0
        %1603 = vmatprep.subr.mxu0 0.0
        %1604 = vmatpush1.msra.mxu0 0.0
        %1605 = vmatprep.subr.mxu0 0.0
        %1606 = vmatpush1.msra.mxu0 0.0
        %1607 = vmatprep.subr.mxu0 0.0
        %1608 = vmatpush1.msra.mxu0 0.0
        %1609 = vmatprep.subr.mxu0 0.0
        %1610 = vmatpush1.msra.mxu0 0.0
        %1611 = vmatprep.subr.mxu0 0.0
        %1612 = vmatpush1.msra.mxu0 0.0
        %1613 = vmatprep.subr.mxu0 0.0
        %1614 = vmatpush1.msra.mxu0 0.0
        %1615 = vmatprep.subr.mxu0 0.0
        %1616 = vmatpush1.msra.mxu0 0.0
        %1617 = vmatprep.subr.mxu0 0.0
        %1618 = vmatpush1.msra.mxu0 0.0
        %1619 = vmatprep.subr.mxu0 0.0
        %1620 = vmatpush1.msra.mxu0 0.0
        %1621 = vmatprep.subr.mxu0 0.0
        %1622 = vmatpush1.msra.mxu0 0.0
        %1623 = vmatprep.subr.mxu0 0.0
        %1624 = vmatpush1.msra.mxu0 0.0
        %1625 = vmatprep.subr.mxu0 0.0
        %1626 = vmatpush1.msra.mxu0 0.0
        %1627 = vmatprep.mubr.f32.mxu0 0.0
        %1628 = vmatmul.mubr.f32.gmra.mrb[0].mxu0 %v1481
        %v1629 = vpop.f32.mrb[0].mxu0
        %v1630 = vadd.f32 0.0, %v1629
        %v1631 = vpop.f32.mrb[0].mxu0
        %1632 = vmatprep.mubr.f32.mxu0 0.0
        %1633 = vmatmul.mubr.f32.gmra.mrb[0].mxu0 %v1484
        %v1634 = vpop.f32.mrb[0].mxu0
        %v1635 = vadd.f32 0.0, %v1634
        %v1636 = vpop.f32.mrb[0].mxu0
        %1637 = vdwg.mxu0
        %v1638 = vadd.f32 %v1448, %v1553
        %v1639 = vadd.f32 %v1449, %v1555
        %v1640 = vadd.f32 %v1450, %v1630
        %v1641 = vadd.f32 %v1451, %v1559
        %v1642 = vadd.f32 %v1452, %v1561
        %v1643 = vadd.f32 %v1453, %v1635
        %s1644 = scalar_lea.vmem [#allocation6], 112
        %v1645 = vld [vmem:[%s1644] sm:$0xff]
        %v1646 = vld [vmem:[%s1644 + $0x8] sm:$0xff]
        %1647 = vrot.lane.b32.xlu0 %v339, 91
        %v1648 = vpop.permute.xlu0 %1647
        %1649 = vrot.lane.b32.xlu0 %v340, 91
        %v1650 = vpop.permute.xlu0 %1649
        %1651 = vrot.lane.b32.xlu0 %v341, 91
        %v1652 = vpop.permute.xlu0 %1651
        %1653 = vrot.lane.b32.xlu0 %v342, 91
        %v1654 = vpop.permute.xlu0 %1653
        %1655 = vrot.lane.b32.xlu0 %v343, 91
        %v1656 = vpop.permute.xlu0 %1655
        %1657 = vrot.lane.b32.xlu0 %v344, 91
        %v1658 = vpop.permute.xlu0 %1657
        %vm1659 = vcmask 744448
        %v1660 = vsel %vm1659, %v1648, %v1650
        %v1661 = vsel %vm1659, %v1650, %v1652
        %v1662 = vsel %vm1659, %v1654, %v1656
        %v1663 = vsel %vm1659, %v1656, %v1658
        %v1671 = vsel %vm377, %v1645, 0
        %v1674 = vsel %vm377, %v1646, 0
        %1676 = vmatprep.subr.mxu0 %v1661
        %1677 = vmatpush1.msra.mxu0 %v1660
        %1678 = vmatprep.subr.mxu0 %v1663
        %1679 = vmatpush1.msra.mxu0 %v1662
        %1680 = vmatprep.subr.mxu0 0.0
        %1681 = vmatpush1.msra.mxu0 0.0
        %1682 = vmatprep.subr.mxu0 0.0
        %1683 = vmatpush1.msra.mxu0 0.0
        %1684 = vmatprep.subr.mxu0 0.0
        %1685 = vmatpush1.msra.mxu0 0.0
        %1686 = vmatprep.subr.mxu0 0.0
        %1687 = vmatpush1.msra.mxu0 0.0
        %1688 = vmatprep.subr.mxu0 0.0
        %1689 = vmatpush1.msra.mxu0 0.0
        %1690 = vmatprep.subr.mxu0 0.0
        %1691 = vmatpush1.msra.mxu0 0.0
        %1692 = vmatprep.subr.mxu0 0.0
        %1693 = vmatpush1.msra.mxu0 0.0
        %1694 = vmatprep.subr.mxu0 0.0
        %1695 = vmatpush1.msra.mxu0 0.0
        %1696 = vmatprep.subr.mxu0 0.0
        %1697 = vmatpush1.msra.mxu0 0.0
        %1698 = vmatprep.subr.mxu0 0.0
        %1699 = vmatpush1.msra.mxu0 0.0
        %1700 = vmatprep.subr.mxu0 0.0
        %1701 = vmatpush1.msra.mxu0 0.0
        %1702 = vmatprep.subr.mxu0 0.0
        %1703 = vmatpush1.msra.mxu0 0.0
        %1704 = vmatprep.subr.mxu0 0.0
        %1705 = vmatpush1.msra.mxu0 0.0
        %1706 = vmatprep.subr.mxu0 0.0
        %1707 = vmatpush1.msra.mxu0 0.0
        %1708 = vmatprep.subr.mxu0 0.0
        %1709 = vmatpush1.msra.mxu0 0.0
        %1710 = vmatprep.subr.mxu0 0.0
        %1711 = vmatpush1.msra.mxu0 0.0
        %1712 = vmatprep.subr.mxu0 0.0
        %1713 = vmatpush1.msra.mxu0 0.0
        %1714 = vmatprep.subr.mxu0 0.0
        %1715 = vmatpush1.msra.mxu0 0.0
        %1716 = vmatprep.subr.mxu0 0.0
        %1717 = vmatpush1.msra.mxu0 0.0
        %1718 = vmatprep.subr.mxu0 0.0
        %1719 = vmatpush1.msra.mxu0 0.0
        %1720 = vmatprep.subr.mxu0 0.0
        %1721 = vmatpush1.msra.mxu0 0.0
        %1722 = vmatprep.subr.mxu0 0.0
        %1723 = vmatpush1.msra.mxu0 0.0
        %1724 = vmatprep.subr.mxu0 0.0
        %1725 = vmatpush1.msra.mxu0 0.0
        %1726 = vmatprep.subr.mxu0 0.0
        %1727 = vmatpush1.msra.mxu0 0.0
        %1728 = vmatprep.subr.mxu0 0.0
        %1729 = vmatpush1.msra.mxu0 0.0
        %1730 = vmatprep.subr.mxu0 0.0
        %1731 = vmatpush1.msra.mxu0 0.0
        %1732 = vmatprep.subr.mxu0 0.0
        %1733 = vmatpush1.msra.mxu0 0.0
        %1734 = vmatprep.subr.mxu0 0.0
        %1735 = vmatpush1.msra.mxu0 0.0
        %1736 = vmatprep.subr.mxu0 0.0
        %1737 = vmatpush1.msra.mxu0 0.0
        %1738 = vmatprep.subr.mxu0 0.0
        %1739 = vmatpush1.msra.mxu0 0.0
        %1740 = vmatprep.mubr.f32.mxu0 0.0
        %1741 = vmatmul.mubr.f32.gmra.mrb[0].mxu0 %v1671
        %v1742 = vpop.f32.mrb[0].mxu0
        %v1743 = vadd.f32 0.0, %v1742
        %v1744 = vpop.f32.mrb[0].mxu0
        %v1745 = vadd.f32 0.0, %v1744
        %1746 = vmatprep.mubr.f32.mxu0 0.0
        %1747 = vmatmul.mubr.f32.gmra.mrb[0].mxu0 %v1674
        %v1748 = vpop.f32.mrb[0].mxu0
        %v1749 = vadd.f32 0.0, %v1748
        %v1750 = vpop.f32.mrb[0].mxu0
        %v1751 = vadd.f32 0.0, %v1750
        %1752 = vdwg.mxu0
        %1753 = vmatprep.subr.mxu0 0.0
        %1754 = vmatpush1.msra.mxu0 %v1652
        %1755 = vmatprep.subr.mxu0 0.0
        %1756 = vmatpush1.msra.mxu0 %v1658
        %1757 = vmatprep.subr.mxu0 0.0
        %1758 = vmatpush1.msra.mxu0 0.0
        %1759 = vmatprep.subr.mxu0 0.0
        %1760 = vmatpush1.msra.mxu0 0.0
        %1761 = vmatprep.subr.mxu0 0.0
        %1762 = vmatpush1.msra.mxu0 0.0
        %1763 = vmatprep.subr.mxu0 0.0
        %1764 = vmatpush1.msra.mxu0 0.0
        %1765 = vmatprep.subr.mxu0 0.0
        %1766 = vmatpush1.msra.mxu0 0.0
        %1767 = vmatprep.subr.mxu0 0.0
        %1768 = vmatpush1.msra.mxu0 0.0
        %1769 = vmatprep.subr.mxu0 0.0
        %1770 = vmatpush1.msra.mxu0 0.0
        %1771 = vmatprep.subr.mxu0 0.0
        %1772 = vmatpush1.msra.mxu0 0.0
        %1773 = vmatprep.subr.mxu0 0.0
        %1774 = vmatpush1.msra.mxu0 0.0
        %1775 = vmatprep.subr.mxu0 0.0
        %1776 = vmatpush1.msra.mxu0 0.0
        %1777 = vmatprep.subr.mxu0 0.0
        %1778 = vmatpush1.msra.mxu0 0.0
        %1779 = vmatprep.subr.mxu0 0.0
        %1780 = vmatpush1.msra.mxu0 0.0
        %1781 = vmatprep.subr.mxu0 0.0
        %1782 = vmatpush1.msra.mxu0 0.0
        %1783 = vmatprep.subr.mxu0 0.0
        %1784 = vmatpush1.msra.mxu0 0.0
        %1785 = vmatprep.subr.mxu0 0.0
        %1786 = vmatpush1.msra.mxu0 0.0
        %1787 = vmatprep.subr.mxu0 0.0
        %1788 = vmatpush1.msra.mxu0 0.0
        %1789 = vmatprep.subr.mxu0 0.0
        %1790 = vmatpush1.msra.mxu0 0.0
        %1791 = vmatprep.subr.mxu0 0.0
        %1792 = vmatpush1.msra.mxu0 0.0
        %1793 = vmatprep.subr.mxu0 0.0
        %1794 = vmatpush1.msra.mxu0 0.0
        %1795 = vmatprep.subr.mxu0 0.0
        %1796 = vmatpush1.msra.mxu0 0.0
        %1797 = vmatprep.subr.mxu0 0.0
        %1798 = vmatpush1.msra.mxu0 0.0
        %1799 = vmatprep.subr.mxu0 0.0
        %1800 = vmatpush1.msra.mxu0 0.0
        %1801 = vmatprep.subr.mxu0 0.0
        %1802 = vmatpush1.msra.mxu0 0.0
        %1803 = vmatprep.subr.mxu0 0.0
        %1804 = vmatpush1.msra.mxu0 0.0
        %1805 = vmatprep.subr.mxu0 0.0
        %1806 = vmatpush1.msra.mxu0 0.0
        %1807 = vmatprep.subr.mxu0 0.0
        %1808 = vmatpush1.msra.mxu0 0.0
        %1809 = vmatprep.subr.mxu0 0.0
        %1810 = vmatpush1.msra.mxu0 0.0
        %1811 = vmatprep.subr.mxu0 0.0
        %1812 = vmatpush1.msra.mxu0 0.0
        %1813 = vmatprep.subr.mxu0 0.0
        %1814 = vmatpush1.msra.mxu0 0.0
        %1815 = vmatprep.subr.mxu0 0.0
        %1816 = vmatpush1.msra.mxu0 0.0
        %1817 = vmatprep.mubr.f32.mxu0 0.0
        %1818 = vmatmul.mubr.f32.gmra.mrb[0].mxu0 %v1671
        %v1819 = vpop.f32.mrb[0].mxu0
        %v1820 = vadd.f32 0.0, %v1819
        %v1821 = vpop.f32.mrb[0].mxu0
        %1822 = vmatprep.mubr.f32.mxu0 0.0
        %1823 = vmatmul.mubr.f32.gmra.mrb[0].mxu0 %v1674
        %v1824 = vpop.f32.mrb[0].mxu0
        %v1825 = vadd.f32 0.0, %v1824
        %v1826 = vpop.f32.mrb[0].mxu0
        %1827 = vdwg.mxu0
        %v1828 = vadd.f32 %v1638, %v1743
        %v1829 = vadd.f32 %v1639, %v1745
        %v1830 = vadd.f32 %v1640, %v1820
        %v1831 = vadd.f32 %v1641, %v1749
        %v1832 = vadd.f32 %v1642, %v1751
        %v1833 = vadd.f32 %v1643, %v1825
        %s1834 = scalar_lea.vmem [#allocation6], 128
        %v1835 = vld [vmem:[%s1834] sm:$0xff]
        %v1836 = vld [vmem:[%s1834 + $0x8] sm:$0xff]
        %1837 = vrot.lane.b32.xlu0 %v339, 90
        %v1838 = vpop.permute.xlu0 %1837
        %1839 = vrot.lane.b32.xlu0 %v340, 90
        %v1840 = vpop.permute.xlu0 %1839
        %1841 = vrot.lane.b32.xlu0 %v341, 90
        %v1842 = vpop.permute.xlu0 %1841
        %1843 = vrot.lane.b32.xlu0 %v342, 90
        %v1844 = vpop.permute.xlu0 %1843
        %1845 = vrot.lane.b32.xlu0 %v343, 90
        %v1846 = vpop.permute.xlu0 %1845
        %1847 = vrot.lane.b32.xlu0 %v344, 90
        %v1848 = vpop.permute.xlu0 %1847
        %vm1849 = vcmask 736256
        %v1850 = vsel %vm1849, %v1838, %v1840
        %v1851 = vsel %vm1849, %v1840, %v1842
        %v1852 = vsel %vm1849, %v1844, %v1846
        %v1853 = vsel %vm1849, %v1846, %v1848
        %v1861 = vsel %vm377, %v1835, 0
        %v1864 = vsel %vm377, %v1836, 0
        %1866 = vmatprep.subr.mxu0 %v1851
        %1867 = vmatpush1.msra.mxu0 %v1850
        %1868 = vmatprep.subr.mxu0 %v1853
        %1869 = vmatpush1.msra.mxu0 %v1852
        %1870 = vmatprep.subr.mxu0 0.0
        %1871 = vmatpush1.msra.mxu0 0.0
        %1872 = vmatprep.subr.mxu0 0.0
        %1873 = vmatpush1.msra.mxu0 0.0
        %1874 = vmatprep.subr.mxu0 0.0
        %1875 = vmatpush1.msra.mxu0 0.0
        %1876 = vmatprep.subr.mxu0 0.0
        %1877 = vmatpush1.msra.mxu0 0.0
        %1878 = vmatprep.subr.mxu0 0.0
        %1879 = vmatpush1.msra.mxu0 0.0
        %1880 = vmatprep.subr.mxu0 0.0
        %1881 = vmatpush1.msra.mxu0 0.0
        %1882 = vmatprep.subr.mxu0 0.0
        %1883 = vmatpush1.msra.mxu0 0.0
        %1884 = vmatprep.subr.mxu0 0.0
        %1885 = vmatpush1.msra.mxu0 0.0
        %1886 = vmatprep.subr.mxu0 0.0
        %1887 = vmatpush1.msra.mxu0 0.0
        %1888 = vmatprep.subr.mxu0 0.0
        %1889 = vmatpush1.msra.mxu0 0.0
        %1890 = vmatprep.subr.mxu0 0.0
        %1891 = vmatpush1.msra.mxu0 0.0
        %1892 = vmatprep.subr.mxu0 0.0
        %1893 = vmatpush1.msra.mxu0 0.0
        %1894 = vmatprep.subr.mxu0 0.0
        %1895 = vmatpush1.msra.mxu0 0.0
        %1896 = vmatprep.subr.mxu0 0.0
        %1897 = vmatpush1.msra.mxu0 0.0
        %1898 = vmatprep.subr.mxu0 0.0
        %1899 = vmatpush1.msra.mxu0 0.0
        %1900 = vmatprep.subr.mxu0 0.0
        %1901 = vmatpush1.msra.mxu0 0.0
        %1902 = vmatprep.subr.mxu0 0.0
        %1903 = vmatpush1.msra.mxu0 0.0
        %1904 = vmatprep.subr.mxu0 0.0
        %1905 = vmatpush1.msra.mxu0 0.0
        %1906 = vmatprep.subr.mxu0 0.0
        %1907 = vmatpush1.msra.mxu0 0.0
        %1908 = vmatprep.subr.mxu0 0.0
        %1909 = vmatpush1.msra.mxu0 0.0
        %1910 = vmatprep.subr.mxu0 0.0
        %1911 = vmatpush1.msra.mxu0 0.0
        %1912 = vmatprep.subr.mxu0 0.0
        %1913 = vmatpush1.msra.mxu0 0.0
        %1914 = vmatprep.subr.mxu0 0.0
        %1915 = vmatpush1.msra.mxu0 0.0
        %1916 = vmatprep.subr.mxu0 0.0
        %1917 = vmatpush1.msra.mxu0 0.0
        %1918 = vmatprep.subr.mxu0 0.0
        %1919 = vmatpush1.msra.mxu0 0.0
        %1920 = vmatprep.subr.mxu0 0.0
        %1921 = vmatpush1.msra.mxu0 0.0
        %1922 = vmatprep.subr.mxu0 0.0
        %1923 = vmatpush1.msra.mxu0 0.0
        %1924 = vmatprep.subr.mxu0 0.0
        %1925 = vmatpush1.msra.mxu0 0.0
        %1926 = vmatprep.subr.mxu0 0.0
        %1927 = vmatpush1.msra.mxu0 0.0
        %1928 = vmatprep.subr.mxu0 0.0
        %1929 = vmatpush1.msra.mxu0 0.0
        %1930 = vmatprep.mubr.f32.mxu0 0.0
        %1931 = vmatmul.mubr.f32.gmra.mrb[0].mxu0 %v1861
        %v1932 = vpop.f32.mrb[0].mxu0
        %v1933 = vadd.f32 0.0, %v1932
        %v1934 = vpop.f32.mrb[0].mxu0
        %v1935 = vadd.f32 0.0, %v1934
        %1936 = vmatprep.mubr.f32.mxu0 0.0
        %1937 = vmatmul.mubr.f32.gmra.mrb[0].mxu0 %v1864
        %v1938 = vpop.f32.mrb[0].mxu0
        %v1939 = vadd.f32 0.0, %v1938
        %v1940 = vpop.f32.mrb[0].mxu0
        %v1941 = vadd.f32 0.0, %v1940
        %1942 = vdwg.mxu0
        %1943 = vmatprep.subr.mxu0 0.0
        %1944 = vmatpush1.msra.mxu0 %v1842
        %1945 = vmatprep.subr.mxu0 0.0
        %1946 = vmatpush1.msra.mxu0 %v1848
        %1947 = vmatprep.subr.mxu0 0.0
        %1948 = vmatpush1.msra.mxu0 0.0
        %1949 = vmatprep.subr.mxu0 0.0
        %1950 = vmatpush1.msra.mxu0 0.0
        %1951 = vmatprep.subr.mxu0 0.0
        %1952 = vmatpush1.msra.mxu0 0.0
        %1953 = vmatprep.subr.mxu0 0.0
        %1954 = vmatpush1.msra.mxu0 0.0
        %1955 = vmatprep.subr.mxu0 0.0
        %1956 = vmatpush1.msra.mxu0 0.0
        %1957 = vmatprep.subr.mxu0 0.0
        %1958 = vmatpush1.msra.mxu0 0.0
        %1959 = vmatprep.subr.mxu0 0.0
        %1960 = vmatpush1.msra.mxu0 0.0
        %1961 = vmatprep.subr.mxu0 0.0
        %1962 = vmatpush1.msra.mxu0 0.0
        %1963 = vmatprep.subr.mxu0 0.0
        %1964 = vmatpush1.msra.mxu0 0.0
        %1965 = vmatprep.subr.mxu0 0.0
        %1966 = vmatpush1.msra.mxu0 0.0
        %1967 = vmatprep.subr.mxu0 0.0
        %1968 = vmatpush1.msra.mxu0 0.0
        %1969 = vmatprep.subr.mxu0 0.0
        %1970 = vmatpush1.msra.mxu0 0.0
        %1971 = vmatprep.subr.mxu0 0.0
        %1972 = vmatpush1.msra.mxu0 0.0
        %1973 = vmatprep.subr.mxu0 0.0
        %1974 = vmatpush1.msra.mxu0 0.0
        %1975 = vmatprep.subr.mxu0 0.0
        %1976 = vmatpush1.msra.mxu0 0.0
        %1977 = vmatprep.subr.mxu0 0.0
        %1978 = vmatpush1.msra.mxu0 0.0
        %1979 = vmatprep.subr.mxu0 0.0
        %1980 = vmatpush1.msra.mxu0 0.0
        %1981 = vmatprep.subr.mxu0 0.0
        %1982 = vmatpush1.msra.mxu0 0.0
        %1983 = vmatprep.subr.mxu0 0.0
        %1984 = vmatpush1.msra.mxu0 0.0
        %1985 = vmatprep.subr.mxu0 0.0
        %1986 = vmatpush1.msra.mxu0 0.0
        %1987 = vmatprep.subr.mxu0 0.0
        %1988 = vmatpush1.msra.mxu0 0.0
        %1989 = vmatprep.subr.mxu0 0.0
        %1990 = vmatpush1.msra.mxu0 0.0
        %1991 = vmatprep.subr.mxu0 0.0
        %1992 = vmatpush1.msra.mxu0 0.0
        %1993 = vmatprep.subr.mxu0 0.0
        %1994 = vmatpush1.msra.mxu0 0.0
        %1995 = vmatprep.subr.mxu0 0.0
        %1996 = vmatpush1.msra.mxu0 0.0
        %1997 = vmatprep.subr.mxu0 0.0
        %1998 = vmatpush1.msra.mxu0 0.0
        %1999 = vmatprep.subr.mxu0 0.0
        %2000 = vmatpush1.msra.mxu0 0.0
        %2001 = vmatprep.subr.mxu0 0.0
        %2002 = vmatpush1.msra.mxu0 0.0
        %2003 = vmatprep.subr.mxu0 0.0
        %2004 = vmatpush1.msra.mxu0 0.0
        %2005 = vmatprep.subr.mxu0 0.0
        %2006 = vmatpush1.msra.mxu0 0.0
        %2007 = vmatprep.mubr.f32.mxu0 0.0
        %2008 = vmatmul.mubr.f32.gmra.mrb[0].mxu0 %v1861
        %v2009 = vpop.f32.mrb[0].mxu0
        %v2010 = vadd.f32 0.0, %v2009
        %v2011 = vpop.f32.mrb[0].mxu0
        %2012 = vmatprep.mubr.f32.mxu0 0.0
        %2013 = vmatmul.mubr.f32.gmra.mrb[0].mxu0 %v1864
        %v2014 = vpop.f32.mrb[0].mxu0
        %v2015 = vadd.f32 0.0, %v2014
        %v2016 = vpop.f32.mrb[0].mxu0
        %2017 = vdwg.mxu0
        %v2018 = vadd.f32 %v1828, %v1933
        %v2019 = vadd.f32 %v1829, %v1935
        %v2020 = vadd.f32 %v1830, %v2010
        %v2021 = vadd.f32 %v1831, %v1939
        %v2022 = vadd.f32 %v1832, %v1941
        %v2023 = vadd.f32 %v1833, %v2015
        %2025 = vset.pattern.permute.xlu0 0
        %2026 = vperm.xlu0 %2025, %v272
        %v2027 = vpop.permute.xlu0 %2026
        %2030 = vset.pattern.permute.xlu0 0
        %2031 = vperm.xlu0 %2030, %v273
        %v2032 = vpop.permute.xlu0 %2031
        %v2034 = vadd.f32 %v2018, %v2027
        %v2035 = vadd.f32 %v2019, %v2027
        %v2036 = vadd.f32 %v2020, %v2027
        %v2037 = vadd.f32 %v2021, %v2032
        %v2038 = vadd.f32 %v2022, %v2032
        %v2039 = vadd.f32 %v2023, %v2032
        %v2040 = vmul.f32 %v2034, %v334
        %v2041 = vmul.f32 %v2035, %v335
        %v2042 = vmul.f32 %v2036, %v336
        %v2043 = vmul.f32 %v2037, %v334
        %v2044 = vmul.f32 %v2038, %v335
        %v2045 = vmul.f32 %v2039, %v336
        %v2046 = vadd.f32 %v2040, %v2041
        %vm2047 = vcmask 261120
        %v2048 = vsel %vm2047, %v2042, 0.0
        %v2049 = vadd.f32 %v2046, %v2048
        %2050 = vadd.xlane.f32.xlu0 %v2049
        %v2051 = vpop.xlane.xlu0 %2050
        %v2052 = vadd.f32 %v2043, %v2044
        %v2053 = vsel %vm2047, %v2045, 0.0
        %v2054 = vadd.f32 %v2052, %v2053
        %2055 = vadd.xlane.f32.xlu0 %v2054
        %v2056 = vpop.xlane.xlu0 %2055
        %v2057 = vmul.f32 %v2040, %v2040
        %v2058 = vmul.f32 %v2041, %v2041
        %v2059 = vmul.f32 %v2042, %v2042
        %v2060 = vmul.f32 %v2043, %v2043
        %v2061 = vmul.f32 %v2044, %v2044
        %v2062 = vmul.f32 %v2045, %v2045
        %v2063 = vadd.f32 %v2057, %v2058
        %v2064 = vsel %vm2047, %v2059, 0.0
        %v2065 = vadd.f32 %v2063, %v2064
        %2066 = vadd.xlane.f32.xlu0 %v2065
        %v2067 = vpop.xlane.xlu0 %2066
        %v2068 = vadd.f32 %v2060, %v2061
        %v2069 = vsel %vm2047, %v2062, 0.0
        %v2070 = vadd.f32 %v2068, %v2069
        %2071 = vadd.xlane.f32.xlu0 %v2070
        %v2072 = vpop.xlane.xlu0 %2071
        %vm2073 = vcmask 7168
        %v2074 = vsel %vm2073, %v2051, %v2067
        %v2075 = vsel %vm2073, %v2056, %v2072
        %v2077 = vsel %vm377, %v274, 0
        %v2080 = vsel %vm377, %v275, 0
        %2082 = vmatprep.subr.mxu0 0.0
        %2083 = vmatpush1.msra.mxu0 %v2074
        %2084 = vmatprep.subr.mxu0 0.0
        %2085 = vmatpush1.msra.mxu0 %v2075
        %2086 = vmatprep.subr.mxu0 0.0
        %2087 = vmatpush1.msra.mxu0 0.0
        %2088 = vmatprep.subr.mxu0 0.0
        %2089 = vmatpush1.msra.mxu0 0.0
        %2090 = vmatprep.subr.mxu0 0.0
        %2091 = vmatpush1.msra.mxu0 0.0
        %2092 = vmatprep.subr.mxu0 0.0
        %2093 = vmatpush1.msra.mxu0 0.0
        %2094 = vmatprep.subr.mxu0 0.0
        %2095 = vmatpush1.msra.mxu0 0.0
        %2096 = vmatprep.subr.mxu0 0.0
        %2097 = vmatpush1.msra.mxu0 0.0
        %2098 = vmatprep.subr.mxu0 0.0
        %2099 = vmatpush1.msra.mxu0 0.0
        %2100 = vmatprep.subr.mxu0 0.0
        %2101 = vmatpush1.msra.mxu0 0.0
        %2102 = vmatprep.subr.mxu0 0.0
        %2103 = vmatpush1.msra.mxu0 0.0
        %2104 = vmatprep.subr.mxu0 0.0
        %2105 = vmatpush1.msra.mxu0 0.0
        %2106 = vmatprep.subr.mxu0 0.0
        %2107 = vmatpush1.msra.mxu0 0.0
        %2108 = vmatprep.subr.mxu0 0.0
        %2109 = vmatpush1.msra.mxu0 0.0
        %2110 = vmatprep.subr.mxu0 0.0
        %2111 = vmatpush1.msra.mxu0 0.0
        %2112 = vmatprep.subr.mxu0 0.0
        %2113 = vmatpush1.msra.mxu0 0.0
        %2114 = vmatprep.subr.mxu0 0.0
        %2115 = vmatpush1.msra.mxu0 0.0
        %2116 = vmatprep.subr.mxu0 0.0
        %2117 = vmatpush1.msra.mxu0 0.0
        %2118 = vmatprep.subr.mxu0 0.0
        %2119 = vmatpush1.msra.mxu0 0.0
        %2120 = vmatprep.subr.mxu0 0.0
        %2121 = vmatpush1.msra.mxu0 0.0
        %2122 = vmatprep.subr.mxu0 0.0
        %2123 = vmatpush1.msra.mxu0 0.0
        %2124 = vmatprep.subr.mxu0 0.0
        %2125 = vmatpush1.msra.mxu0 0.0
        %2126 = vmatprep.subr.mxu0 0.0
        %2127 = vmatpush1.msra.mxu0 0.0
        %2128 = vmatprep.subr.mxu0 0.0
        %2129 = vmatpush1.msra.mxu0 0.0
        %2130 = vmatprep.subr.mxu0 0.0
        %2131 = vmatpush1.msra.mxu0 0.0
        %2132 = vmatprep.subr.mxu0 0.0
        %2133 = vmatpush1.msra.mxu0 0.0
        %2134 = vmatprep.subr.mxu0 0.0
        %2135 = vmatpush1.msra.mxu0 0.0
        %2136 = vmatprep.subr.mxu0 0.0
        %2137 = vmatpush1.msra.mxu0 0.0
        %2138 = vmatprep.subr.mxu0 0.0
        %2139 = vmatpush1.msra.mxu0 0.0
        %2140 = vmatprep.subr.mxu0 0.0
        %2141 = vmatpush1.msra.mxu0 0.0
        %2142 = vmatprep.subr.mxu0 0.0
        %2143 = vmatpush1.msra.mxu0 0.0
        %2144 = vmatprep.subr.mxu0 0.0
        %2145 = vmatpush1.msra.mxu0 0.0
        %2146 = vmatprep.mubr.f32.mxu0 0.0
        %2147 = vmatmul.mubr.f32.gmra.mrb[0].mxu0 %v2077
        %v2148 = vpop.f32.mrb[0].mxu0
        %v2149 = vadd.f32 0.0, %v2148
        %v2150 = vpop.f32.mrb[0].mxu0
        %2151 = vmatprep.mubr.f32.mxu0 0.0
        %2152 = vmatmul.mubr.f32.gmra.mrb[0].mxu0 %v2080
        %v2153 = vpop.f32.mrb[0].mxu0
        %v2154 = vadd.f32 0.0, %v2153
        %v2155 = vpop.f32.mrb[0].mxu0
        %2156 = vdwg.mxu0
        %v2157 = vmul.f32 %v2149, %v2149
        %v2158 = vmul.f32 %v2154, %v2154
        %2161 = vrot.lane.b32.xlu0 %v2157, 1
        %v2162 = vpop.permute.xlu0 %2161
        %2163 = vrot.lane.b32.xlu0 %v2158, 1
        %v2164 = vpop.permute.xlu0 %2163
        %v2167 = vsub.f32 %v2149, %v2162
        %v2168 = vsub.f32 %v2154, %v2164
        %v2169 = vmax.f32 %v2167, 0.0
        %v2170 = vmax.f32 %v2168, 0.0
        %2172 = vset.pattern.permute.xlu0 0
        %2173 = vperm.xlu0 %2172, %v2149
        %v2174 = vpop.permute.xlu0 %2173
        %2177 = vset.pattern.permute.xlu0 0
        %2178 = vperm.xlu0 %2177, %v2154
        %v2179 = vpop.permute.xlu0 %2178
        %v2181 = vsub.f32 %v2034, %v2174
        %v2182 = vsub.f32 %v2035, %v2174
        %v2183 = vsub.f32 %v2036, %v2174
        %v2184 = vsub.f32 %v2037, %v2179
        %v2185 = vsub.f32 %v2038, %v2179
        %v2186 = vsub.f32 %v2039, %v2179
        %v2187 = vadd.f32 %v2169, 1e-05
        %v2188 = vadd.f32 %v2170, 1e-05
        %v2189 = vrsqrt.pop %v2187
        %v2190 = vrsqrt.pop %v2188
        %2192 = vset.pattern.permute.xlu0 1
        %2193 = vperm.xlu0 %2192, %v2189
        %v2194 = vpop.permute.xlu0 %2193
        %2197 = vset.pattern.permute.xlu0 1
        %2198 = vperm.xlu0 %2197, %v2190
        %v2199 = vpop.permute.xlu0 %2198
        %v2201 = vmul.f32 %v2181, %v2194
        %v2202 = vmul.f32 %v2182, %v2194
        %v2203 = vmul.f32 %v2183, %v2194
        %v2204 = vmul.f32 %v2184, %v2199
        %v2205 = vmul.f32 %v2185, %v2199
        %v2206 = vmul.f32 %v2186, %v2199
        %2207 = vset.pattern.permute.xlu0 1
        %2208 = vperm.xlu0 %2207, %v272
        %v2209 = vpop.permute.xlu0 %2208
        %2211 = vset.pattern.permute.xlu0 1
        %2212 = vperm.xlu0 %2211, %v273
        %v2213 = vpop.permute.xlu0 %2212
        %v2215 = vmul.f32 %v2201, %v2209
        %v2216 = vmul.f32 %v2202, %v2209
        %v2217 = vmul.f32 %v2203, %v2209
        %v2218 = vmul.f32 %v2204, %v2213
        %v2219 = vmul.f32 %v2205, %v2213
        %v2220 = vmul.f32 %v2206, %v2213
        %2221 = vset.pattern.permute.xlu0 2
        %2222 = vperm.xlu0 %2221, %v272
        %v2223 = vpop.permute.xlu0 %2222
        %2225 = vset.pattern.permute.xlu0 2
        %2226 = vperm.xlu0 %2225, %v273
        %v2227 = vpop.permute.xlu0 %2226
        %v2229 = vadd.f32 %v2215, %v2223
        %v2230 = vadd.f32 %v2216, %v2223
        %v2231 = vadd.f32 %v2217, %v2223
        %v2232 = vadd.f32 %v2218, %v2227
        %v2233 = vadd.f32 %v2219, %v2227
        %v2234 = vadd.f32 %v2220, %v2227
        %v2235 = vmax.f32 %v2229, 0.0
        %v2236 = vmax.f32 %v2230, 0.0
        %v2237 = vmax.f32 %v2231, 0.0
        %v2238 = vmax.f32 %v2232, 0.0
        %v2239 = vmax.f32 %v2233, 0.0
        %v2240 = vmax.f32 %v2234, 0.0
        %v2241 = vmul.f32 %v2235, %v334
        %v2242 = vmul.f32 %v2236, %v335
        %v2243 = vmul.f32 %v2237, %v336
        %v2244 = vmul.f32 %v2238, %v334
        %v2245 = vmul.f32 %v2239, %v335
        %v2246 = vmul.f32 %v2240, %v336
        %vm2247 = vcmask 154624
        %2248 = vst.msk [vmem:[#allocation2] sm:$0xff] %vm2247, 0.0
        %2249 = vst.msk [vmem:[#allocation2 + $0x18] sm:$0xff] %vm2247, 0.0
        %vm2250 = vcmask 572824
        %2251 = vst.msk [vmem:[#allocation2 + $0x10] sm:$0xff] %vm2250, 0.0
        %2252 = vst.msk [vmem:[#allocation2 + $0x28] sm:$0xff] %vm2250, 0.0
        %2259 = vrot.lane.b32.xlu0 %v2241, 19
        %v2260 = vpop.permute.xlu0 %2259
        %2261 = vrot.lane.b32.xlu0 %v2242, 19
        %v2262 = vpop.permute.xlu0 %2261
        %2263 = vrot.lane.b32.xlu0 %v2243, 19
        %v2264 = vpop.permute.xlu0 %2263
        %2265 = vrot.lane.b32.xlu0 %v2244, 19
        %v2266 = vpop.permute.xlu0 %2265
        %2267 = vrot.lane.b32.xlu0 %v2245, 19
        %v2268 = vpop.permute.xlu0 %2267
        %2269 = vrot.lane.b32.xlu0 %v2246, 19
        %v2270 = vpop.permute.xlu0 %2269
        %v2271 = vsel %vm2247, %v2260, %v2262
        %v2272 = vsel %vm2247, %v2262, %v2264
        %v2273 = vsel %vm2247, %v2266, %v2268
        %v2274 = vsel %vm2247, %v2268, %v2270
        %vm2281 = vcmask 1047704
        %2282 = vst.msk [vmem:[#allocation2] sm:$0xff] %vm2281, %v2260
        %2283 = vst [vmem:[#allocation2 + $0x8] sm:$0xff] %v2271
        %vm2284 = vcmask 416768
        %2285 = vst.msk [vmem:[#allocation2 + $0x10] sm:$0xff] %vm2284, %v2272
        %2286 = vst.msk [vmem:[#allocation2 + $0x18] sm:$0xff] %vm2281, %v2266
        %2287 = vst [vmem:[#allocation2 + $0x20] sm:$0xff] %v2273
        %2288 = vst.msk [vmem:[#allocation2 + $0x28] sm:$0xff] %vm2284, %v2274
        %v2289 = vld [vmem:[#allocation8] sm:$0xff]
        %v2290 = vld [vmem:[#allocation8 + $0x8] sm:$0xff]
        %v2291 = vld [vmem:[#allocation2] sm:$0xff]
        %v2292 = vld [vmem:[#allocation2 + $0x8] sm:$0xff]
        %v2293 = vld [vmem:[#allocation2 + $0x10] sm:$0xff]
        %v2294 = vld [vmem:[#allocation2 + $0x18] sm:$0xff]
        %v2295 = vld [vmem:[#allocation2 + $0x20] sm:$0xff]
        %v2296 = vld [vmem:[#allocation2 + $0x28] sm:$0xff]
        %s2297 = scalar_lea.vmem [#allocation8], 16
        %v2298 = vld [vmem:[%s2297] sm:$0xff]
        %v2299 = vld [vmem:[%s2297 + $0x8] sm:$0xff]
        %2306 = vrot.lane.b32.xlu0 %v2291, 127
        %v2307 = vpop.permute.xlu0 %2306
        %2308 = vrot.lane.b32.xlu0 %v2292, 127
        %v2309 = vpop.permute.xlu0 %2308
        %2310 = vrot.lane.b32.xlu0 %v2293, 127
        %v2311 = vpop.permute.xlu0 %2310
        %2312 = vrot.lane.b32.xlu0 %v2294, 127
        %v2313 = vpop.permute.xlu0 %2312
        %2314 = vrot.lane.b32.xlu0 %v2295, 127
        %v2315 = vpop.permute.xlu0 %2314
        %2316 = vrot.lane.b32.xlu0 %v2296, 127
        %v2317 = vpop.permute.xlu0 %2316
        %v2318 = vsel %vm366, %v2307, %v2309
        %v2319 = vsel %vm366, %v2309, %v2311
        %v2320 = vsel %vm366, %v2313, %v2315
        %v2321 = vsel %vm366, %v2315, %v2317
        %v2329 = vsel %vm377, %v2298, 0
        %v2332 = vsel %vm377, %v2299, 0
        %2334 = vmatprep.subr.mxu0 %v2319
        %2335 = vmatpush1.msra.mxu0 %v2318
        %2336 = vmatprep.subr.mxu0 %v2321
        %2337 = vmatpush1.msra.mxu0 %v2320
        %2338 = vmatprep.subr.mxu0 0.0
        %2339 = vmatpush1.msra.mxu0 0.0
        %2340 = vmatprep.subr.mxu0 0.0
        %2341 = vmatpush1.msra.mxu0 0.0
        %2342 = vmatprep.subr.mxu0 0.0
        %2343 = vmatpush1.msra.mxu0 0.0
        %2344 = vmatprep.subr.mxu0 0.0
        %2345 = vmatpush1.msra.mxu0 0.0
        %2346 = vmatprep.subr.mxu0 0.0
        %2347 = vmatpush1.msra.mxu0 0.0
        %2348 = vmatprep.subr.mxu0 0.0
        %2349 = vmatpush1.msra.mxu0 0.0
        %2350 = vmatprep.subr.mxu0 0.0
        %2351 = vmatpush1.msra.mxu0 0.0
        %2352 = vmatprep.subr.mxu0 0.0
        %2353 = vmatpush1.msra.mxu0 0.0
        %2354 = vmatprep.subr.mxu0 0.0
        %2355 = vmatpush1.msra.mxu0 0.0
        %2356 = vmatprep.subr.mxu0 0.0
        %2357 = vmatpush1.msra.mxu0 0.0
        %2358 = vmatprep.subr.mxu0 0.0
        %2359 = vmatpush1.msra.mxu0 0.0
        %2360 = vmatprep.subr.mxu0 0.0
        %2361 = vmatpush1.msra.mxu0 0.0
        %2362 = vmatprep.subr.mxu0 0.0
        %2363 = vmatpush1.msra.mxu0 0.0
        %2364 = vmatprep.subr.mxu0 0.0
        %2365 = vmatpush1.msra.mxu0 0.0
        %2366 = vmatprep.subr.mxu0 0.0
        %2367 = vmatpush1.msra.mxu0 0.0
        %2368 = vmatprep.subr.mxu0 0.0
        %2369 = vmatpush1.msra.mxu0 0.0
        %2370 = vmatprep.subr.mxu0 0.0
        %2371 = vmatpush1.msra.mxu0 0.0
        %2372 = vmatprep.subr.mxu0 0.0
        %2373 = vmatpush1.msra.mxu0 0.0
        %2374 = vmatprep.subr.mxu0 0.0
        %2375 = vmatpush1.msra.mxu0 0.0
        %2376 = vmatprep.subr.mxu0 0.0
        %2377 = vmatpush1.msra.mxu0 0.0
        %2378 = vmatprep.subr.mxu0 0.0
        %2379 = vmatpush1.msra.mxu0 0.0
        %2380 = vmatprep.subr.mxu0 0.0
        %2381 = vmatpush1.msra.mxu0 0.0
        %2382 = vmatprep.subr.mxu0 0.0
        %2383 = vmatpush1.msra.mxu0 0.0
        %2384 = vmatprep.subr.mxu0 0.0
        %2385 = vmatpush1.msra.mxu0 0.0
        %2386 = vmatprep.subr.mxu0 0.0
        %2387 = vmatpush1.msra.mxu0 0.0
        %2388 = vmatprep.subr.mxu0 0.0
        %2389 = vmatpush1.msra.mxu0 0.0
        %2390 = vmatprep.subr.mxu0 0.0
        %2391 = vmatpush1.msra.mxu0 0.0
        %2392 = vmatprep.subr.mxu0 0.0
        %2393 = vmatpush1.msra.mxu0 0.0
        %2394 = vmatprep.subr.mxu0 0.0
        %2395 = vmatpush1.msra.mxu0 0.0
        %2396 = vmatprep.subr.mxu0 0.0
        %2397 = vmatpush1.msra.mxu0 0.0
        %2398 = vmatprep.mubr.f32.mxu0 0.0
        %2399 = vmatmul.mubr.f32.gmra.mrb[0].mxu0 %v2329
        %v2400 = vpop.f32.mrb[0].mxu0
        %v2401 = vadd.f32 0.0, %v2400
        %v2402 = vpop.f32.mrb[0].mxu0
        %v2403 = vadd.f32 0.0, %v2402
        %2404 = vmatprep.mubr.f32.mxu0 0.0
        %2405 = vmatmul.mubr.f32.gmra.mrb[0].mxu0 %v2332
        %v2406 = vpop.f32.mrb[0].mxu0
        %v2407 = vadd.f32 0.0, %v2406
        %v2408 = vpop.f32.mrb[0].mxu0
        %v2409 = vadd.f32 0.0, %v2408
        %2410 = vdwg.mxu0
        %2411 = vmatprep.subr.mxu0 0.0
        %2412 = vmatpush1.msra.mxu0 %v2311
        %2413 = vmatprep.subr.mxu0 0.0
        %2414 = vmatpush1.msra.mxu0 %v2317
        %2415 = vmatprep.subr.mxu0 0.0
        %2416 = vmatpush1.msra.mxu0 0.0
        %2417 = vmatprep.subr.mxu0 0.0
        %2418 = vmatpush1.msra.mxu0 0.0
        %2419 = vmatprep.subr.mxu0 0.0
        %2420 = vmatpush1.msra.mxu0 0.0
        %2421 = vmatprep.subr.mxu0 0.0
        %2422 = vmatpush1.msra.mxu0 0.0
        %2423 = vmatprep.subr.mxu0 0.0
        %2424 = vmatpush1.msra.mxu0 0.0
        %2425 = vmatprep.subr.mxu0 0.0
        %2426 = vmatpush1.msra.mxu0 0.0
        %2427 = vmatprep.subr.mxu0 0.0
        %2428 = vmatpush1.msra.mxu0 0.0
        %2429 = vmatprep.subr.mxu0 0.0
        %2430 = vmatpush1.msra.mxu0 0.0
        %2431 = vmatprep.subr.mxu0 0.0
        %2432 = vmatpush1.msra.mxu0 0.0
        %2433 = vmatprep.subr.mxu0 0.0
        %2434 = vmatpush1.msra.mxu0 0.0
        %2435 = vmatprep.subr.mxu0 0.0
        %2436 = vmatpush1.msra.mxu0 0.0
        %2437 = vmatprep.subr.mxu0 0.0
        %2438 = vmatpush1.msra.mxu0 0.0
        %2439 = vmatprep.subr.mxu0 0.0
        %2440 = vmatpush1.msra.mxu0 0.0
        %2441 = vmatprep.subr.mxu0 0.0
        %2442 = vmatpush1.msra.mxu0 0.0
        %2443 = vmatprep.subr.mxu0 0.0
        %2444 = vmatpush1.msra.mxu0 0.0
        %2445 = vmatprep.subr.mxu0 0.0
        %2446 = vmatpush1.msra.mxu0 0.0
        %2447 = vmatprep.subr.mxu0 0.0
        %2448 = vmatpush1.msra.mxu0 0.0
        %2449 = vmatprep.subr.mxu0 0.0
        %2450 = vmatpush1.msra.mxu0 0.0
        %2451 = vmatprep.subr.mxu0 0.0
        %2452 = vmatpush1.msra.mxu0 0.0
        %2453 = vmatprep.subr.mxu0 0.0
        %2454 = vmatpush1.msra.mxu0 0.0
        %2455 = vmatprep.subr.mxu0 0.0
        %2456 = vmatpush1.msra.mxu0 0.0
        %2457 = vmatprep.subr.mxu0 0.0
        %2458 = vmatpush1.msra.mxu0 0.0
        %2459 = vmatprep.subr.mxu0 0.0
        %2460 = vmatpush1.msra.mxu0 0.0
        %2461 = vmatprep.subr.mxu0 0.0
        %2462 = vmatpush1.msra.mxu0 0.0
        %2463 = vmatprep.subr.mxu0 0.0
        %2464 = vmatpush1.msra.mxu0 0.0
        %2465 = vmatprep.subr.mxu0 0.0
        %2466 = vmatpush1.msra.mxu0 0.0
        %2467 = vmatprep.subr.mxu0 0.0
        %2468 = vmatpush1.msra.mxu0 0.0
        %2469 = vmatprep.subr.mxu0 0.0
        %2470 = vmatpush1.msra.mxu0 0.0
        %2471 = vmatprep.subr.mxu0 0.0
        %2472 = vmatpush1.msra.mxu0 0.0
        %2473 = vmatprep.subr.mxu0 0.0
        %2474 = vmatpush1.msra.mxu0 0.0
        %2475 = vmatprep.mubr.f32.mxu0 0.0
        %2476 = vmatmul.mubr.f32.gmra.mrb[0].mxu0 %v2329
        %v2477 = vpop.f32.mrb[0].mxu0
        %v2478 = vadd.f32 0.0, %v2477
        %v2479 = vpop.f32.mrb[0].mxu0
        %2480 = vmatprep.mubr.f32.mxu0 0.0
        %2481 = vmatmul.mubr.f32.gmra.mrb[0].mxu0 %v2332
        %v2482 = vpop.f32.mrb[0].mxu0
        %v2483 = vadd.f32 0.0, %v2482
        %v2484 = vpop.f32.mrb[0].mxu0
        %2485 = vdwg.mxu0
        %v2487 = vsel %vm377, %v2289, 0
        %v2490 = vsel %vm377, %v2290, 0
        %2492 = vmatprep.subr.mxu0 %v2292
        %2493 = vmatpush1.msra.mxu0 %v2291
        %2494 = vmatprep.subr.mxu0 %v2295
        %2495 = vmatpush1.msra.mxu0 %v2294
        %2496 = vmatprep.subr.mxu0 0.0
        %2497 = vmatpush1.msra.mxu0 0.0
        %2498 = vmatprep.subr.mxu0 0.0
        %2499 = vmatpush1.msra.mxu0 0.0
        %2500 = vmatprep.subr.mxu0 0.0
        %2501 = vmatpush1.msra.mxu0 0.0
        %2502 = vmatprep.subr.mxu0 0.0
        %2503 = vmatpush1.msra.mxu0 0.0
        %2504 = vmatprep.subr.mxu0 0.0
        %2505 = vmatpush1.msra.mxu0 0.0
        %2506 = vmatprep.subr.mxu0 0.0
        %2507 = vmatpush1.msra.mxu0 0.0
        %2508 = vmatprep.subr.mxu0 0.0
        %2509 = vmatpush1.msra.mxu0 0.0
        %2510 = vmatprep.subr.mxu0 0.0
        %2511 = vmatpush1.msra.mxu0 0.0
        %2512 = vmatprep.subr.mxu0 0.0
        %2513 = vmatpush1.msra.mxu0 0.0
        %2514 = vmatprep.subr.mxu0 0.0
        %2515 = vmatpush1.msra.mxu0 0.0
        %2516 = vmatprep.subr.mxu0 0.0
        %2517 = vmatpush1.msra.mxu0 0.0
        %2518 = vmatprep.subr.mxu0 0.0
        %2519 = vmatpush1.msra.mxu0 0.0
        %2520 = vmatprep.subr.mxu0 0.0
        %2521 = vmatpush1.msra.mxu0 0.0
        %2522 = vmatprep.subr.mxu0 0.0
        %2523 = vmatpush1.msra.mxu0 0.0
        %2524 = vmatprep.subr.mxu0 0.0
        %2525 = vmatpush1.msra.mxu0 0.0
        %2526 = vmatprep.subr.mxu0 0.0
        %2527 = vmatpush1.msra.mxu0 0.0
        %2528 = vmatprep.subr.mxu0 0.0
        %2529 = vmatpush1.msra.mxu0 0.0
        %2530 = vmatprep.subr.mxu0 0.0
        %2531 = vmatpush1.msra.mxu0 0.0
        %2532 = vmatprep.subr.mxu0 0.0
        %2533 = vmatpush1.msra.mxu0 0.0
        %2534 = vmatprep.subr.mxu0 0.0
        %2535 = vmatpush1.msra.mxu0 0.0
        %2536 = vmatprep.subr.mxu0 0.0
        %2537 = vmatpush1.msra.mxu0 0.0
        %2538 = vmatprep.subr.mxu0 0.0
        %2539 = vmatpush1.msra.mxu0 0.0
        %2540 = vmatprep.subr.mxu0 0.0
        %2541 = vmatpush1.msra.mxu0 0.0
        %2542 = vmatprep.subr.mxu0 0.0
        %2543 = vmatpush1.msra.mxu0 0.0
        %2544 = vmatprep.subr.mxu0 0.0
        %2545 = vmatpush1.msra.mxu0 0.0
        %2546 = vmatprep.subr.mxu0 0.0
        %2547 = vmatpush1.msra.mxu0 0.0
        %2548 = vmatprep.subr.mxu0 0.0
        %2549 = vmatpush1.msra.mxu0 0.0
        %2550 = vmatprep.subr.mxu0 0.0
        %2551 = vmatpush1.msra.mxu0 0.0
        %2552 = vmatprep.subr.mxu0 0.0
        %2553 = vmatpush1.msra.mxu0 0.0
        %2554 = vmatprep.subr.mxu0 0.0
        %2555 = vmatpush1.msra.mxu0 0.0
        %2556 = vmatprep.mubr.f32.mxu0 0.0
        %2557 = vmatmul.mubr.f32.gmra.mrb[0].mxu0 %v2487
        %v2558 = vpop.f32.mrb[0].mxu0
        %v2559 = vadd.f32 %v2401, %v2558
        %v2560 = vpop.f32.mrb[0].mxu0
        %v2561 = vadd.f32 %v2403, %v2560
        %2562 = vmatprep.mubr.f32.mxu0 0.0
        %2563 = vmatmul.mubr.f32.gmra.mrb[0].mxu0 %v2490
        %v2564 = vpop.f32.mrb[0].mxu0
        %v2565 = vadd.f32 %v2407, %v2564
        %v2566 = vpop.f32.mrb[0].mxu0
        %v2567 = vadd.f32 %v2409, %v2566
        %2568 = vdwg.mxu0
        %2569 = vmatprep.subr.mxu0 0.0
        %2570 = vmatpush1.msra.mxu0 %v2293
        %2571 = vmatprep.subr.mxu0 0.0
        %2572 = vmatpush1.msra.mxu0 %v2296
        %2573 = vmatprep.subr.mxu0 0.0
        %2574 = vmatpush1.msra.mxu0 0.0
        %2575 = vmatprep.subr.mxu0 0.0
        %2576 = vmatpush1.msra.mxu0 0.0
        %2577 = vmatprep.subr.mxu0 0.0
        %2578 = vmatpush1.msra.mxu0 0.0
        %2579 = vmatprep.subr.mxu0 0.0
        %2580 = vmatpush1.msra.mxu0 0.0
        %2581 = vmatprep.subr.mxu0 0.0
        %2582 = vmatpush1.msra.mxu0 0.0
        %2583 = vmatprep.subr.mxu0 0.0
        %2584 = vmatpush1.msra.mxu0 0.0
        %2585 = vmatprep.subr.mxu0 0.0
        %2586 = vmatpush1.msra.mxu0 0.0
        %2587 = vmatprep.subr.mxu0 0.0
        %2588 = vmatpush1.msra.mxu0 0.0
        %2589 = vmatprep.subr.mxu0 0.0
        %2590 = vmatpush1.msra.mxu0 0.0
        %2591 = vmatprep.subr.mxu0 0.0
        %2592 = vmatpush1.msra.mxu0 0.0
        %2593 = vmatprep.subr.mxu0 0.0
        %2594 = vmatpush1.msra.mxu0 0.0
        %2595 = vmatprep.subr.mxu0 0.0
        %2596 = vmatpush1.msra.mxu0 0.0
        %2597 = vmatprep.subr.mxu0 0.0
        %2598 = vmatpush1.msra.mxu0 0.0
        %2599 = vmatprep.subr.mxu0 0.0
        %2600 = vmatpush1.msra.mxu0 0.0
        %2601 = vmatprep.subr.mxu0 0.0
        %2602 = vmatpush1.msra.mxu0 0.0
        %2603 = vmatprep.subr.mxu0 0.0
        %2604 = vmatpush1.msra.mxu0 0.0
        %2605 = vmatprep.subr.mxu0 0.0
        %2606 = vmatpush1.msra.mxu0 0.0
        %2607 = vmatprep.subr.mxu0 0.0
        %2608 = vmatpush1.msra.mxu0 0.0
        %2609 = vmatprep.subr.mxu0 0.0
        %2610 = vmatpush1.msra.mxu0 0.0
        %2611 = vmatprep.subr.mxu0 0.0
        %2612 = vmatpush1.msra.mxu0 0.0
        %2613 = vmatprep.subr.mxu0 0.0
        %2614 = vmatpush1.msra.mxu0 0.0
        %2615 = vmatprep.subr.mxu0 0.0
        %2616 = vmatpush1.msra.mxu0 0.0
        %2617 = vmatprep.subr.mxu0 0.0
        %2618 = vmatpush1.msra.mxu0 0.0
        %2619 = vmatprep.subr.mxu0 0.0
        %2620 = vmatpush1.msra.mxu0 0.0
        %2621 = vmatprep.subr.mxu0 0.0
        %2622 = vmatpush1.msra.mxu0 0.0
        %2623 = vmatprep.subr.mxu0 0.0
        %2624 = vmatpush1.msra.mxu0 0.0
        %2625 = vmatprep.subr.mxu0 0.0
        %2626 = vmatpush1.msra.mxu0 0.0
        %2627 = vmatprep.subr.mxu0 0.0
        %2628 = vmatpush1.msra.mxu0 0.0
        %2629 = vmatprep.subr.mxu0 0.0
        %2630 = vmatpush1.msra.mxu0 0.0
        %2631 = vmatprep.subr.mxu0 0.0
        %2632 = vmatpush1.msra.mxu0 0.0
        %2633 = vmatprep.mubr.f32.mxu0 0.0
        %2634 = vmatmul.mubr.f32.gmra.mrb[0].mxu0 %v2487
        %v2635 = vpop.f32.mrb[0].mxu0
        %v2636 = vadd.f32 %v2478, %v2635
        %v2637 = vpop.f32.mrb[0].mxu0
        %2638 = vmatprep.mubr.f32.mxu0 0.0
        %2639 = vmatmul.mubr.f32.gmra.mrb[0].mxu0 %v2490
        %v2640 = vpop.f32.mrb[0].mxu0
        %v2641 = vadd.f32 %v2483, %v2640
        %v2642 = vpop.f32.mrb[0].mxu0
        %2643 = vdwg.mxu0
        %s2644 = scalar_lea.vmem [#allocation8], 32
        %v2645 = vld [vmem:[%s2644] sm:$0xff]
        %v2646 = vld [vmem:[%s2644 + $0x8] sm:$0xff]
        %2647 = vrot.lane.b32.xlu0 %v2291, 126
        %v2648 = vpop.permute.xlu0 %2647
        %2649 = vrot.lane.b32.xlu0 %v2292, 126
        %v2650 = vpop.permute.xlu0 %2649
        %2651 = vrot.lane.b32.xlu0 %v2293, 126
        %v2652 = vpop.permute.xlu0 %2651
        %2653 = vrot.lane.b32.xlu0 %v2294, 126
        %v2654 = vpop.permute.xlu0 %2653
        %2655 = vrot.lane.b32.xlu0 %v2295, 126
        %v2656 = vpop.permute.xlu0 %2655
        %2657 = vrot.lane.b32.xlu0 %v2296, 126
        %v2658 = vpop.permute.xlu0 %2657
        %v2659 = vsel %vm709, %v2648, %v2650
        %v2660 = vsel %vm709, %v2650, %v2652
        %v2661 = vsel %vm709, %v2654, %v2656
        %v2662 = vsel %vm709, %v2656, %v2658
        %v2670 = vsel %vm377, %v2645, 0
        %v2673 = vsel %vm377, %v2646, 0
        %2675 = vmatprep.subr.mxu0 %v2660
        %2676 = vmatpush1.msra.mxu0 %v2659
        %2677 = vmatprep.subr.mxu0 %v2662
        %2678 = vmatpush1.msra.mxu0 %v2661
        %2679 = vmatprep.subr.mxu0 0.0
        %2680 = vmatpush1.msra.mxu0 0.0
        %2681 = vmatprep.subr.mxu0 0.0
        %2682 = vmatpush1.msra.mxu0 0.0
        %2683 = vmatprep.subr.mxu0 0.0
        %2684 = vmatpush1.msra.mxu0 0.0
        %2685 = vmatprep.subr.mxu0 0.0
        %2686 = vmatpush1.msra.mxu0 0.0
        %2687 = vmatprep.subr.mxu0 0.0
        %2688 = vmatpush1.msra.mxu0 0.0
        %2689 = vmatprep.subr.mxu0 0.0
        %2690 = vmatpush1.msra.mxu0 0.0
        %2691 = vmatprep.subr.mxu0 0.0
        %2692 = vmatpush1.msra.mxu0 0.0
        %2693 = vmatprep.subr.mxu0 0.0
        %2694 = vmatpush1.msra.mxu0 0.0
        %2695 = vmatprep.subr.mxu0 0.0
        %2696 = vmatpush1.msra.mxu0 0.0
        %2697 = vmatprep.subr.mxu0 0.0
        %2698 = vmatpush1.msra.mxu0 0.0
        %2699 = vmatprep.subr.mxu0 0.0
        %2700 = vmatpush1.msra.mxu0 0.0
        %2701 = vmatprep.subr.mxu0 0.0
        %2702 = vmatpush1.msra.mxu0 0.0
        %2703 = vmatprep.subr.mxu0 0.0
        %2704 = vmatpush1.msra.mxu0 0.0
        %2705 = vmatprep.subr.mxu0 0.0
        %2706 = vmatpush1.msra.mxu0 0.0
        %2707 = vmatprep.subr.mxu0 0.0
        %2708 = vmatpush1.msra.mxu0 0.0
        %2709 = vmatprep.subr.mxu0 0.0
        %2710 = vmatpush1.msra.mxu0 0.0
        %2711 = vmatprep.subr.mxu0 0.0
        %2712 = vmatpush1.msra.mxu0 0.0
        %2713 = vmatprep.subr.mxu0 0.0
        %2714 = vmatpush1.msra.mxu0 0.0
        %2715 = vmatprep.subr.mxu0 0.0
        %2716 = vmatpush1.msra.mxu0 0.0
        %2717 = vmatprep.subr.mxu0 0.0
        %2718 = vmatpush1.msra.mxu0 0.0
        %2719 = vmatprep.subr.mxu0 0.0
        %2720 = vmatpush1.msra.mxu0 0.0
        %2721 = vmatprep.subr.mxu0 0.0
        %2722 = vmatpush1.msra.mxu0 0.0
        %2723 = vmatprep.subr.mxu0 0.0
        %2724 = vmatpush1.msra.mxu0 0.0
        %2725 = vmatprep.subr.mxu0 0.0
        %2726 = vmatpush1.msra.mxu0 0.0
        %2727 = vmatprep.subr.mxu0 0.0
        %2728 = vmatpush1.msra.mxu0 0.0
        %2729 = vmatprep.subr.mxu0 0.0
        %2730 = vmatpush1.msra.mxu0 0.0
        %2731 = vmatprep.subr.mxu0 0.0
        %2732 = vmatpush1.msra.mxu0 0.0
        %2733 = vmatprep.subr.mxu0 0.0
        %2734 = vmatpush1.msra.mxu0 0.0
        %2735 = vmatprep.subr.mxu0 0.0
        %2736 = vmatpush1.msra.mxu0 0.0
        %2737 = vmatprep.subr.mxu0 0.0
        %2738 = vmatpush1.msra.mxu0 0.0
        %2739 = vmatprep.mubr.f32.mxu0 0.0
        %2740 = vmatmul.mubr.f32.gmra.mrb[0].mxu0 %v2670
        %v2741 = vpop.f32.mrb[0].mxu0
        %v2742 = vadd.f32 0.0, %v2741
        %v2743 = vpop.f32.mrb[0].mxu0
        %v2744 = vadd.f32 0.0, %v2743
        %2745 = vmatprep.mubr.f32.mxu0 0.0
        %2746 = vmatmul.mubr.f32.gmra.mrb[0].mxu0 %v2673
        %v2747 = vpop.f32.mrb[0].mxu0
        %v2748 = vadd.f32 0.0, %v2747
        %v2749 = vpop.f32.mrb[0].mxu0
        %v2750 = vadd.f32 0.0, %v2749
        %2751 = vdwg.mxu0
        %2752 = vmatprep.subr.mxu0 0.0
        %2753 = vmatpush1.msra.mxu0 %v2652
        %2754 = vmatprep.subr.mxu0 0.0
        %2755 = vmatpush1.msra.mxu0 %v2658
        %2756 = vmatprep.subr.mxu0 0.0
        %2757 = vmatpush1.msra.mxu0 0.0
        %2758 = vmatprep.subr.mxu0 0.0
        %2759 = vmatpush1.msra.mxu0 0.0
        %2760 = vmatprep.subr.mxu0 0.0
        %2761 = vmatpush1.msra.mxu0 0.0
        %2762 = vmatprep.subr.mxu0 0.0
        %2763 = vmatpush1.msra.mxu0 0.0
        %2764 = vmatprep.subr.mxu0 0.0
        %2765 = vmatpush1.msra.mxu0 0.0
        %2766 = vmatprep.subr.mxu0 0.0
        %2767 = vmatpush1.msra.mxu0 0.0
        %2768 = vmatprep.subr.mxu0 0.0
        %2769 = vmatpush1.msra.mxu0 0.0
        %2770 = vmatprep.subr.mxu0 0.0
        %2771 = vmatpush1.msra.mxu0 0.0
        %2772 = vmatprep.subr.mxu0 0.0
        %2773 = vmatpush1.msra.mxu0 0.0
        %2774 = vmatprep.subr.mxu0 0.0
        %2775 = vmatpush1.msra.mxu0 0.0
        %2776 = vmatprep.subr.mxu0 0.0
        %2777 = vmatpush1.msra.mxu0 0.0
        %2778 = vmatprep.subr.mxu0 0.0
        %2779 = vmatpush1.msra.mxu0 0.0
        %2780 = vmatprep.subr.mxu0 0.0
        %2781 = vmatpush1.msra.mxu0 0.0
        %2782 = vmatprep.subr.mxu0 0.0
        %2783 = vmatpush1.msra.mxu0 0.0
        %2784 = vmatprep.subr.mxu0 0.0
        %2785 = vmatpush1.msra.mxu0 0.0
        %2786 = vmatprep.subr.mxu0 0.0
        %2787 = vmatpush1.msra.mxu0 0.0
        %2788 = vmatprep.subr.mxu0 0.0
        %2789 = vmatpush1.msra.mxu0 0.0
        %2790 = vmatprep.subr.mxu0 0.0
        %2791 = vmatpush1.msra.mxu0 0.0
        %2792 = vmatprep.subr.mxu0 0.0
        %2793 = vmatpush1.msra.mxu0 0.0
        %2794 = vmatprep.subr.mxu0 0.0
        %2795 = vmatpush1.msra.mxu0 0.0
        %2796 = vmatprep.subr.mxu0 0.0
        %2797 = vmatpush1.msra.mxu0 0.0
        %2798 = vmatprep.subr.mxu0 0.0
        %2799 = vmatpush1.msra.mxu0 0.0
        %2800 = vmatprep.subr.mxu0 0.0
        %2801 = vmatpush1.msra.mxu0 0.0
        %2802 = vmatprep.subr.mxu0 0.0
        %2803 = vmatpush1.msra.mxu0 0.0
        %2804 = vmatprep.subr.mxu0 0.0
        %2805 = vmatpush1.msra.mxu0 0.0
        %2806 = vmatprep.subr.mxu0 0.0
        %2807 = vmatpush1.msra.mxu0 0.0
        %2808 = vmatprep.subr.mxu0 0.0
        %2809 = vmatpush1.msra.mxu0 0.0
        %2810 = vmatprep.subr.mxu0 0.0
        %2811 = vmatpush1.msra.mxu0 0.0
        %2812 = vmatprep.subr.mxu0 0.0
        %2813 = vmatpush1.msra.mxu0 0.0
        %2814 = vmatprep.subr.mxu0 0.0
        %2815 = vmatpush1.msra.mxu0 0.0
        %2816 = vmatprep.mubr.f32.mxu0 0.0
        %2817 = vmatmul.mubr.f32.gmra.mrb[0].mxu0 %v2670
        %v2818 = vpop.f32.mrb[0].mxu0
        %v2819 = vadd.f32 0.0, %v2818
        %v2820 = vpop.f32.mrb[0].mxu0
        %2821 = vmatprep.mubr.f32.mxu0 0.0
        %2822 = vmatmul.mubr.f32.gmra.mrb[0].mxu0 %v2673
        %v2823 = vpop.f32.mrb[0].mxu0
        %v2824 = vadd.f32 0.0, %v2823
        %v2825 = vpop.f32.mrb[0].mxu0
        %2826 = vdwg.mxu0
        %v2827 = vadd.f32 %v2559, %v2742
        %v2828 = vadd.f32 %v2561, %v2744
        %v2829 = vadd.f32 %v2636, %v2819
        %v2830 = vadd.f32 %v2565, %v2748
        %v2831 = vadd.f32 %v2567, %v2750
        %v2832 = vadd.f32 %v2641, %v2824
        %s2833 = scalar_lea.vmem [#allocation8], 48
        %v2834 = vld [vmem:[%s2833] sm:$0xff]
        %v2835 = vld [vmem:[%s2833 + $0x8] sm:$0xff]
        %2836 = vrot.lane.b32.xlu0 %v2291, 110
        %v2837 = vpop.permute.xlu0 %2836
        %2838 = vrot.lane.b32.xlu0 %v2292, 110
        %v2839 = vpop.permute.xlu0 %2838
        %2840 = vrot.lane.b32.xlu0 %v2293, 110
        %v2841 = vpop.permute.xlu0 %2840
        %2842 = vrot.lane.b32.xlu0 %v2294, 110
        %v2843 = vpop.permute.xlu0 %2842
        %2844 = vrot.lane.b32.xlu0 %v2295, 110
        %v2845 = vpop.permute.xlu0 %2844
        %2846 = vrot.lane.b32.xlu0 %v2296, 110
        %v2847 = vpop.permute.xlu0 %2846
        %v2848 = vsel %vm899, %v2837, %v2839
        %v2849 = vsel %vm899, %v2839, %v2841
        %v2850 = vsel %vm899, %v2843, %v2845
        %v2851 = vsel %vm899, %v2845, %v2847
        %v2859 = vsel %vm377, %v2834, 0
        %v2862 = vsel %vm377, %v2835, 0
        %2864 = vmatprep.subr.mxu0 %v2849
        %2865 = vmatpush1.msra.mxu0 %v2848
        %2866 = vmatprep.subr.mxu0 %v2851
        %2867 = vmatpush1.msra.mxu0 %v2850
        %2868 = vmatprep.subr.mxu0 0.0
        %2869 = vmatpush1.msra.mxu0 0.0
        %2870 = vmatprep.subr.mxu0 0.0
        %2871 = vmatpush1.msra.mxu0 0.0
        %2872 = vmatprep.subr.mxu0 0.0
        %2873 = vmatpush1.msra.mxu0 0.0
        %2874 = vmatprep.subr.mxu0 0.0
        %2875 = vmatpush1.msra.mxu0 0.0
        %2876 = vmatprep.subr.mxu0 0.0
        %2877 = vmatpush1.msra.mxu0 0.0
        %2878 = vmatprep.subr.mxu0 0.0
        %2879 = vmatpush1.msra.mxu0 0.0
        %2880 = vmatprep.subr.mxu0 0.0
        %2881 = vmatpush1.msra.mxu0 0.0
        %2882 = vmatprep.subr.mxu0 0.0
        %2883 = vmatpush1.msra.mxu0 0.0
        %2884 = vmatprep.subr.mxu0 0.0
        %2885 = vmatpush1.msra.mxu0 0.0
        %2886 = vmatprep.subr.mxu0 0.0
        %2887 = vmatpush1.msra.mxu0 0.0
        %2888 = vmatprep.subr.mxu0 0.0
        %2889 = vmatpush1.msra.mxu0 0.0
        %2890 = vmatprep.subr.mxu0 0.0
        %2891 = vmatpush1.msra.mxu0 0.0
        %2892 = vmatprep.subr.mxu0 0.0
        %2893 = vmatpush1.msra.mxu0 0.0
        %2894 = vmatprep.subr.mxu0 0.0
        %2895 = vmatpush1.msra.mxu0 0.0
        %2896 = vmatprep.subr.mxu0 0.0
        %2897 = vmatpush1.msra.mxu0 0.0
        %2898 = vmatprep.subr.mxu0 0.0
        %2899 = vmatpush1.msra.mxu0 0.0
        %2900 = vmatprep.subr.mxu0 0.0
        %2901 = vmatpush1.msra.mxu0 0.0
        %2902 = vmatprep.subr.mxu0 0.0
        %2903 = vmatpush1.msra.mxu0 0.0
        %2904 = vmatprep.subr.mxu0 0.0
        %2905 = vmatpush1.msra.mxu0 0.0
        %2906 = vmatprep.subr.mxu0 0.0
        %2907 = vmatpush1.msra.mxu0 0.0
        %2908 = vmatprep.subr.mxu0 0.0
        %2909 = vmatpush1.msra.mxu0 0.0
        %2910 = vmatprep.subr.mxu0 0.0
        %2911 = vmatpush1.msra.mxu0 0.0
        %2912 = vmatprep.subr.mxu0 0.0
        %2913 = vmatpush1.msra.mxu0 0.0
        %2914 = vmatprep.subr.mxu0 0.0
        %2915 = vmatpush1.msra.mxu0 0.0
        %2916 = vmatprep.subr.mxu0 0.0
        %2917 = vmatpush1.msra.mxu0 0.0
        %2918 = vmatprep.subr.mxu0 0.0
        %2919 = vmatpush1.msra.mxu0 0.0
        %2920 = vmatprep.subr.mxu0 0.0
        %2921 = vmatpush1.msra.mxu0 0.0
        %2922 = vmatprep.subr.mxu0 0.0
        %2923 = vmatpush1.msra.mxu0 0.0
        %2924 = vmatprep.subr.mxu0 0.0
        %2925 = vmatpush1.msra.mxu0 0.0
        %2926 = vmatprep.subr.mxu0 0.0
        %2927 = vmatpush1.msra.mxu0 0.0
        %2928 = vmatprep.mubr.f32.mxu0 0.0
        %2929 = vmatmul.mubr.f32.gmra.mrb[0].mxu0 %v2859
        %v2930 = vpop.f32.mrb[0].mxu0
        %v2931 = vadd.f32 0.0, %v2930
        %v2932 = vpop.f32.mrb[0].mxu0
        %v2933 = vadd.f32 0.0, %v2932
        %2934 = vmatprep.mubr.f32.mxu0 0.0
        %2935 = vmatmul.mubr.f32.gmra.mrb[0].mxu0 %v2862
        %v2936 = vpop.f32.mrb[0].mxu0
        %v2937 = vadd.f32 0.0, %v2936
        %v2938 = vpop.f32.mrb[0].mxu0
        %v2939 = vadd.f32 0.0, %v2938
        %2940 = vdwg.mxu0
        %2941 = vmatprep.subr.mxu0 0.0
        %2942 = vmatpush1.msra.mxu0 %v2841
        %2943 = vmatprep.subr.mxu0 0.0
        %2944 = vmatpush1.msra.mxu0 %v2847
        %2945 = vmatprep.subr.mxu0 0.0
        %2946 = vmatpush1.msra.mxu0 0.0
        %2947 = vmatprep.subr.mxu0 0.0
        %2948 = vmatpush1.msra.mxu0 0.0
        %2949 = vmatprep.subr.mxu0 0.0
        %2950 = vmatpush1.msra.mxu0 0.0
        %2951 = vmatprep.subr.mxu0 0.0
        %2952 = vmatpush1.msra.mxu0 0.0
        %2953 = vmatprep.subr.mxu0 0.0
        %2954 = vmatpush1.msra.mxu0 0.0
        %2955 = vmatprep.subr.mxu0 0.0
        %2956 = vmatpush1.msra.mxu0 0.0
        %2957 = vmatprep.subr.mxu0 0.0
        %2958 = vmatpush1.msra.mxu0 0.0
        %2959 = vmatprep.subr.mxu0 0.0
        %2960 = vmatpush1.msra.mxu0 0.0
        %2961 = vmatprep.subr.mxu0 0.0
        %2962 = vmatpush1.msra.mxu0 0.0
        %2963 = vmatprep.subr.mxu0 0.0
        %2964 = vmatpush1.msra.mxu0 0.0
        %2965 = vmatprep.subr.mxu0 0.0
        %2966 = vmatpush1.msra.mxu0 0.0
        %2967 = vmatprep.subr.mxu0 0.0
        %2968 = vmatpush1.msra.mxu0 0.0
        %2969 = vmatprep.subr.mxu0 0.0
        %2970 = vmatpush1.msra.mxu0 0.0
        %2971 = vmatprep.subr.mxu0 0.0
        %2972 = vmatpush1.msra.mxu0 0.0
        %2973 = vmatprep.subr.mxu0 0.0
        %2974 = vmatpush1.msra.mxu0 0.0
        %2975 = vmatprep.subr.mxu0 0.0
        %2976 = vmatpush1.msra.mxu0 0.0
        %2977 = vmatprep.subr.mxu0 0.0
        %2978 = vmatpush1.msra.mxu0 0.0
        %2979 = vmatprep.subr.mxu0 0.0
        %2980 = vmatpush1.msra.mxu0 0.0
        %2981 = vmatprep.subr.mxu0 0.0
        %2982 = vmatpush1.msra.mxu0 0.0
        %2983 = vmatprep.subr.mxu0 0.0
        %2984 = vmatpush1.msra.mxu0 0.0
        %2985 = vmatprep.subr.mxu0 0.0
        %2986 = vmatpush1.msra.mxu0 0.0
        %2987 = vmatprep.subr.mxu0 0.0
        %2988 = vmatpush1.msra.mxu0 0.0
        %2989 = vmatprep.subr.mxu0 0.0
        %2990 = vmatpush1.msra.mxu0 0.0
        %2991 = vmatprep.subr.mxu0 0.0
        %2992 = vmatpush1.msra.mxu0 0.0
        %2993 = vmatprep.subr.mxu0 0.0
        %2994 = vmatpush1.msra.mxu0 0.0
        %2995 = vmatprep.subr.mxu0 0.0
        %2996 = vmatpush1.msra.mxu0 0.0
        %2997 = vmatprep.subr.mxu0 0.0
        %2998 = vmatpush1.msra.mxu0 0.0
        %2999 = vmatprep.subr.mxu0 0.0
        %3000 = vmatpush1.msra.mxu0 0.0
        %3001 = vmatprep.subr.mxu0 0.0
        %3002 = vmatpush1.msra.mxu0 0.0
        %3003 = vmatprep.subr.mxu0 0.0
        %3004 = vmatpush1.msra.mxu0 0.0
        %3005 = vmatprep.mubr.f32.mxu0 0.0
        %3006 = vmatmul.mubr.f32.gmra.mrb[0].mxu0 %v2859
        %v3007 = vpop.f32.mrb[0].mxu0
        %v3008 = vadd.f32 0.0, %v3007
        %v3009 = vpop.f32.mrb[0].mxu0
        %3010 = vmatprep.mubr.f32.mxu0 0.0
        %3011 = vmatmul.mubr.f32.gmra.mrb[0].mxu0 %v2862
        %v3012 = vpop.f32.mrb[0].mxu0
        %v3013 = vadd.f32 0.0, %v3012
        %v3014 = vpop.f32.mrb[0].mxu0
        %3015 = vdwg.mxu0
        %v3016 = vadd.f32 %v2827, %v2931
        %v3017 = vadd.f32 %v2828, %v2933
        %v3018 = vadd.f32 %v2829, %v3008
        %v3019 = vadd.f32 %v2830, %v2937
        %v3020 = vadd.f32 %v2831, %v2939
        %v3021 = vadd.f32 %v2832, %v3013
        %s3022 = scalar_lea.vmem [#allocation8], 64
        %v3023 = vld [vmem:[%s3022] sm:$0xff]
        %v3024 = vld [vmem:[%s3022 + $0x8] sm:$0xff]
        %3025 = vrot.lane.b32.xlu0 %v2291, 109
        %v3026 = vpop.permute.xlu0 %3025
        %3027 = vrot.lane.b32.xlu0 %v2292, 109
        %v3028 = vpop.permute.xlu0 %3027
        %3029 = vrot.lane.b32.xlu0 %v2293, 109
        %v3030 = vpop.permute.xlu0 %3029
        %3031 = vrot.lane.b32.xlu0 %v2294, 109
        %v3032 = vpop.permute.xlu0 %3031
        %3033 = vrot.lane.b32.xlu0 %v2295, 109
        %v3034 = vpop.permute.xlu0 %3033
        %3035 = vrot.lane.b32.xlu0 %v2296, 109
        %v3036 = vpop.permute.xlu0 %3035
        %v3037 = vsel %vm1089, %v3026, %v3028
        %v3038 = vsel %vm1089, %v3028, %v3030
        %v3039 = vsel %vm1089, %v3032, %v3034
        %v3040 = vsel %vm1089, %v3034, %v3036
        %v3048 = vsel %vm377, %v3023, 0
        %v3051 = vsel %vm377, %v3024, 0
        %3053 = vmatprep.subr.mxu0 %v3038
        %3054 = vmatpush1.msra.mxu0 %v3037
        %3055 = vmatprep.subr.mxu0 %v3040
        %3056 = vmatpush1.msra.mxu0 %v3039
        %3057 = vmatprep.subr.mxu0 0.0
        %3058 = vmatpush1.msra.mxu0 0.0
        %3059 = vmatprep.subr.mxu0 0.0
        %3060 = vmatpush1.msra.mxu0 0.0
        %3061 = vmatprep.subr.mxu0 0.0
        %3062 = vmatpush1.msra.mxu0 0.0
        %3063 = vmatprep.subr.mxu0 0.0
        %3064 = vmatpush1.msra.mxu0 0.0
        %3065 = vmatprep.subr.mxu0 0.0
        %3066 = vmatpush1.msra.mxu0 0.0
        %3067 = vmatprep.subr.mxu0 0.0
        %3068 = vmatpush1.msra.mxu0 0.0
        %3069 = vmatprep.subr.mxu0 0.0
        %3070 = vmatpush1.msra.mxu0 0.0
        %3071 = vmatprep.subr.mxu0 0.0
        %3072 = vmatpush1.msra.mxu0 0.0
        %3073 = vmatprep.subr.mxu0 0.0
        %3074 = vmatpush1.msra.mxu0 0.0
        %3075 = vmatprep.subr.mxu0 0.0
        %3076 = vmatpush1.msra.mxu0 0.0
        %3077 = vmatprep.subr.mxu0 0.0
        %3078 = vmatpush1.msra.mxu0 0.0
        %3079 = vmatprep.subr.mxu0 0.0
        %3080 = vmatpush1.msra.mxu0 0.0
        %3081 = vmatprep.subr.mxu0 0.0
        %3082 = vmatpush1.msra.mxu0 0.0
        %3083 = vmatprep.subr.mxu0 0.0
        %3084 = vmatpush1.msra.mxu0 0.0
        %3085 = vmatprep.subr.mxu0 0.0
        %3086 = vmatpush1.msra.mxu0 0.0
        %3087 = vmatprep.subr.mxu0 0.0
        %3088 = vmatpush1.msra.mxu0 0.0
        %3089 = vmatprep.subr.mxu0 0.0
        %3090 = vmatpush1.msra.mxu0 0.0
        %3091 = vmatprep.subr.mxu0 0.0
        %3092 = vmatpush1.msra.mxu0 0.0
        %3093 = vmatprep.subr.mxu0 0.0
        %3094 = vmatpush1.msra.mxu0 0.0
        %3095 = vmatprep.subr.mxu0 0.0
        %3096 = vmatpush1.msra.mxu0 0.0
        %3097 = vmatprep.subr.mxu0 0.0
        %3098 = vmatpush1.msra.mxu0 0.0
        %3099 = vmatprep.subr.mxu0 0.0
        %3100 = vmatpush1.msra.mxu0 0.0
        %3101 = vmatprep.subr.mxu0 0.0
        %3102 = vmatpush1.msra.mxu0 0.0
        %3103 = vmatprep.subr.mxu0 0.0
        %3104 = vmatpush1.msra.mxu0 0.0
        %3105 = vmatprep.subr.mxu0 0.0
        %3106 = vmatpush1.msra.mxu0 0.0
        %3107 = vmatprep.subr.mxu0 0.0
        %3108 = vmatpush1.msra.mxu0 0.0
        %3109 = vmatprep.subr.mxu0 0.0
        %3110 = vmatpush1.msra.mxu0 0.0
        %3111 = vmatprep.subr.mxu0 0.0
        %3112 = vmatpush1.msra.mxu0 0.0
        %3113 = vmatprep.subr.mxu0 0.0
        %3114 = vmatpush1.msra.mxu0 0.0
        %3115 = vmatprep.subr.mxu0 0.0
        %3116 = vmatpush1.msra.mxu0 0.0
        %3117 = vmatprep.mubr.f32.mxu0 0.0
        %3118 = vmatmul.mubr.f32.gmra.mrb[0].mxu0 %v3048
        %v3119 = vpop.f32.mrb[0].mxu0
        %v3120 = vadd.f32 0.0, %v3119
        %v3121 = vpop.f32.mrb[0].mxu0
        %v3122 = vadd.f32 0.0, %v3121
        %3123 = vmatprep.mubr.f32.mxu0 0.0
        %3124 = vmatmul.mubr.f32.gmra.mrb[0].mxu0 %v3051
        %v3125 = vpop.f32.mrb[0].mxu0
        %v3126 = vadd.f32 0.0, %v3125
        %v3127 = vpop.f32.mrb[0].mxu0
        %v3128 = vadd.f32 0.0, %v3127
        %3129 = vdwg.mxu0
        %3130 = vmatprep.subr.mxu0 0.0
        %3131 = vmatpush1.msra.mxu0 %v3030
        %3132 = vmatprep.subr.mxu0 0.0
        %3133 = vmatpush1.msra.mxu0 %v3036
        %3134 = vmatprep.subr.mxu0 0.0
        %3135 = vmatpush1.msra.mxu0 0.0
        %3136 = vmatprep.subr.mxu0 0.0
        %3137 = vmatpush1.msra.mxu0 0.0
        %3138 = vmatprep.subr.mxu0 0.0
        %3139 = vmatpush1.msra.mxu0 0.0
        %3140 = vmatprep.subr.mxu0 0.0
        %3141 = vmatpush1.msra.mxu0 0.0
        %3142 = vmatprep.subr.mxu0 0.0
        %3143 = vmatpush1.msra.mxu0 0.0
        %3144 = vmatprep.subr.mxu0 0.0
        %3145 = vmatpush1.msra.mxu0 0.0
        %3146 = vmatprep.subr.mxu0 0.0
        %3147 = vmatpush1.msra.mxu0 0.0
        %3148 = vmatprep.subr.mxu0 0.0
        %3149 = vmatpush1.msra.mxu0 0.0
        %3150 = vmatprep.subr.mxu0 0.0
        %3151 = vmatpush1.msra.mxu0 0.0
        %3152 = vmatprep.subr.mxu0 0.0
        %3153 = vmatpush1.msra.mxu0 0.0
        %3154 = vmatprep.subr.mxu0 0.0
        %3155 = vmatpush1.msra.mxu0 0.0
        %3156 = vmatprep.subr.mxu0 0.0
        %3157 = vmatpush1.msra.mxu0 0.0
        %3158 = vmatprep.subr.mxu0 0.0
        %3159 = vmatpush1.msra.mxu0 0.0
        %3160 = vmatprep.subr.mxu0 0.0
        %3161 = vmatpush1.msra.mxu0 0.0
        %3162 = vmatprep.subr.mxu0 0.0
        %3163 = vmatpush1.msra.mxu0 0.0
        %3164 = vmatprep.subr.mxu0 0.0
        %3165 = vmatpush1.msra.mxu0 0.0
        %3166 = vmatprep.subr.mxu0 0.0
        %3167 = vmatpush1.msra.mxu0 0.0
        %3168 = vmatprep.subr.mxu0 0.0
        %3169 = vmatpush1.msra.mxu0 0.0
        %3170 = vmatprep.subr.mxu0 0.0
        %3171 = vmatpush1.msra.mxu0 0.0
        %3172 = vmatprep.subr.mxu0 0.0
        %3173 = vmatpush1.msra.mxu0 0.0
        %3174 = vmatprep.subr.mxu0 0.0
        %3175 = vmatpush1.msra.mxu0 0.0
        %3176 = vmatprep.subr.mxu0 0.0
        %3177 = vmatpush1.msra.mxu0 0.0
        %3178 = vmatprep.subr.mxu0 0.0
        %3179 = vmatpush1.msra.mxu0 0.0
        %3180 = vmatprep.subr.mxu0 0.0
        %3181 = vmatpush1.msra.mxu0 0.0
        %3182 = vmatprep.subr.mxu0 0.0
        %3183 = vmatpush1.msra.mxu0 0.0
        %3184 = vmatprep.subr.mxu0 0.0
        %3185 = vmatpush1.msra.mxu0 0.0
        %3186 = vmatprep.subr.mxu0 0.0
        %3187 = vmatpush1.msra.mxu0 0.0
        %3188 = vmatprep.subr.mxu0 0.0
        %3189 = vmatpush1.msra.mxu0 0.0
        %3190 = vmatprep.subr.mxu0 0.0
        %3191 = vmatpush1.msra.mxu0 0.0
        %3192 = vmatprep.subr.mxu0 0.0
        %3193 = vmatpush1.msra.mxu0 0.0
        %3194 = vmatprep.mubr.f32.mxu0 0.0
        %3195 = vmatmul.mubr.f32.gmra.mrb[0].mxu0 %v3048
        %v3196 = vpop.f32.mrb[0].mxu0
        %v3197 = vadd.f32 0.0, %v3196
        %v3198 = vpop.f32.mrb[0].mxu0
        %3199 = vmatprep.mubr.f32.mxu0 0.0
        %3200 = vmatmul.mubr.f32.gmra.mrb[0].mxu0 %v3051
        %v3201 = vpop.f32.mrb[0].mxu0
        %v3202 = vadd.f32 0.0, %v3201
        %v3203 = vpop.f32.mrb[0].mxu0
        %3204 = vdwg.mxu0
        %v3205 = vadd.f32 %v3016, %v3120
        %v3206 = vadd.f32 %v3017, %v3122
        %v3207 = vadd.f32 %v3018, %v3197
        %v3208 = vadd.f32 %v3019, %v3126
        %v3209 = vadd.f32 %v3020, %v3128
        %v3210 = vadd.f32 %v3021, %v3202
        %s3211 = scalar_lea.vmem [#allocation8], 80
        %v3212 = vld [vmem:[%s3211] sm:$0xff]
        %v3213 = vld [vmem:[%s3211 + $0x8] sm:$0xff]
        %3214 = vrot.lane.b32.xlu0 %v2291, 108
        %v3215 = vpop.permute.xlu0 %3214
        %3216 = vrot.lane.b32.xlu0 %v2292, 108
        %v3217 = vpop.permute.xlu0 %3216
        %3218 = vrot.lane.b32.xlu0 %v2293, 108
        %v3219 = vpop.permute.xlu0 %3218
        %3220 = vrot.lane.b32.xlu0 %v2294, 108
        %v3221 = vpop.permute.xlu0 %3220
        %3222 = vrot.lane.b32.xlu0 %v2295, 108
        %v3223 = vpop.permute.xlu0 %3222
        %3224 = vrot.lane.b32.xlu0 %v2296, 108
        %v3225 = vpop.permute.xlu0 %3224
        %v3226 = vsel %vm1279, %v3215, %v3217
        %v3227 = vsel %vm1279, %v3217, %v3219
        %v3228 = vsel %vm1279, %v3221, %v3223
        %v3229 = vsel %vm1279, %v3223, %v3225
        %v3237 = vsel %vm377, %v3212, 0
        %v3240 = vsel %vm377, %v3213, 0
        %3242 = vmatprep.subr.mxu0 %v3227
        %3243 = vmatpush1.msra.mxu0 %v3226
        %3244 = vmatprep.subr.mxu0 %v3229
        %3245 = vmatpush1.msra.mxu0 %v3228
        %3246 = vmatprep.subr.mxu0 0.0
        %3247 = vmatpush1.msra.mxu0 0.0
        %3248 = vmatprep.subr.mxu0 0.0
        %3249 = vmatpush1.msra.mxu0 0.0
        %3250 = vmatprep.subr.mxu0 0.0
        %3251 = vmatpush1.msra.mxu0 0.0
        %3252 = vmatprep.subr.mxu0 0.0
        %3253 = vmatpush1.msra.mxu0 0.0
        %3254 = vmatprep.subr.mxu0 0.0
        %3255 = vmatpush1.msra.mxu0 0.0
        %3256 = vmatprep.subr.mxu0 0.0
        %3257 = vmatpush1.msra.mxu0 0.0
        %3258 = vmatprep.subr.mxu0 0.0
        %3259 = vmatpush1.msra.mxu0 0.0
        %3260 = vmatprep.subr.mxu0 0.0
        %3261 = vmatpush1.msra.mxu0 0.0
        %3262 = vmatprep.subr.mxu0 0.0
        %3263 = vmatpush1.msra.mxu0 0.0
        %3264 = vmatprep.subr.mxu0 0.0
        %3265 = vmatpush1.msra.mxu0 0.0
        %3266 = vmatprep.subr.mxu0 0.0
        %3267 = vmatpush1.msra.mxu0 0.0
        %3268 = vmatprep.subr.mxu0 0.0
        %3269 = vmatpush1.msra.mxu0 0.0
        %3270 = vmatprep.subr.mxu0 0.0
        %3271 = vmatpush1.msra.mxu0 0.0
        %3272 = vmatprep.subr.mxu0 0.0
        %3273 = vmatpush1.msra.mxu0 0.0
        %3274 = vmatprep.subr.mxu0 0.0
        %3275 = vmatpush1.msra.mxu0 0.0
        %3276 = vmatprep.subr.mxu0 0.0
        %3277 = vmatpush1.msra.mxu0 0.0
        %3278 = vmatprep.subr.mxu0 0.0
        %3279 = vmatpush1.msra.mxu0 0.0
        %3280 = vmatprep.subr.mxu0 0.0
        %3281 = vmatpush1.msra.mxu0 0.0
        %3282 = vmatprep.subr.mxu0 0.0
        %3283 = vmatpush1.msra.mxu0 0.0
        %3284 = vmatprep.subr.mxu0 0.0
        %3285 = vmatpush1.msra.mxu0 0.0
        %3286 = vmatprep.subr.mxu0 0.0
        %3287 = vmatpush1.msra.mxu0 0.0
        %3288 = vmatprep.subr.mxu0 0.0
        %3289 = vmatpush1.msra.mxu0 0.0
        %3290 = vmatprep.subr.mxu0 0.0
        %3291 = vmatpush1.msra.mxu0 0.0
        %3292 = vmatprep.subr.mxu0 0.0
        %3293 = vmatpush1.msra.mxu0 0.0
        %3294 = vmatprep.subr.mxu0 0.0
        %3295 = vmatpush1.msra.mxu0 0.0
        %3296 = vmatprep.subr.mxu0 0.0
        %3297 = vmatpush1.msra.mxu0 0.0
        %3298 = vmatprep.subr.mxu0 0.0
        %3299 = vmatpush1.msra.mxu0 0.0
        %3300 = vmatprep.subr.mxu0 0.0
        %3301 = vmatpush1.msra.mxu0 0.0
        %3302 = vmatprep.subr.mxu0 0.0
        %3303 = vmatpush1.msra.mxu0 0.0
        %3304 = vmatprep.subr.mxu0 0.0
        %3305 = vmatpush1.msra.mxu0 0.0
        %3306 = vmatprep.mubr.f32.mxu0 0.0
        %3307 = vmatmul.mubr.f32.gmra.mrb[0].mxu0 %v3237
        %v3308 = vpop.f32.mrb[0].mxu0
        %v3309 = vadd.f32 0.0, %v3308
        %v3310 = vpop.f32.mrb[0].mxu0
        %v3311 = vadd.f32 0.0, %v3310
        %3312 = vmatprep.mubr.f32.mxu0 0.0
        %3313 = vmatmul.mubr.f32.gmra.mrb[0].mxu0 %v3240
        %v3314 = vpop.f32.mrb[0].mxu0
        %v3315 = vadd.f32 0.0, %v3314
        %v3316 = vpop.f32.mrb[0].mxu0
        %v3317 = vadd.f32 0.0, %v3316
        %3318 = vdwg.mxu0
        %3319 = vmatprep.subr.mxu0 0.0
        %3320 = vmatpush1.msra.mxu0 %v3219
        %3321 = vmatprep.subr.mxu0 0.0
        %3322 = vmatpush1.msra.mxu0 %v3225
        %3323 = vmatprep.subr.mxu0 0.0
        %3324 = vmatpush1.msra.mxu0 0.0
        %3325 = vmatprep.subr.mxu0 0.0
        %3326 = vmatpush1.msra.mxu0 0.0
        %3327 = vmatprep.subr.mxu0 0.0
        %3328 = vmatpush1.msra.mxu0 0.0
        %3329 = vmatprep.subr.mxu0 0.0
        %3330 = vmatpush1.msra.mxu0 0.0
        %3331 = vmatprep.subr.mxu0 0.0
        %3332 = vmatpush1.msra.mxu0 0.0
        %3333 = vmatprep.subr.mxu0 0.0
        %3334 = vmatpush1.msra.mxu0 0.0
        %3335 = vmatprep.subr.mxu0 0.0
        %3336 = vmatpush1.msra.mxu0 0.0
        %3337 = vmatprep.subr.mxu0 0.0
        %3338 = vmatpush1.msra.mxu0 0.0
        %3339 = vmatprep.subr.mxu0 0.0
        %3340 = vmatpush1.msra.mxu0 0.0
        %3341 = vmatprep.subr.mxu0 0.0
        %3342 = vmatpush1.msra.mxu0 0.0
        %3343 = vmatprep.subr.mxu0 0.0
        %3344 = vmatpush1.msra.mxu0 0.0
        %3345 = vmatprep.subr.mxu0 0.0
        %3346 = vmatpush1.msra.mxu0 0.0
        %3347 = vmatprep.subr.mxu0 0.0
        %3348 = vmatpush1.msra.mxu0 0.0
        %3349 = vmatprep.subr.mxu0 0.0
        %3350 = vmatpush1.msra.mxu0 0.0
        %3351 = vmatprep.subr.mxu0 0.0
        %3352 = vmatpush1.msra.mxu0 0.0
        %3353 = vmatprep.subr.mxu0 0.0
        %3354 = vmatpush1.msra.mxu0 0.0
        %3355 = vmatprep.subr.mxu0 0.0
        %3356 = vmatpush1.msra.mxu0 0.0
        %3357 = vmatprep.subr.mxu0 0.0
        %3358 = vmatpush1.msra.mxu0 0.0
        %3359 = vmatprep.subr.mxu0 0.0
        %3360 = vmatpush1.msra.mxu0 0.0
        %3361 = vmatprep.subr.mxu0 0.0
        %3362 = vmatpush1.msra.mxu0 0.0
        %3363 = vmatprep.subr.mxu0 0.0
        %3364 = vmatpush1.msra.mxu0 0.0
        %3365 = vmatprep.subr.mxu0 0.0
        %3366 = vmatpush1.msra.mxu0 0.0
        %3367 = vmatprep.subr.mxu0 0.0
        %3368 = vmatpush1.msra.mxu0 0.0
        %3369 = vmatprep.subr.mxu0 0.0
        %3370 = vmatpush1.msra.mxu0 0.0
        %3371 = vmatprep.subr.mxu0 0.0
        %3372 = vmatpush1.msra.mxu0 0.0
        %3373 = vmatprep.subr.mxu0 0.0
        %3374 = vmatpush1.msra.mxu0 0.0
        %3375 = vmatprep.subr.mxu0 0.0
        %3376 = vmatpush1.msra.mxu0 0.0
        %3377 = vmatprep.subr.mxu0 0.0
        %3378 = vmatpush1.msra.mxu0 0.0
        %3379 = vmatprep.subr.mxu0 0.0
        %3380 = vmatpush1.msra.mxu0 0.0
        %3381 = vmatprep.subr.mxu0 0.0
        %3382 = vmatpush1.msra.mxu0 0.0
        %3383 = vmatprep.mubr.f32.mxu0 0.0
        %3384 = vmatmul.mubr.f32.gmra.mrb[0].mxu0 %v3237
        %v3385 = vpop.f32.mrb[0].mxu0
        %v3386 = vadd.f32 0.0, %v3385
        %v3387 = vpop.f32.mrb[0].mxu0
        %3388 = vmatprep.mubr.f32.mxu0 0.0
        %3389 = vmatmul.mubr.f32.gmra.mrb[0].mxu0 %v3240
        %v3390 = vpop.f32.mrb[0].mxu0
        %v3391 = vadd.f32 0.0, %v3390
        %v3392 = vpop.f32.mrb[0].mxu0
        %3393 = vdwg.mxu0
        %v3394 = vadd.f32 %v3205, %v3309
        %v3395 = vadd.f32 %v3206, %v3311
        %v3396 = vadd.f32 %v3207, %v3386
        %v3397 = vadd.f32 %v3208, %v3315
        %v3398 = vadd.f32 %v3209, %v3317
        %v3399 = vadd.f32 %v3210, %v3391
        %s3400 = scalar_lea.vmem [#allocation8], 96
        %v3401 = vld [vmem:[%s3400] sm:$0xff]
        %v3402 = vld [vmem:[%s3400 + $0x8] sm:$0xff]
        %3403 = vrot.lane.b32.xlu0 %v2291, 92
        %v3404 = vpop.permute.xlu0 %3403
        %3405 = vrot.lane.b32.xlu0 %v2292, 92
        %v3406 = vpop.permute.xlu0 %3405
        %3407 = vrot.lane.b32.xlu0 %v2293, 92
        %v3408 = vpop.permute.xlu0 %3407
        %3409 = vrot.lane.b32.xlu0 %v2294, 92
        %v3410 = vpop.permute.xlu0 %3409
        %3411 = vrot.lane.b32.xlu0 %v2295, 92
        %v3412 = vpop.permute.xlu0 %3411
        %3413 = vrot.lane.b32.xlu0 %v2296, 92
        %v3414 = vpop.permute.xlu0 %3413
        %v3415 = vsel %vm1469, %v3404, %v3406
        %v3416 = vsel %vm1469, %v3406, %v3408
        %v3417 = vsel %vm1469, %v3410, %v3412
        %v3418 = vsel %vm1469, %v3412, %v3414
        %v3426 = vsel %vm377, %v3401, 0
        %v3429 = vsel %vm377, %v3402, 0
        %3431 = vmatprep.subr.mxu0 %v3416
        %3432 = vmatpush1.msra.mxu0 %v3415
        %3433 = vmatprep.subr.mxu0 %v3418
        %3434 = vmatpush1.msra.mxu0 %v3417
        %3435 = vmatprep.subr.mxu0 0.0
        %3436 = vmatpush1.msra.mxu0 0.0
        %3437 = vmatprep.subr.mxu0 0.0
        %3438 = vmatpush1.msra.mxu0 0.0
        %3439 = vmatprep.subr.mxu0 0.0
        %3440 = vmatpush1.msra.mxu0 0.0
        %3441 = vmatprep.subr.mxu0 0.0
        %3442 = vmatpush1.msra.mxu0 0.0
        %3443 = vmatprep.subr.mxu0 0.0
        %3444 = vmatpush1.msra.mxu0 0.0
        %3445 = vmatprep.subr.mxu0 0.0
        %3446 = vmatpush1.msra.mxu0 0.0
        %3447 = vmatprep.subr.mxu0 0.0
        %3448 = vmatpush1.msra.mxu0 0.0
        %3449 = vmatprep.subr.mxu0 0.0
        %3450 = vmatpush1.msra.mxu0 0.0
        %3451 = vmatprep.subr.mxu0 0.0
        %3452 = vmatpush1.msra.mxu0 0.0
        %3453 = vmatprep.subr.mxu0 0.0
        %3454 = vmatpush1.msra.mxu0 0.0
        %3455 = vmatprep.subr.mxu0 0.0
        %3456 = vmatpush1.msra.mxu0 0.0
        %3457 = vmatprep.subr.mxu0 0.0
        %3458 = vmatpush1.msra.mxu0 0.0
        %3459 = vmatprep.subr.mxu0 0.0
        %3460 = vmatpush1.msra.mxu0 0.0
        %3461 = vmatprep.subr.mxu0 0.0
        %3462 = vmatpush1.msra.mxu0 0.0
        %3463 = vmatprep.subr.mxu0 0.0
        %3464 = vmatpush1.msra.mxu0 0.0
        %3465 = vmatprep.subr.mxu0 0.0
        %3466 = vmatpush1.msra.mxu0 0.0
        %3467 = vmatprep.subr.mxu0 0.0
        %3468 = vmatpush1.msra.mxu0 0.0
        %3469 = vmatprep.subr.mxu0 0.0
        %3470 = vmatpush1.msra.mxu0 0.0
        %3471 = vmatprep.subr.mxu0 0.0
        %3472 = vmatpush1.msra.mxu0 0.0
        %3473 = vmatprep.subr.mxu0 0.0
        %3474 = vmatpush1.msra.mxu0 0.0
        %3475 = vmatprep.subr.mxu0 0.0
        %3476 = vmatpush1.msra.mxu0 0.0
        %3477 = vmatprep.subr.mxu0 0.0
        %3478 = vmatpush1.msra.mxu0 0.0
        %3479 = vmatprep.subr.mxu0 0.0
        %3480 = vmatpush1.msra.mxu0 0.0
        %3481 = vmatprep.subr.mxu0 0.0
        %3482 = vmatpush1.msra.mxu0 0.0
        %3483 = vmatprep.subr.mxu0 0.0
        %3484 = vmatpush1.msra.mxu0 0.0
        %3485 = vmatprep.subr.mxu0 0.0
        %3486 = vmatpush1.msra.mxu0 0.0
        %3487 = vmatprep.subr.mxu0 0.0
        %3488 = vmatpush1.msra.mxu0 0.0
        %3489 = vmatprep.subr.mxu0 0.0
        %3490 = vmatpush1.msra.mxu0 0.0
        %3491 = vmatprep.subr.mxu0 0.0
        %3492 = vmatpush1.msra.mxu0 0.0
        %3493 = vmatprep.subr.mxu0 0.0
        %3494 = vmatpush1.msra.mxu0 0.0
        %3495 = vmatprep.mubr.f32.mxu0 0.0
        %3496 = vmatmul.mubr.f32.gmra.mrb[0].mxu0 %v3426
        %v3497 = vpop.f32.mrb[0].mxu0
        %v3498 = vadd.f32 0.0, %v3497
        %v3499 = vpop.f32.mrb[0].mxu0
        %v3500 = vadd.f32 0.0, %v3499
        %3501 = vmatprep.mubr.f32.mxu0 0.0
        %3502 = vmatmul.mubr.f32.gmra.mrb[0].mxu0 %v3429
        %v3503 = vpop.f32.mrb[0].mxu0
        %v3504 = vadd.f32 0.0, %v3503
        %v3505 = vpop.f32.mrb[0].mxu0
        %v3506 = vadd.f32 0.0, %v3505
        %3507 = vdwg.mxu0
        %3508 = vmatprep.subr.mxu0 0.0
        %3509 = vmatpush1.msra.mxu0 %v3408
        %3510 = vmatprep.subr.mxu0 0.0
        %3511 = vmatpush1.msra.mxu0 %v3414
        %3512 = vmatprep.subr.mxu0 0.0
        %3513 = vmatpush1.msra.mxu0 0.0
        %3514 = vmatprep.subr.mxu0 0.0
        %3515 = vmatpush1.msra.mxu0 0.0
        %3516 = vmatprep.subr.mxu0 0.0
        %3517 = vmatpush1.msra.mxu0 0.0
        %3518 = vmatprep.subr.mxu0 0.0
        %3519 = vmatpush1.msra.mxu0 0.0
        %3520 = vmatprep.subr.mxu0 0.0
        %3521 = vmatpush1.msra.mxu0 0.0
        %3522 = vmatprep.subr.mxu0 0.0
        %3523 = vmatpush1.msra.mxu0 0.0
        %3524 = vmatprep.subr.mxu0 0.0
        %3525 = vmatpush1.msra.mxu0 0.0
        %3526 = vmatprep.subr.mxu0 0.0
        %3527 = vmatpush1.msra.mxu0 0.0
        %3528 = vmatprep.subr.mxu0 0.0
        %3529 = vmatpush1.msra.mxu0 0.0
        %3530 = vmatprep.subr.mxu0 0.0
        %3531 = vmatpush1.msra.mxu0 0.0
        %3532 = vmatprep.subr.mxu0 0.0
        %3533 = vmatpush1.msra.mxu0 0.0
        %3534 = vmatprep.subr.mxu0 0.0
        %3535 = vmatpush1.msra.mxu0 0.0
        %3536 = vmatprep.subr.mxu0 0.0
        %3537 = vmatpush1.msra.mxu0 0.0
        %3538 = vmatprep.subr.mxu0 0.0
        %3539 = vmatpush1.msra.mxu0 0.0
        %3540 = vmatprep.subr.mxu0 0.0
        %3541 = vmatpush1.msra.mxu0 0.0
        %3542 = vmatprep.subr.mxu0 0.0
        %3543 = vmatpush1.msra.mxu0 0.0
        %3544 = vmatprep.subr.mxu0 0.0
        %3545 = vmatpush1.msra.mxu0 0.0
        %3546 = vmatprep.subr.mxu0 0.0
        %3547 = vmatpush1.msra.mxu0 0.0
        %3548 = vmatprep.subr.mxu0 0.0
        %3549 = vmatpush1.msra.mxu0 0.0
        %3550 = vmatprep.subr.mxu0 0.0
        %3551 = vmatpush1.msra.mxu0 0.0
        %3552 = vmatprep.subr.mxu0 0.0
        %3553 = vmatpush1.msra.mxu0 0.0
        %3554 = vmatprep.subr.mxu0 0.0
        %3555 = vmatpush1.msra.mxu0 0.0
        %3556 = vmatprep.subr.mxu0 0.0
        %3557 = vmatpush1.msra.mxu0 0.0
        %3558 = vmatprep.subr.mxu0 0.0
        %3559 = vmatpush1.msra.mxu0 0.0
        %3560 = vmatprep.subr.mxu0 0.0
        %3561 = vmatpush1.msra.mxu0 0.0
        %3562 = vmatprep.subr.mxu0 0.0
        %3563 = vmatpush1.msra.mxu0 0.0
        %3564 = vmatprep.subr.mxu0 0.0
        %3565 = vmatpush1.msra.mxu0 0.0
        %3566 = vmatprep.subr.mxu0 0.0
        %3567 = vmatpush1.msra.mxu0 0.0
        %3568 = vmatprep.subr.mxu0 0.0
        %3569 = vmatpush1.msra.mxu0 0.0
        %3570 = vmatprep.subr.mxu0 0.0
        %3571 = vmatpush1.msra.mxu0 0.0
        %3572 = vmatprep.mubr.f32.mxu0 0.0
        %3573 = vmatmul.mubr.f32.gmra.mrb[0].mxu0 %v3426
        %v3574 = vpop.f32.mrb[0].mxu0
        %v3575 = vadd.f32 0.0, %v3574
        %v3576 = vpop.f32.mrb[0].mxu0
        %3577 = vmatprep.mubr.f32.mxu0 0.0
        %3578 = vmatmul.mubr.f32.gmra.mrb[0].mxu0 %v3429
        %v3579 = vpop.f32.mrb[0].mxu0
        %v3580 = vadd.f32 0.0, %v3579
        %v3581 = vpop.f32.mrb[0].mxu0
        %3582 = vdwg.mxu0
        %v3583 = vadd.f32 %v3394, %v3498
        %v3584 = vadd.f32 %v3395, %v3500
        %v3585 = vadd.f32 %v3396, %v3575
        %v3586 = vadd.f32 %v3397, %v3504
        %v3587 = vadd.f32 %v3398, %v3506
        %v3588 = vadd.f32 %v3399, %v3580
        %s3589 = scalar_lea.vmem [#allocation8], 112
        %v3590 = vld [vmem:[%s3589] sm:$0xff]
        %v3591 = vld [vmem:[%s3589 + $0x8] sm:$0xff]
        %3592 = vrot.lane.b32.xlu0 %v2291, 91
        %v3593 = vpop.permute.xlu0 %3592
        %3594 = vrot.lane.b32.xlu0 %v2292, 91
        %v3595 = vpop.permute.xlu0 %3594
        %3596 = vrot.lane.b32.xlu0 %v2293, 91
        %v3597 = vpop.permute.xlu0 %3596
        %3598 = vrot.lane.b32.xlu0 %v2294, 91
        %v3599 = vpop.permute.xlu0 %3598
        %3600 = vrot.lane.b32.xlu0 %v2295, 91
        %v3601 = vpop.permute.xlu0 %3600
        %3602 = vrot.lane.b32.xlu0 %v2296, 91
        %v3603 = vpop.permute.xlu0 %3602
        %v3604 = vsel %vm1659, %v3593, %v3595
        %v3605 = vsel %vm1659, %v3595, %v3597
        %v3606 = vsel %vm1659, %v3599, %v3601
        %v3607 = vsel %vm1659, %v3601, %v3603
        %v3615 = vsel %vm377, %v3590, 0
        %v3618 = vsel %vm377, %v3591, 0
        %3620 = vmatprep.subr.mxu0 %v3605
        %3621 = vmatpush1.msra.mxu0 %v3604
        %3622 = vmatprep.subr.mxu0 %v3607
        %3623 = vmatpush1.msra.mxu0 %v3606
        %3624 = vmatprep.subr.mxu0 0.0
        %3625 = vmatpush1.msra.mxu0 0.0
        %3626 = vmatprep.subr.mxu0 0.0
        %3627 = vmatpush1.msra.mxu0 0.0
        %3628 = vmatprep.subr.mxu0 0.0
        %3629 = vmatpush1.msra.mxu0 0.0
        %3630 = vmatprep.subr.mxu0 0.0
        %3631 = vmatpush1.msra.mxu0 0.0
        %3632 = vmatprep.subr.mxu0 0.0
        %3633 = vmatpush1.msra.mxu0 0.0
        %3634 = vmatprep.subr.mxu0 0.0
        %3635 = vmatpush1.msra.mxu0 0.0
        %3636 = vmatprep.subr.mxu0 0.0
        %3637 = vmatpush1.msra.mxu0 0.0
        %3638 = vmatprep.subr.mxu0 0.0
        %3639 = vmatpush1.msra.mxu0 0.0
        %3640 = vmatprep.subr.mxu0 0.0
        %3641 = vmatpush1.msra.mxu0 0.0
        %3642 = vmatprep.subr.mxu0 0.0
        %3643 = vmatpush1.msra.mxu0 0.0
        %3644 = vmatprep.subr.mxu0 0.0
        %3645 = vmatpush1.msra.mxu0 0.0
        %3646 = vmatprep.subr.mxu0 0.0
        %3647 = vmatpush1.msra.mxu0 0.0
        %3648 = vmatprep.subr.mxu0 0.0
        %3649 = vmatpush1.msra.mxu0 0.0
        %3650 = vmatprep.subr.mxu0 0.0
        %3651 = vmatpush1.msra.mxu0 0.0
        %3652 = vmatprep.subr.mxu0 0.0
        %3653 = vmatpush1.msra.mxu0 0.0
        %3654 = vmatprep.subr.mxu0 0.0
        %3655 = vmatpush1.msra.mxu0 0.0
        %3656 = vmatprep.subr.mxu0 0.0
        %3657 = vmatpush1.msra.mxu0 0.0
        %3658 = vmatprep.subr.mxu0 0.0
        %3659 = vmatpush1.msra.mxu0 0.0
        %3660 = vmatprep.subr.mxu0 0.0
        %3661 = vmatpush1.msra.mxu0 0.0
        %3662 = vmatprep.subr.mxu0 0.0
        %3663 = vmatpush1.msra.mxu0 0.0
        %3664 = vmatprep.subr.mxu0 0.0
        %3665 = vmatpush1.msra.mxu0 0.0
        %3666 = vmatprep.subr.mxu0 0.0
        %3667 = vmatpush1.msra.mxu0 0.0
        %3668 = vmatprep.subr.mxu0 0.0
        %3669 = vmatpush1.msra.mxu0 0.0
        %3670 = vmatprep.subr.mxu0 0.0
        %3671 = vmatpush1.msra.mxu0 0.0
        %3672 = vmatprep.subr.mxu0 0.0
        %3673 = vmatpush1.msra.mxu0 0.0
        %3674 = vmatprep.subr.mxu0 0.0
        %3675 = vmatpush1.msra.mxu0 0.0
        %3676 = vmatprep.subr.mxu0 0.0
        %3677 = vmatpush1.msra.mxu0 0.0
        %3678 = vmatprep.subr.mxu0 0.0
        %3679 = vmatpush1.msra.mxu0 0.0
        %3680 = vmatprep.subr.mxu0 0.0
        %3681 = vmatpush1.msra.mxu0 0.0
        %3682 = vmatprep.subr.mxu0 0.0
        %3683 = vmatpush1.msra.mxu0 0.0
        %3684 = vmatprep.mubr.f32.mxu0 0.0
        %3685 = vmatmul.mubr.f32.gmra.mrb[0].mxu0 %v3615
        %v3686 = vpop.f32.mrb[0].mxu0
        %v3687 = vadd.f32 0.0, %v3686
        %v3688 = vpop.f32.mrb[0].mxu0
        %v3689 = vadd.f32 0.0, %v3688
        %3690 = vmatprep.mubr.f32.mxu0 0.0
        %3691 = vmatmul.mubr.f32.gmra.mrb[0].mxu0 %v3618
        %v3692 = vpop.f32.mrb[0].mxu0
        %v3693 = vadd.f32 0.0, %v3692
        %v3694 = vpop.f32.mrb[0].mxu0
        %v3695 = vadd.f32 0.0, %v3694
        %3696 = vdwg.mxu0
        %3697 = vmatprep.subr.mxu0 0.0
        %3698 = vmatpush1.msra.mxu0 %v3597
        %3699 = vmatprep.subr.mxu0 0.0
        %3700 = vmatpush1.msra.mxu0 %v3603
        %3701 = vmatprep.subr.mxu0 0.0
        %3702 = vmatpush1.msra.mxu0 0.0
        %3703 = vmatprep.subr.mxu0 0.0
        %3704 = vmatpush1.msra.mxu0 0.0
        %3705 = vmatprep.subr.mxu0 0.0
        %3706 = vmatpush1.msra.mxu0 0.0
        %3707 = vmatprep.subr.mxu0 0.0
        %3708 = vmatpush1.msra.mxu0 0.0
        %3709 = vmatprep.subr.mxu0 0.0
        %3710 = vmatpush1.msra.mxu0 0.0
        %3711 = vmatprep.subr.mxu0 0.0
        %3712 = vmatpush1.msra.mxu0 0.0
        %3713 = vmatprep.subr.mxu0 0.0
        %3714 = vmatpush1.msra.mxu0 0.0
        %3715 = vmatprep.subr.mxu0 0.0
        %3716 = vmatpush1.msra.mxu0 0.0
        %3717 = vmatprep.subr.mxu0 0.0
        %3718 = vmatpush1.msra.mxu0 0.0
        %3719 = vmatprep.subr.mxu0 0.0
        %3720 = vmatpush1.msra.mxu0 0.0
        %3721 = vmatprep.subr.mxu0 0.0
        %3722 = vmatpush1.msra.mxu0 0.0
        %3723 = vmatprep.subr.mxu0 0.0
        %3724 = vmatpush1.msra.mxu0 0.0
        %3725 = vmatprep.subr.mxu0 0.0
        %3726 = vmatpush1.msra.mxu0 0.0
        %3727 = vmatprep.subr.mxu0 0.0
        %3728 = vmatpush1.msra.mxu0 0.0
        %3729 = vmatprep.subr.mxu0 0.0
        %3730 = vmatpush1.msra.mxu0 0.0
        %3731 = vmatprep.subr.mxu0 0.0
        %3732 = vmatpush1.msra.mxu0 0.0
        %3733 = vmatprep.subr.mxu0 0.0
        %3734 = vmatpush1.msra.mxu0 0.0
        %3735 = vmatprep.subr.mxu0 0.0
        %3736 = vmatpush1.msra.mxu0 0.0
        %3737 = vmatprep.subr.mxu0 0.0
        %3738 = vmatpush1.msra.mxu0 0.0
        %3739 = vmatprep.subr.mxu0 0.0
        %3740 = vmatpush1.msra.mxu0 0.0
        %3741 = vmatprep.subr.mxu0 0.0
        %3742 = vmatpush1.msra.mxu0 0.0
        %3743 = vmatprep.subr.mxu0 0.0
        %3744 = vmatpush1.msra.mxu0 0.0
        %3745 = vmatprep.subr.mxu0 0.0
        %3746 = vmatpush1.msra.mxu0 0.0
        %3747 = vmatprep.subr.mxu0 0.0
        %3748 = vmatpush1.msra.mxu0 0.0
        %3749 = vmatprep.subr.mxu0 0.0
        %3750 = vmatpush1.msra.mxu0 0.0
        %3751 = vmatprep.subr.mxu0 0.0
        %3752 = vmatpush1.msra.mxu0 0.0
        %3753 = vmatprep.subr.mxu0 0.0
        %3754 = vmatpush1.msra.mxu0 0.0
        %3755 = vmatprep.subr.mxu0 0.0
        %3756 = vmatpush1.msra.mxu0 0.0
        %3757 = vmatprep.subr.mxu0 0.0
        %3758 = vmatpush1.msra.mxu0 0.0
        %3759 = vmatprep.subr.mxu0 0.0
        %3760 = vmatpush1.msra.mxu0 0.0
        %3761 = vmatprep.mubr.f32.mxu0 0.0
        %3762 = vmatmul.mubr.f32.gmra.mrb[0].mxu0 %v3615
        %v3763 = vpop.f32.mrb[0].mxu0
        %v3764 = vadd.f32 0.0, %v3763
        %v3765 = vpop.f32.mrb[0].mxu0
        %3766 = vmatprep.mubr.f32.mxu0 0.0
        %3767 = vmatmul.mubr.f32.gmra.mrb[0].mxu0 %v3618
        %v3768 = vpop.f32.mrb[0].mxu0
        %v3769 = vadd.f32 0.0, %v3768
        %v3770 = vpop.f32.mrb[0].mxu0
        %3771 = vdwg.mxu0
        %v3772 = vadd.f32 %v3583, %v3687
        %v3773 = vadd.f32 %v3584, %v3689
        %v3774 = vadd.f32 %v3585, %v3764
        %v3775 = vadd.f32 %v3586, %v3693
        %v3776 = vadd.f32 %v3587, %v3695
        %v3777 = vadd.f32 %v3588, %v3769
        %s3778 = scalar_lea.vmem [#allocation8], 128
        %v3779 = vld [vmem:[%s3778] sm:$0xff]
        %v3780 = vld [vmem:[%s3778 + $0x8] sm:$0xff]
        %3781 = vrot.lane.b32.xlu0 %v2291, 90
        %v3782 = vpop.permute.xlu0 %3781
        %3783 = vrot.lane.b32.xlu0 %v2292, 90
        %v3784 = vpop.permute.xlu0 %3783
        %3785 = vrot.lane.b32.xlu0 %v2293, 90
        %v3786 = vpop.permute.xlu0 %3785
        %3787 = vrot.lane.b32.xlu0 %v2294, 90
        %v3788 = vpop.permute.xlu0 %3787
        %3789 = vrot.lane.b32.xlu0 %v2295, 90
        %v3790 = vpop.permute.xlu0 %3789
        %3791 = vrot.lane.b32.xlu0 %v2296, 90
        %v3792 = vpop.permute.xlu0 %3791
        %v3793 = vsel %vm1849, %v3782, %v3784
        %v3794 = vsel %vm1849, %v3784, %v3786
        %v3795 = vsel %vm1849, %v3788, %v3790
        %v3796 = vsel %vm1849, %v3790, %v3792
        %v3804 = vsel %vm377, %v3779, 0
        %v3807 = vsel %vm377, %v3780, 0
        %3809 = vmatprep.subr.mxu0 %v3794
        %3810 = vmatpush1.msra.mxu0 %v3793
        %3811 = vmatprep.subr.mxu0 %v3796
        %3812 = vmatpush1.msra.mxu0 %v3795
        %3813 = vmatprep.subr.mxu0 0.0
        %3814 = vmatpush1.msra.mxu0 0.0
        %3815 = vmatprep.subr.mxu0 0.0
        %3816 = vmatpush1.msra.mxu0 0.0
        %3817 = vmatprep.subr.mxu0 0.0
        %3818 = vmatpush1.msra.mxu0 0.0
        %3819 = vmatprep.subr.mxu0 0.0
        %3820 = vmatpush1.msra.mxu0 0.0
        %3821 = vmatprep.subr.mxu0 0.0
        %3822 = vmatpush1.msra.mxu0 0.0
        %3823 = vmatprep.subr.mxu0 0.0
        %3824 = vmatpush1.msra.mxu0 0.0
        %3825 = vmatprep.subr.mxu0 0.0
        %3826 = vmatpush1.msra.mxu0 0.0
        %3827 = vmatprep.subr.mxu0 0.0
        %3828 = vmatpush1.msra.mxu0 0.0
        %3829 = vmatprep.subr.mxu0 0.0
        %3830 = vmatpush1.msra.mxu0 0.0
        %3831 = vmatprep.subr.mxu0 0.0
        %3832 = vmatpush1.msra.mxu0 0.0
        %3833 = vmatprep.subr.mxu0 0.0
        %3834 = vmatpush1.msra.mxu0 0.0
        %3835 = vmatprep.subr.mxu0 0.0
        %3836 = vmatpush1.msra.mxu0 0.0
        %3837 = vmatprep.subr.mxu0 0.0
        %3838 = vmatpush1.msra.mxu0 0.0
        %3839 = vmatprep.subr.mxu0 0.0
        %3840 = vmatpush1.msra.mxu0 0.0
        %3841 = vmatprep.subr.mxu0 0.0
        %3842 = vmatpush1.msra.mxu0 0.0
        %3843 = vmatprep.subr.mxu0 0.0
        %3844 = vmatpush1.msra.mxu0 0.0
        %3845 = vmatprep.subr.mxu0 0.0
        %3846 = vmatpush1.msra.mxu0 0.0
        %3847 = vmatprep.subr.mxu0 0.0
        %3848 = vmatpush1.msra.mxu0 0.0
        %3849 = vmatprep.subr.mxu0 0.0
        %3850 = vmatpush1.msra.mxu0 0.0
        %3851 = vmatprep.subr.mxu0 0.0
        %3852 = vmatpush1.msra.mxu0 0.0
        %3853 = vmatprep.subr.mxu0 0.0
        %3854 = vmatpush1.msra.mxu0 0.0
        %3855 = vmatprep.subr.mxu0 0.0
        %3856 = vmatpush1.msra.mxu0 0.0
        %3857 = vmatprep.subr.mxu0 0.0
        %3858 = vmatpush1.msra.mxu0 0.0
        %3859 = vmatprep.subr.mxu0 0.0
        %3860 = vmatpush1.msra.mxu0 0.0
        %3861 = vmatprep.subr.mxu0 0.0
        %3862 = vmatpush1.msra.mxu0 0.0
        %3863 = vmatprep.subr.mxu0 0.0
        %3864 = vmatpush1.msra.mxu0 0.0
        %3865 = vmatprep.subr.mxu0 0.0
        %3866 = vmatpush1.msra.mxu0 0.0
        %3867 = vmatprep.subr.mxu0 0.0
        %3868 = vmatpush1.msra.mxu0 0.0
        %3869 = vmatprep.subr.mxu0 0.0
        %3870 = vmatpush1.msra.mxu0 0.0
        %3871 = vmatprep.subr.mxu0 0.0
        %3872 = vmatpush1.msra.mxu0 0.0
        %3873 = vmatprep.mubr.f32.mxu0 0.0
        %3874 = vmatmul.mubr.f32.gmra.mrb[0].mxu0 %v3804
        %v3875 = vpop.f32.mrb[0].mxu0
        %v3876 = vadd.f32 0.0, %v3875
        %v3877 = vpop.f32.mrb[0].mxu0
        %v3878 = vadd.f32 0.0, %v3877
        %3879 = vmatprep.mubr.f32.mxu0 0.0
        %3880 = vmatmul.mubr.f32.gmra.mrb[0].mxu0 %v3807
        %v3881 = vpop.f32.mrb[0].mxu0
        %v3882 = vadd.f32 0.0, %v3881
        %v3883 = vpop.f32.mrb[0].mxu0
        %v3884 = vadd.f32 0.0, %v3883
        %3885 = vdwg.mxu0
        %3886 = vmatprep.subr.mxu0 0.0
        %3887 = vmatpush1.msra.mxu0 %v3786
        %3888 = vmatprep.subr.mxu0 0.0
        %3889 = vmatpush1.msra.mxu0 %v3792
        %3890 = vmatprep.subr.mxu0 0.0
        %3891 = vmatpush1.msra.mxu0 0.0
        %3892 = vmatprep.subr.mxu0 0.0
        %3893 = vmatpush1.msra.mxu0 0.0
        %3894 = vmatprep.subr.mxu0 0.0
        %3895 = vmatpush1.msra.mxu0 0.0
        %3896 = vmatprep.subr.mxu0 0.0
        %3897 = vmatpush1.msra.mxu0 0.0
        %3898 = vmatprep.subr.mxu0 0.0
        %3899 = vmatpush1.msra.mxu0 0.0
        %3900 = vmatprep.subr.mxu0 0.0
        %3901 = vmatpush1.msra.mxu0 0.0
        %3902 = vmatprep.subr.mxu0 0.0
        %3903 = vmatpush1.msra.mxu0 0.0
        %3904 = vmatprep.subr.mxu0 0.0
        %3905 = vmatpush1.msra.mxu0 0.0
        %3906 = vmatprep.subr.mxu0 0.0
        %3907 = vmatpush1.msra.mxu0 0.0
        %3908 = vmatprep.subr.mxu0 0.0
        %3909 = vmatpush1.msra.mxu0 0.0
        %3910 = vmatprep.subr.mxu0 0.0
        %3911 = vmatpush1.msra.mxu0 0.0
        %3912 = vmatprep.subr.mxu0 0.0
        %3913 = vmatpush1.msra.mxu0 0.0
        %3914 = vmatprep.subr.mxu0 0.0
        %3915 = vmatpush1.msra.mxu0 0.0
        %3916 = vmatprep.subr.mxu0 0.0
        %3917 = vmatpush1.msra.mxu0 0.0
        %3918 = vmatprep.subr.mxu0 0.0
        %3919 = vmatpush1.msra.mxu0 0.0
        %3920 = vmatprep.subr.mxu0 0.0
        %3921 = vmatpush1.msra.mxu0 0.0
        %3922 = vmatprep.subr.mxu0 0.0
        %3923 = vmatpush1.msra.mxu0 0.0
        %3924 = vmatprep.subr.mxu0 0.0
        %3925 = vmatpush1.msra.mxu0 0.0
        %3926 = vmatprep.subr.mxu0 0.0
        %3927 = vmatpush1.msra.mxu0 0.0
        %3928 = vmatprep.subr.mxu0 0.0
        %3929 = vmatpush1.msra.mxu0 0.0
        %3930 = vmatprep.subr.mxu0 0.0
        %3931 = vmatpush1.msra.mxu0 0.0
        %3932 = vmatprep.subr.mxu0 0.0
        %3933 = vmatpush1.msra.mxu0 0.0
        %3934 = vmatprep.subr.mxu0 0.0
        %3935 = vmatpush1.msra.mxu0 0.0
        %3936 = vmatprep.subr.mxu0 0.0
        %3937 = vmatpush1.msra.mxu0 0.0
        %3938 = vmatprep.subr.mxu0 0.0
        %3939 = vmatpush1.msra.mxu0 0.0
        %3940 = vmatprep.subr.mxu0 0.0
        %3941 = vmatpush1.msra.mxu0 0.0
        %3942 = vmatprep.subr.mxu0 0.0
        %3943 = vmatpush1.msra.mxu0 0.0
        %3944 = vmatprep.subr.mxu0 0.0
        %3945 = vmatpush1.msra.mxu0 0.0
        %3946 = vmatprep.subr.mxu0 0.0
        %3947 = vmatpush1.msra.mxu0 0.0
        %3948 = vmatprep.subr.mxu0 0.0
        %3949 = vmatpush1.msra.mxu0 0.0
        %3950 = vmatprep.mubr.f32.mxu0 0.0
        %3951 = vmatmul.mubr.f32.gmra.mrb[0].mxu0 %v3804
        %v3952 = vpop.f32.mrb[0].mxu0
        %v3953 = vadd.f32 0.0, %v3952
        %v3954 = vpop.f32.mrb[0].mxu0
        %3955 = vmatprep.mubr.f32.mxu0 0.0
        %3956 = vmatmul.mubr.f32.gmra.mrb[0].mxu0 %v3807
        %v3957 = vpop.f32.mrb[0].mxu0
        %v3958 = vadd.f32 0.0, %v3957
        %v3959 = vpop.f32.mrb[0].mxu0
        %3960 = vdwg.mxu0
        %v3961 = vadd.f32 %v3772, %v3876
        %v3962 = vadd.f32 %v3773, %v3878
        %v3963 = vadd.f32 %v3774, %v3953
        %v3964 = vadd.f32 %v3775, %v3882
        %v3965 = vadd.f32 %v3776, %v3884
        %v3966 = vadd.f32 %v3777, %v3958
        %3967 = vset.pattern.permute.xlu0 3
        %3968 = vperm.xlu0 %3967, %v272
        %v3969 = vpop.permute.xlu0 %3968
        %3971 = vset.pattern.permute.xlu0 3
        %3972 = vperm.xlu0 %3971, %v273
        %v3973 = vpop.permute.xlu0 %3972
        %v3975 = vadd.f32 %v3961, %v3969
        %v3976 = vadd.f32 %v3962, %v3969
        %v3977 = vadd.f32 %v3963, %v3969
        %v3978 = vadd.f32 %v3964, %v3973
        %v3979 = vadd.f32 %v3965, %v3973
        %v3980 = vadd.f32 %v3966, %v3973
        %v3981 = vmul.f32 %v3975, %v334
        %v3982 = vmul.f32 %v3976, %v335
        %v3983 = vmul.f32 %v3977, %v336
        %v3984 = vmul.f32 %v3978, %v334
        %v3985 = vmul.f32 %v3979, %v335
        %v3986 = vmul.f32 %v3980, %v336
        %v3987 = vadd.f32 %v3981, %v3982
        %v3988 = vsel %vm2047, %v3983, 0.0
        %v3989 = vadd.f32 %v3987, %v3988
        %3990 = vadd.xlane.f32.xlu0 %v3989
        %v3991 = vpop.xlane.xlu0 %3990
        %v3992 = vadd.f32 %v3984, %v3985
        %v3993 = vsel %vm2047, %v3986, 0.0
        %v3994 = vadd.f32 %v3992, %v3993
        %3995 = vadd.xlane.f32.xlu0 %v3994
        %v3996 = vpop.xlane.xlu0 %3995
        %v3997 = vmul.f32 %v3981, %v3981
        %v3998 = vmul.f32 %v3982, %v3982
        %v3999 = vmul.f32 %v3983, %v3983
        %v4000 = vmul.f32 %v3984, %v3984
        %v4001 = vmul.f32 %v3985, %v3985
        %v4002 = vmul.f32 %v3986, %v3986
        %v4003 = vadd.f32 %v3997, %v3998
        %v4004 = vsel %vm2047, %v3999, 0.0
        %v4005 = vadd.f32 %v4003, %v4004
        %4006 = vadd.xlane.f32.xlu0 %v4005
        %v4007 = vpop.xlane.xlu0 %4006
        %v4008 = vadd.f32 %v4000, %v4001
        %v4009 = vsel %vm2047, %v4002, 0.0
        %v4010 = vadd.f32 %v4008, %v4009
        %4011 = vadd.xlane.f32.xlu0 %v4010
        %v4012 = vpop.xlane.xlu0 %4011
        %v4013 = vsel %vm2073, %v3991, %v4007
        %v4014 = vsel %vm2073, %v3996, %v4012
        %4015 = vmatprep.subr.mxu0 0.0
        %4016 = vmatpush1.msra.mxu0 %v4013
        %4017 = vmatprep.subr.mxu0 0.0
        %4018 = vmatpush1.msra.mxu0 %v4014
        %4019 = vmatprep.subr.mxu0 0.0
        %4020 = vmatpush1.msra.mxu0 0.0
        %4021 = vmatprep.subr.mxu0 0.0
        %4022 = vmatpush1.msra.mxu0 0.0
        %4023 = vmatprep.subr.mxu0 0.0
        %4024 = vmatpush1.msra.mxu0 0.0
        %4025 = vmatprep.subr.mxu0 0.0
        %4026 = vmatpush1.msra.mxu0 0.0
        %4027 = vmatprep.subr.mxu0 0.0
        %4028 = vmatpush1.msra.mxu0 0.0
        %4029 = vmatprep.subr.mxu0 0.0
        %4030 = vmatpush1.msra.mxu0 0.0
        %4031 = vmatprep.subr.mxu0 0.0
        %4032 = vmatpush1.msra.mxu0 0.0
        %4033 = vmatprep.subr.mxu0 0.0
        %4034 = vmatpush1.msra.mxu0 0.0
        %4035 = vmatprep.subr.mxu0 0.0
        %4036 = vmatpush1.msra.mxu0 0.0
        %4037 = vmatprep.subr.mxu0 0.0
        %4038 = vmatpush1.msra.mxu0 0.0
        %4039 = vmatprep.subr.mxu0 0.0
        %4040 = vmatpush1.msra.mxu0 0.0
        %4041 = vmatprep.subr.mxu0 0.0
        %4042 = vmatpush1.msra.mxu0 0.0
        %4043 = vmatprep.subr.mxu0 0.0
        %4044 = vmatpush1.msra.mxu0 0.0
        %4045 = vmatprep.subr.mxu0 0.0
        %4046 = vmatpush1.msra.mxu0 0.0
        %4047 = vmatprep.subr.mxu0 0.0
        %4048 = vmatpush1.msra.mxu0 0.0
        %4049 = vmatprep.subr.mxu0 0.0
        %4050 = vmatpush1.msra.mxu0 0.0
        %4051 = vmatprep.subr.mxu0 0.0
        %4052 = vmatpush1.msra.mxu0 0.0
        %4053 = vmatprep.subr.mxu0 0.0
        %4054 = vmatpush1.msra.mxu0 0.0
        %4055 = vmatprep.subr.mxu0 0.0
        %4056 = vmatpush1.msra.mxu0 0.0
        %4057 = vmatprep.subr.mxu0 0.0
        %4058 = vmatpush1.msra.mxu0 0.0
        %4059 = vmatprep.subr.mxu0 0.0
        %4060 = vmatpush1.msra.mxu0 0.0
        %4061 = vmatprep.subr.mxu0 0.0
        %4062 = vmatpush1.msra.mxu0 0.0
        %4063 = vmatprep.subr.mxu0 0.0
        %4064 = vmatpush1.msra.mxu0 0.0
        %4065 = vmatprep.subr.mxu0 0.0
        %4066 = vmatpush1.msra.mxu0 0.0
        %4067 = vmatprep.subr.mxu0 0.0
        %4068 = vmatpush1.msra.mxu0 0.0
        %4069 = vmatprep.subr.mxu0 0.0
        %4070 = vmatpush1.msra.mxu0 0.0
        %4071 = vmatprep.subr.mxu0 0.0
        %4072 = vmatpush1.msra.mxu0 0.0
        %4073 = vmatprep.subr.mxu0 0.0
        %4074 = vmatpush1.msra.mxu0 0.0
        %4075 = vmatprep.subr.mxu0 0.0
        %4076 = vmatpush1.msra.mxu0 0.0
        %4077 = vmatprep.subr.mxu0 0.0
        %4078 = vmatpush1.msra.mxu0 0.0
        %4079 = vmatprep.mubr.f32.mxu0 0.0
        %4080 = vmatmul.mubr.f32.gmra.mrb[0].mxu0 %v2077
        %v4081 = vpop.f32.mrb[0].mxu0
        %v4082 = vadd.f32 0.0, %v4081
        %v4083 = vpop.f32.mrb[0].mxu0
        %4084 = vmatprep.mubr.f32.mxu0 0.0
        %4085 = vmatmul.mubr.f32.gmra.mrb[0].mxu0 %v2080
        %v4086 = vpop.f32.mrb[0].mxu0
        %v4087 = vadd.f32 0.0, %v4086
        %v4088 = vpop.f32.mrb[0].mxu0
        %4089 = vdwg.mxu0
        %v4090 = vmul.f32 %v4082, %v4082
        %v4091 = vmul.f32 %v4087, %v4087
        %4094 = vrot.lane.b32.xlu0 %v4090, 1
        %v4095 = vpop.permute.xlu0 %4094
        %4096 = vrot.lane.b32.xlu0 %v4091, 1
        %v4097 = vpop.permute.xlu0 %4096
        %v4100 = vsub.f32 %v4082, %v4095
        %v4101 = vsub.f32 %v4087, %v4097
        %v4102 = vmax.f32 %v4100, 0.0
        %v4103 = vmax.f32 %v4101, 0.0
        %4105 = vset.pattern.permute.xlu0 0
        %4106 = vperm.xlu0 %4105, %v4082
        %v4107 = vpop.permute.xlu0 %4106
        %4110 = vset.pattern.permute.xlu0 0
        %4111 = vperm.xlu0 %4110, %v4087
        %v4112 = vpop.permute.xlu0 %4111
        %v4114 = vsub.f32 %v3975, %v4107
        %v4115 = vsub.f32 %v3976, %v4107
        %v4116 = vsub.f32 %v3977, %v4107
        %v4117 = vsub.f32 %v3978, %v4112
        %v4118 = vsub.f32 %v3979, %v4112
        %v4119 = vsub.f32 %v3980, %v4112
        %v4120 = vadd.f32 %v4102, 1e-05
        %v4121 = vadd.f32 %v4103, 1e-05
        %v4122 = vrsqrt.pop %v4120
        %v4123 = vrsqrt.pop %v4121
        %4125 = vset.pattern.permute.xlu0 1
        %4126 = vperm.xlu0 %4125, %v4122
        %v4127 = vpop.permute.xlu0 %4126
        %4130 = vset.pattern.permute.xlu0 1
        %4131 = vperm.xlu0 %4130, %v4123
        %v4132 = vpop.permute.xlu0 %4131
        %v4134 = vmul.f32 %v4114, %v4127
        %v4135 = vmul.f32 %v4115, %v4127
        %v4136 = vmul.f32 %v4116, %v4127
        %v4137 = vmul.f32 %v4117, %v4132
        %v4138 = vmul.f32 %v4118, %v4132
        %v4139 = vmul.f32 %v4119, %v4132
        %4140 = vset.pattern.permute.xlu0 4
        %4141 = vperm.xlu0 %4140, %v272
        %v4142 = vpop.permute.xlu0 %4141
        %4144 = vset.pattern.permute.xlu0 4
        %4145 = vperm.xlu0 %4144, %v273
        %v4146 = vpop.permute.xlu0 %4145
        %v4148 = vmul.f32 %v4134, %v4142
        %v4149 = vmul.f32 %v4135, %v4142
        %v4150 = vmul.f32 %v4136, %v4142
        %v4151 = vmul.f32 %v4137, %v4146
        %v4152 = vmul.f32 %v4138, %v4146
        %v4153 = vmul.f32 %v4139, %v4146
        %4154 = vset.pattern.permute.xlu0 5
        %4155 = vperm.xlu0 %4154, %v272
        %v4156 = vpop.permute.xlu0 %4155
        %4158 = vset.pattern.permute.xlu0 5
        %4159 = vperm.xlu0 %4158, %v273
        %v4160 = vpop.permute.xlu0 %4159
        %v4162 = vadd.f32 %v4148, %v4156
        %v4163 = vadd.f32 %v4149, %v4156
        %v4164 = vadd.f32 %v4150, %v4156
        %v4165 = vadd.f32 %v4151, %v4160
        %v4166 = vadd.f32 %v4152, %v4160
        %v4167 = vadd.f32 %v4153, %v4160
        %v4168 = vmax.f32 %v4162, 0.0
        %v4169 = vmax.f32 %v4163, 0.0
        %v4170 = vmax.f32 %v4164, 0.0
        %v4171 = vmax.f32 %v4165, 0.0
        %v4172 = vmax.f32 %v4166, 0.0
        %v4173 = vmax.f32 %v4167, 0.0
        %v4174 = vld [vmem:[%s237] sm:$0xff]
        %v4175 = vld [vmem:[%s237 + $0x8] sm:$0xff]
        %v4176 = vld [vmem:[%s237 + $0x10] sm:$0xff]
        %v4177 = vld [vmem:[%s237 + $0x18] sm:$0xff]
        %v4178 = vld [vmem:[%s237 + $0x20] sm:$0xff]
        %v4179 = vld [vmem:[%s237 + $0x28] sm:$0xff]
        %4186 = vrot.lane.b32.xlu0 %v4168, 19
        %v4187 = vpop.permute.xlu0 %4186
        %4188 = vrot.lane.b32.xlu0 %v4169, 19
        %v4189 = vpop.permute.xlu0 %4188
        %4190 = vrot.lane.b32.xlu0 %v4170, 19
        %v4191 = vpop.permute.xlu0 %4190
        %4192 = vrot.lane.b32.xlu0 %v4171, 19
        %v4193 = vpop.permute.xlu0 %4192
        %4194 = vrot.lane.b32.xlu0 %v4172, 19
        %v4195 = vpop.permute.xlu0 %4194
        %4196 = vrot.lane.b32.xlu0 %v4173, 19
        %v4197 = vpop.permute.xlu0 %4196
        %v4198 = vsel %vm2247, %v4187, %v4189
        %v4199 = vsel %vm2247, %v4189, %v4191
        %v4200 = vsel %vm2247, %v4193, %v4195
        %v4201 = vsel %vm2247, %v4195, %v4197
        %v4208 = vadd.f32 %v4174, %v4187
        %v4209 = vadd.f32 %v4175, %v4198
        %v4210 = vadd.f32 %v4176, %v4199
        %v4211 = vadd.f32 %v4177, %v4193
        %v4212 = vadd.f32 %v4178, %v4200
        %v4213 = vadd.f32 %v4179, %v4201
        %v4214 = vmax.f32 %v4208, 0.0
        %v4215 = vmax.f32 %v4209, 0.0
        %v4216 = vmax.f32 %v4210, 0.0
        %v4217 = vmax.f32 %v4211, 0.0
        %v4218 = vmax.f32 %v4212, 0.0
        %v4219 = vmax.f32 %v4213, 0.0
        %4226 = vrot.lane.b32.xlu0 %v4214, 109
        %v4227 = vpop.permute.xlu0 %4226
        %4228 = vrot.lane.b32.xlu0 %v4215, 109
        %v4229 = vpop.permute.xlu0 %4228
        %4230 = vrot.lane.b32.xlu0 %v4216, 109
        %v4231 = vpop.permute.xlu0 %4230
        %4232 = vrot.lane.b32.xlu0 %v4217, 109
        %v4233 = vpop.permute.xlu0 %4232
        %4234 = vrot.lane.b32.xlu0 %v4218, 109
        %v4235 = vpop.permute.xlu0 %4234
        %4236 = vrot.lane.b32.xlu0 %v4219, 109
        %v4237 = vpop.permute.xlu0 %4236
        %v4238 = vsel %vm1089, %v4227, %v4229
        %v4239 = vsel %vm1089, %v4229, %v4231
        %v4240 = vsel %vm1089, %v4233, %v4235
        %v4241 = vsel %vm1089, %v4235, %v4237
        %4248 = vst [vmem:[%s271] sm:$0xff] %v4238
        %4249 = vst [vmem:[%s271 + $0x8] sm:$0xff] %v4239
        %4250 = vst.msk [vmem:[%s271 + $0x10] sm:$0xff] %vm2047, %v4231
        %4251 = vst [vmem:[%s271 + $0x18] sm:$0xff] %v4240
        %4252 = vst [vmem:[%s271 + $0x20] sm:$0xff] %v4241
        %4253 = vst.msk [vmem:[%s271 + $0x28] sm:$0xff] %vm2047, %v4237
        %s4254 = sand.u32 %s141, 1
        %s4255 = scalar_lea.sflag [#allocation5], %s4254
        %s4256 = sand.u32 %s141, 1
        %s4257 = smul.addr %s4256, 48
        %s4258 = scalar_lea.vmem [#allocation9], %s4257
        // Predicated region
        $region53: #{tpu_custom_call.1} parent=39 // pred_check
          %p4259 = pneg %p151
        $region54: #{tpu_custom_call.1} parent=39 // pred_check_branch
          %4261 = sbr.rel (%p4259) target = $region56
        $region55: #{tpu_custom_call.1} parent=39 // pred_region
          %s4263 = ssub.s32 768, 768
          %4264 = vsyncadd %s4255, %s4263
          %s4265 = smul.addr %s23, 6
          %s4266 = smul.addr %s4265, 128
          %s4267 = scalar_lea.hbm %s5, %s4266
          %s4268 = sshll.u32 %s4258, 4
          %s4269 = int_to_ptr.vmem [resolvable:$true] %s4268
          %4274 = dma.vmem_to_hbm [thread:$0]  %s4269, 768, %s4267, %s4255, 384, 384, 24
        $region56: #{tpu_custom_call.1} parent=39 // pred_fallthru
          _
      $region40: #{tpu_custom_call.1} parent=5 // pred_fallthru
        _
      %p4275 = scmp.le.s32.totalorder 2, %s18
      // Predicated region
      $region57: #{tpu_custom_call.1} parent=5 // pred_check
        %p4276 = pneg %p4275
      $region58: #{tpu_custom_call.1} parent=5 // pred_check_branch
        %4278 = sbr.rel (%p4276) target = $region60
      $region59: #{tpu_custom_call.1} parent=5 // pred_region
        %s4279 = ssub.s32 %s18, 2
        // Predicated region
        $region61: #{tpu_custom_call.1} parent=59 // pred_check
          %p4280 = pneg %p157
        $region62: #{tpu_custom_call.1} parent=59 // pred_check_branch
          %4282 = sbr.rel (%p4280) target = $region64
        $region63: #{tpu_custom_call.1} parent=59 // pred_region
          %s4283 = sand.u32 %s142, 1
          %s4284 = scalar_lea.sflag [#allocation5], %s4283
          %s4285 = sand.u32 %s142, 1
          %s4286 = smul.addr %s4285, 48
          %s4287 = scalar_lea.vmem [#allocation9], %s4286
          %4288 = dma.done %s4284, 768
        $region64: #{tpu_custom_call.1} parent=59 // pred_fallthru
          _
      $region60: #{tpu_custom_call.1} parent=5 // pred_fallthru
        _
    $region6: #{tpu_custom_call.1} parent=1 // loop_footer
      %s22 = sadd.s32 1, %s18
    $region7: #{tpu_custom_call.1} parent=1 // loop_footer_branch
      %17 = sbr.rel target = $region3
    $region8: #{tpu_custom_call.1} parent=1 // loop_exit
      _
    %4289 = vsyncpa [#allocation4], 1
    %s4290 = scalar_lea.sflag [#allocation4], 1
    %4291 = vsyncpa %s4290, 1
    %4292 = vsyncpa [#allocation7], 1
    %4293 = vsyncpa [#allocation5], 1
    %s4294 = scalar_lea.sflag [#allocation5], 1
    %4295 = vsyncpa %s4294, 1

</llo_original>
